<compile_context>
chip_gen: v7x
topology: tpu7x:2x2x1
jax: 0.10.0
libtpu: 0.0.40
codegen_flags: <defaults>
</compile_context>

<pallas_src>
import functools
import numpy as np
import jax
import jax.numpy as jnp
from jax import lax
from jax.experimental import pallas as pl
from jax.experimental.pallas import tpu as pltpu


# ----------------------------- in-kernel helpers -----------------------------

def _layer_norm(x, g, b, eps=1e-6):
    # x: (M, D); g, b: (1, D)  -- biased variance, matching torch.nn.LayerNorm
    mean = jnp.mean(x, axis=-1, keepdims=True)
    var = jnp.mean((x - mean) ** 2, axis=-1, keepdims=True)
    return (x - mean) * lax.rsqrt(var + eps) * g + b


def _softmax(x):
    # softmax over the last axis; reciprocal routed to the (idle) EUP slot
    m = jnp.max(x, axis=-1, keepdims=True)
    e = jnp.exp(x - m)
    s = jnp.sum(e, axis=-1, keepdims=True)
    return e * pl.reciprocal(s, approx=True)


def _mha_core(q, k, v, mask, fc, g, b, residual, Bt, Lq, Lk, H, dk, dv):
    """Multi-head attention with all heads batched into one einsum (no head loop).

    q: (Bt*Lq, H*dk), k: (Bt*Lk, H*dk), v: (Bt*Lk, H*dv)
    mask: (Bt, Lq_or_1, Lk) float {0,1};  residual: (Bt*Lq, D)
    """
    inv_temp = 1.0 / (dk ** 0.5)

    def to_heads(t, L, d):
        # (Bt*L, H*d) -> (H*Bt, L, d): head-major without any per-head python loop.
        t = t.reshape(Bt * L, H, d)
        t = pltpu.einshape("mhd->hmd", t)          # (H, Bt*L, d)
        return t.reshape(H * Bt, L, d)

    q3 = to_heads(q * inv_temp, Lq, dk)            # scale q before matmul (as in ref)
    k3 = to_heads(k, Lk, dk)
    v3 = to_heads(v, Lk, dv)

    # all-head scores in one batched MXU contraction
    s = jnp.einsum('bqd,bkd->bqk', q3, k3,
                   preferred_element_type=jnp.float32)        # (H*Bt, Lq, Lk)
    s = s.reshape(H, Bt, Lq, Lk)
    s = jnp.where(mask[None] == 0.0, -1e9, s)                 # masked_fill(mask==0,-1e9)
    p = _softmax(s).reshape(H * Bt, Lq, Lk)                   # attn dropout == identity
    o = jnp.einsum('bqk,bkd->bqd', p, v3,
                   preferred_element_type=jnp.float32)        # (H*Bt, Lq, dv)

    # back to (Bt*Lq, H*dv) and output projection
    o = pltpu.einshape("hmd->mhd", o.reshape(H, Bt * Lq, dv)) # (Bt*Lq, H, dv)
    o = o.reshape(Bt * Lq, H * dv)
    o = jnp.dot(o, fc, preferred_element_type=jnp.float32) + residual
    return _layer_norm(o, g, b)


# --------------------------------- the kernel ---------------------------------

def decoder_kernel(n_head, d_k, d_v,
                   pos_ref, x_ref, tmask_ref, enc_ref, smask_ref,
                   ln0_g, ln0_b,
                   s_wqkv, s_fc, s_lng, s_lnb,
                   e_wq, e_wkv, e_fc, e_lng, e_lnb,
                   f_w1, f_b1, f_w2, f_b2, f_lng, f_lnb,
                   out_ref):
    Bt, Lq, D = x_ref.shape
    Lk = enc_ref.shape[1]
    H, dk, dv = n_head, d_k, d_v

    # positional encoding + decoder-level LayerNorm
    # TODO(synk): nn.Dropout(p=0.1) implemented as identity (eval mode / deterministic)
    x = x_ref[...] + pos_ref[...][None, :, :]                  # (Bt, Lq, D)
    x2 = _layer_norm(x.reshape(Bt * Lq, D), ln0_g[...], ln0_b[...])

    # ---- self-attention: fused QKV projection (one wide matmul) ----
    qkv = jnp.dot(x2, s_wqkv[...], preferred_element_type=jnp.float32)
    q = qkv[:, :H * dk]
    kk = qkv[:, H * dk:2 * H * dk]
    vv = qkv[:, 2 * H * dk:]
    x2 = _mha_core(q, kk, vv, tmask_ref[...],
                   s_fc[...], s_lng[...], s_lnb[...],
                   x2, Bt, Lq, Lq, H, dk, dv)

    # ---- encoder-decoder attention: fused K|V projection of enc ----
    enc2 = enc_ref[...].reshape(Bt * Lk, D)
    q = jnp.dot(x2, e_wq[...], preferred_element_type=jnp.float32)
    kv = jnp.dot(enc2, e_wkv[...], preferred_element_type=jnp.float32)
    kk = kv[:, :H * dk]
    vv = kv[:, H * dk:]
    x2 = _mha_core(q, kk, vv, smask_ref[...],
                   e_fc[...], e_lng[...], e_lnb[...],
                   x2, Bt, Lq, Lk, H, dk, dv)

    # ---- position-wise feed-forward ----
    h = jnp.maximum(jnp.dot(x2, f_w1[...], preferred_element_type=jnp.float32)
                    + f_b1[...], 0.0)
    y = jnp.dot(h, f_w2[...], preferred_element_type=jnp.float32) + f_b2[...]
    x2 = _layer_norm(y + x2, f_lng[...], f_lnb[...])

    out_ref[...] = x2.reshape(Bt, Lq, D)


# --------------------------------- wrapper ------------------------------------

def sinusoid_pos_table(n_position, d_hid):
    pos = np.arange(n_position)[:, None].astype(np.float64)
    hid = np.arange(d_hid)[None, :]
    angle = pos / np.power(10000.0, 2.0 * (hid // 2) / d_hid)
    table = np.zeros((n_position, d_hid), dtype=np.float64)
    table[:, 0::2] = np.sin(angle[:, 0::2])
    table[:, 1::2] = np.cos(angle[:, 1::2])
    return jnp.asarray(table, dtype=jnp.float32)


def make_decoder_params(key, d_model, d_inner, n_head, d_k, d_v):
    # raw (unfused) parameters, same layout as the PyTorch module
    ks = jax.random.split(key, 12)
    s = 0.02
    nrm = lambda k, shp: (s * jax.random.normal(k, shp)).astype(jnp.float32)
    ones = lambda n: jnp.ones((1, n), jnp.float32)
    zeros = lambda n: jnp.zeros((1, n), jnp.float32)
    return dict(
        ln0_g=ones(d_model), ln0_b=zeros(d_model),
        s_wq=nrm(ks[0], (d_model, n_head * d_k)),
        s_wk=nrm(ks[1], (d_model, n_head * d_k)),
        s_wv=nrm(ks[2], (d_model, n_head * d_v)),
        s_fc=nrm(ks[3], (n_head * d_v, d_model)),
        s_lng=ones(d_model), s_lnb=zeros(d_model),
        e_wq=nrm(ks[4], (d_model, n_head * d_k)),
        e_wk=nrm(ks[5], (d_model, n_head * d_k)),
        e_wv=nrm(ks[6], (d_model, n_head * d_v)),
        e_fc=nrm(ks[7], (n_head * d_v, d_model)),
        e_lng=ones(d_model), e_lnb=zeros(d_model),
        f_w1=nrm(ks[8], (d_model, d_inner)), f_b1=nrm(ks[9], (1, d_inner)),
        f_w2=nrm(ks[10], (d_inner, d_model)), f_b2=nrm(ks[11], (1, d_model)),
        f_lng=ones(d_model), f_lnb=zeros(d_model),
    )


def fuse_params(p):
    # Fuse projection weights so the kernel does fewer, wider matmuls.
    return dict(
        ln0_g=p["ln0_g"], ln0_b=p["ln0_b"],
        s_wqkv=jnp.concatenate([p["s_wq"], p["s_wk"], p["s_wv"]], axis=1),
        s_fc=p["s_fc"], s_lng=p["s_lng"], s_lnb=p["s_lnb"],
        e_wq=p["e_wq"],
        e_wkv=jnp.concatenate([p["e_wk"], p["e_wv"]], axis=1),
        e_fc=p["e_fc"], e_lng=p["e_lng"], e_lnb=p["e_lnb"],
        f_w1=p["f_w1"], f_b1=p["f_b1"], f_w2=p["f_w2"], f_b2=p["f_b2"],
        f_lng=p["f_lng"], f_lnb=p["f_lnb"],
    )


_PARAM_ORDER = ["ln0_g", "ln0_b",
                "s_wqkv", "s_fc", "s_lng", "s_lnb",
                "e_wq", "e_wkv", "e_fc", "e_lng", "e_lnb",
                "f_w1", "f_b1", "f_w2", "f_b2", "f_lng", "f_lnb"]


def decoder_forward(trg_seq, trg_mask, enc_output, src_mask, pos_table, params,
                    *, n_head, d_k, d_v, batch_block=1):
    B, Lq, D = trg_seq.shape
    Lk = enc_output.shape[1]
    Bt = batch_block
    assert B % Bt == 0, "batch must be divisible by batch_block"
    pos = pos_table[:Lq]                                   # (Lq, D)

    fused = fuse_params(params)
    param_list = [fused[k] for k in _PARAM_ORDER]

    def full_spec(a):
        nd = a.ndim
        # constant index_map -> weights fetched once, not re-DMAed per grid step
        return pl.BlockSpec(a.shape, lambda b, _n=nd: (0,) * _n)

    in_specs = [
        pl.BlockSpec((Lq, D), lambda b: (0, 0)),           # pos table slice
        pl.BlockSpec((Bt, Lq, D), lambda b: (b, 0, 0)),    # trg_seq block
        pl.BlockSpec((Bt, Lq, Lq), lambda b: (b, 0, 0)),   # trg_mask block
        pl.BlockSpec((Bt, Lk, D), lambda b: (b, 0, 0)),    # enc_output block
        pl.BlockSpec((Bt, 1, Lk), lambda b: (b, 0, 0)),    # src_mask block
    ] + [full_spec(p) for p in param_list]

    kernel = functools.partial(decoder_kernel, n_head, d_k, d_v)

    return pl.pallas_call(
        kernel,
        out_shape=jax.ShapeDtypeStruct((B, Lq, D), jnp.float32),
        grid_spec=pltpu.PrefetchScalarGridSpec(
            num_scalar_prefetch=0,
            grid=(B // Bt,),
            in_specs=in_specs,
            out_specs=pl.BlockSpec((Bt, Lq, D), lambda b: (b, 0, 0)),
        ),
        compiler_params=pltpu.CompilerParams(
            dimension_semantics=("parallel",)),
    )(pos, trg_seq, trg_mask, enc_output, src_mask, *param_list)


# ----------------------------------- main --------------------------------------

if __name__ == "__main__":
    # small shapes consistent with the module (scaled-down defaults, n_layers=1)
    B, Lq, Lk = 2, 8, 8
    d_model = d_word_vec = 32
    d_inner = 64
    n_head, d_k, d_v = 4, 8, 8
    n_position = 64   # module default is 8*8

    key = jax.random.PRNGKey(0)
    k_seq, k_enc, k_par = jax.random.split(key, 3)

    trg_seq = jax.random.normal(k_seq, (B, Lq, d_model), jnp.float32)
    enc_output = jax.random.normal(k_enc, (B, Lk, d_model), jnp.float32)
    # causal (subsequent) mask for self-attention; all-ones pad mask for enc-dec attn
    trg_mask = jnp.broadcast_to(jnp.tril(jnp.ones((Lq, Lq), jnp.float32))[None],
                                (B, Lq, Lq))
    src_mask = jnp.ones((B, 1, Lk), jnp.float32)

    pos_table = sinusoid_pos_table(n_position, d_word_vec)
    params = make_decoder_params(k_par, d_model, d_inner, n_head, d_k, d_v)

    # batch_block=1 keeps a grid of length B=2 (>=2 and even -> both v7x TCs busy);
    # for larger B, batch_block can be raised to amortize per-step overhead.
    out = decoder_forward(trg_seq, trg_mask, enc_output, src_mask, pos_table,
                          params, n_head=n_head, d_k=d_k, d_v=d_v, batch_block=1)
    out = jax.block_until_ready(out)
    assert out.shape == (B, Lq, d_model) and out.dtype == jnp.float32
    assert bool(jnp.isfinite(out).all())
    print("KERNEL_OK")
</pallas_src>

<mosaic_0001>
module attributes {stable_mosaic.version = 11 : i64} {
  func.func @decoder_kernel(%arg0: i32, %arg1: memref<8x32xf32, #tpu.memory_space<vmem>>, %arg2: memref<1x8x32xf32, #tpu.memory_space<vmem>>, %arg3: memref<1x8x8xf32, #tpu.memory_space<vmem>>, %arg4: memref<1x8x32xf32, #tpu.memory_space<vmem>>, %arg5: memref<1x1x8xf32, #tpu.memory_space<vmem>>, %arg6: memref<1x32xf32, #tpu.memory_space<vmem>>, %arg7: memref<1x32xf32, #tpu.memory_space<vmem>>, %arg8: memref<32x96xf32, #tpu.memory_space<vmem>>, %arg9: memref<32x32xf32, #tpu.memory_space<vmem>>, %arg10: memref<1x32xf32, #tpu.memory_space<vmem>>, %arg11: memref<1x32xf32, #tpu.memory_space<vmem>>, %arg12: memref<32x32xf32, #tpu.memory_space<vmem>>, %arg13: memref<32x64xf32, #tpu.memory_space<vmem>>, %arg14: memref<32x32xf32, #tpu.memory_space<vmem>>, %arg15: memref<1x32xf32, #tpu.memory_space<vmem>>, %arg16: memref<1x32xf32, #tpu.memory_space<vmem>>, %arg17: memref<32x64xf32, #tpu.memory_space<vmem>>, %arg18: memref<1x64xf32, #tpu.memory_space<vmem>>, %arg19: memref<64x32xf32, #tpu.memory_space<vmem>>, %arg20: memref<1x32xf32, #tpu.memory_space<vmem>>, %arg21: memref<1x32xf32, #tpu.memory_space<vmem>>, %arg22: memref<1x32xf32, #tpu.memory_space<vmem>>, %arg23: memref<1x8x32xf32, #tpu.memory_space<vmem>>) attributes {dimension_semantics = [#tpu.dimension_semantics<parallel>], iteration_bounds = array<i64: 2>, scalar_prefetch = 0 : i64, scratch_operands = 0 : i64, tpu.core_type = #tpu.core_type<tc>, window_params = [{pipeline_mode = #tpu.pipeline_mode<synchronous>, transform_indices = @transform_0, window_bounds = array<i64: 8, 32>}, {transform_indices = @transform_1, window_bounds = array<i64: 1, 8, 32>}, {transform_indices = @transform_2, window_bounds = array<i64: 1, 8, 8>}, {transform_indices = @transform_3, window_bounds = array<i64: 1, 8, 32>}, {transform_indices = @transform_4, window_bounds = array<i64: 1, 1, 8>}, {pipeline_mode = #tpu.pipeline_mode<synchronous>, transform_indices = @transform_5, window_bounds = array<i64: 1, 32>}, {pipeline_mode = #tpu.pipeline_mode<synchronous>, transform_indices = @transform_6, window_bounds = array<i64: 1, 32>}, {pipeline_mode = #tpu.pipeline_mode<synchronous>, transform_indices = @transform_7, window_bounds = array<i64: 32, 96>}, {pipeline_mode = #tpu.pipeline_mode<synchronous>, transform_indices = @transform_8, window_bounds = array<i64: 32, 32>}, {pipeline_mode = #tpu.pipeline_mode<synchronous>, transform_indices = @transform_9, window_bounds = array<i64: 1, 32>}, {pipeline_mode = #tpu.pipeline_mode<synchronous>, transform_indices = @transform_10, window_bounds = array<i64: 1, 32>}, {pipeline_mode = #tpu.pipeline_mode<synchronous>, transform_indices = @transform_11, window_bounds = array<i64: 32, 32>}, {pipeline_mode = #tpu.pipeline_mode<synchronous>, transform_indices = @transform_12, window_bounds = array<i64: 32, 64>}, {pipeline_mode = #tpu.pipeline_mode<synchronous>, transform_indices = @transform_13, window_bounds = array<i64: 32, 32>}, {pipeline_mode = #tpu.pipeline_mode<synchronous>, transform_indices = @transform_14, window_bounds = array<i64: 1, 32>}, {pipeline_mode = #tpu.pipeline_mode<synchronous>, transform_indices = @transform_15, window_bounds = array<i64: 1, 32>}, {pipeline_mode = #tpu.pipeline_mode<synchronous>, transform_indices = @transform_16, window_bounds = array<i64: 32, 64>}, {pipeline_mode = #tpu.pipeline_mode<synchronous>, transform_indices = @transform_17, window_bounds = array<i64: 1, 64>}, {pipeline_mode = #tpu.pipeline_mode<synchronous>, transform_indices = @transform_18, window_bounds = array<i64: 64, 32>}, {pipeline_mode = #tpu.pipeline_mode<synchronous>, transform_indices = @transform_19, window_bounds = array<i64: 1, 32>}, {pipeline_mode = #tpu.pipeline_mode<synchronous>, transform_indices = @transform_20, window_bounds = array<i64: 1, 32>}, {pipeline_mode = #tpu.pipeline_mode<synchronous>, transform_indices = @transform_21, window_bounds = array<i64: 1, 32>}, {transform_indices = @transform_22, window_bounds = array<i64: 1, 8, 32>}]} {
    %c0 = arith.constant 0 : index
    %c0_0 = arith.constant 0 : index
    %c0_1 = arith.constant 0 : index
    %0 = vector.load %arg2[%c0, %c0_0, %c0_1] : memref<1x8x32xf32, #tpu.memory_space<vmem>>, vector<1x8x32xf32>
    %c0_2 = arith.constant 0 : index
    %c0_3 = arith.constant 0 : index
    %1 = vector.load %arg1[%c0_2, %c0_3] : memref<8x32xf32, #tpu.memory_space<vmem>>, vector<8x32xf32>
    %2 = vector.shape_cast %1 : vector<8x32xf32> to vector<1x8x32xf32>
    %3 = arith.addf %0, %2 : vector<1x8x32xf32>
    %4 = vector.shape_cast %3 : vector<1x8x32xf32> to vector<8x32xf32>
    %c0_4 = arith.constant 0 : index
    %c0_5 = arith.constant 0 : index
    %5 = vector.load %arg6[%c0_4, %c0_5] : memref<1x32xf32, #tpu.memory_space<vmem>>, vector<1x32xf32>
    %c0_6 = arith.constant 0 : index
    %c0_7 = arith.constant 0 : index
    %6 = vector.load %arg7[%c0_6, %c0_7] : memref<1x32xf32, #tpu.memory_space<vmem>>, vector<1x32xf32>
    %cst = arith.constant dense<0.000000e+00> : vector<8xf32>
    %7 = vector.multi_reduction <add>, %4, %cst [1] : vector<8x32xf32> to vector<8xf32>
    %8 = vector.shape_cast %7 : vector<8xf32> to vector<8x1xf32>
    %cst_8 = arith.constant 3.200000e+01 : f32
    %9 = vector.broadcast %cst_8 : f32 to vector<8x1xf32>
    %10 = arith.divf %8, %9 : vector<8x1xf32>
    %11 = vector.broadcast %10 : vector<8x1xf32> to vector<8x32xf32>
    %12 = arith.subf %4, %11 : vector<8x32xf32>
    %13 = arith.mulf %12, %12 : vector<8x32xf32>
    %cst_9 = arith.constant dense<0.000000e+00> : vector<8xf32>
    %14 = vector.multi_reduction <add>, %13, %cst_9 [1] : vector<8x32xf32> to vector<8xf32>
    %15 = vector.shape_cast %14 : vector<8xf32> to vector<8x1xf32>
    %cst_10 = arith.constant 3.200000e+01 : f32
    %16 = vector.broadcast %cst_10 : f32 to vector<8x1xf32>
    %17 = arith.divf %15, %16 : vector<8x1xf32>
    %18 = vector.broadcast %10 : vector<8x1xf32> to vector<8x32xf32>
    %19 = arith.subf %4, %18 : vector<8x32xf32>
    %cst_11 = arith.constant 9.99999997E-7 : f32
    %20 = vector.broadcast %cst_11 : f32 to vector<8x1xf32>
    %21 = arith.addf %17, %20 : vector<8x1xf32>
    %22 = math.rsqrt %21 : vector<8x1xf32>
    %23 = vector.broadcast %22 : vector<8x1xf32> to vector<8x32xf32>
    %24 = arith.mulf %19, %23 : vector<8x32xf32>
    %25 = vector.broadcast %5 : vector<1x32xf32> to vector<8x32xf32>
    %26 = arith.mulf %24, %25 : vector<8x32xf32>
    %27 = vector.broadcast %6 : vector<1x32xf32> to vector<8x32xf32>
    %28 = arith.addf %26, %27 : vector<8x32xf32>
    %c0_12 = arith.constant 0 : index
    %c0_13 = arith.constant 0 : index
    %29 = vector.load %arg8[%c0_12, %c0_13] : memref<32x96xf32, #tpu.memory_space<vmem>>, vector<32x96xf32>
    %cst_14 = arith.constant dense<0.000000e+00> : vector<8x96xf32>
    %30 = tpu.matmul %28, %29, %cst_14 {dimension_numbers = #tpu.dot_dimension_numbers<[1], [0], [0], [1], [0, 0, 1, 1], [], []>} : vector<8x32xf32>, vector<32x96xf32>, vector<8x96xf32> -> vector<8x96xf32>
    %31 = vector.extract_strided_slice %30 {offsets = [0, 0], sizes = [8, 32], strides = [1, 1]} : vector<8x96xf32> to vector<8x32xf32>
    %32 = vector.extract_strided_slice %30 {offsets = [0, 32], sizes = [8, 32], strides = [1, 1]} : vector<8x96xf32> to vector<8x32xf32>
    %33 = vector.extract_strided_slice %30 {offsets = [0, 64], sizes = [8, 32], strides = [1, 1]} : vector<8x96xf32> to vector<8x32xf32>
    %c0_15 = arith.constant 0 : index
    %c0_16 = arith.constant 0 : index
    %c0_17 = arith.constant 0 : index
    %34 = vector.load %arg3[%c0_15, %c0_16, %c0_17] : memref<1x8x8xf32, #tpu.memory_space<vmem>>, vector<1x8x8xf32>
    %c0_18 = arith.constant 0 : index
    %c0_19 = arith.constant 0 : index
    %35 = vector.load %arg9[%c0_18, %c0_19] : memref<32x32xf32, #tpu.memory_space<vmem>>, vector<32x32xf32>
    %c0_20 = arith.constant 0 : index
    %c0_21 = arith.constant 0 : index
    %36 = vector.load %arg10[%c0_20, %c0_21] : memref<1x32xf32, #tpu.memory_space<vmem>>, vector<1x32xf32>
    %c0_22 = arith.constant 0 : index
    %c0_23 = arith.constant 0 : index
    %37 = vector.load %arg11[%c0_22, %c0_23] : memref<1x32xf32, #tpu.memory_space<vmem>>, vector<1x32xf32>
    %cst_24 = arith.constant 0.353553385 : f32
    %38 = vector.broadcast %cst_24 : f32 to vector<8x32xf32>
    %39 = arith.mulf %31, %38 : vector<8x32xf32>
    %40 = vector.shape_cast %39 : vector<8x32xf32> to vector<8x4x8xf32>
    %41 = tpu.transpose %40, [1, 0, 2] : vector<8x4x8xf32> -> vector<4x8x8xf32>
    %42 = vector.shape_cast %32 : vector<8x32xf32> to vector<8x4x8xf32>
    %43 = tpu.transpose %42, [1, 0, 2] : vector<8x4x8xf32> -> vector<4x8x8xf32>
    %44 = vector.shape_cast %33 : vector<8x32xf32> to vector<8x4x8xf32>
    %45 = tpu.transpose %44, [1, 0, 2] : vector<8x4x8xf32> -> vector<4x8x8xf32>
    "tpu.trace_start"() <{level = 10 : i32, message = "bqd,bkd->bqk"}> : () -> ()
    %cst_25 = arith.constant dense<0.000000e+00> : vector<4x8x8xf32>
    %46 = tpu.matmul %41, %43, %cst_25 {dimension_numbers = #tpu.dot_dimension_numbers<[2], [2], [1], [1], [0, 0, 0, 1, 1, 1], [0], [0]>} : vector<4x8x8xf32>, vector<4x8x8xf32>, vector<4x8x8xf32> -> vector<4x8x8xf32>
    "tpu.trace_stop"() : () -> ()
    %47 = vector.shape_cast %46 : vector<4x8x8xf32> to vector<4x1x8x8xf32>
    %48 = vector.shape_cast %34 : vector<1x8x8xf32> to vector<1x1x8x8xf32>
    %cst_26 = arith.constant 0.000000e+00 : f32
    %49 = vector.broadcast %cst_26 : f32 to vector<1x1x8x8xf32>
    %50 = arith.cmpf oeq, %48, %49 : vector<1x1x8x8xf32>
    %cst_27 = arith.constant -1.000000e+09 : f32
    %51 = vector.shape_cast %50 : vector<1x1x8x8xi1> to vector<1x1x8x8xi1>
    %52 = vector.broadcast %51 : vector<1x1x8x8xi1> to vector<4x1x8x8xi1>
    %53 = vector.broadcast %cst_27 : f32 to vector<4x1x8x8xf32>
    %54 = arith.select %52, %53, %47 : vector<4x1x8x8xi1>, vector<4x1x8x8xf32>
    %cst_28 = arith.constant dense<0xFF800000> : vector<4x1x8xf32>
    %55 = vector.multi_reduction <maximumf>, %54, %cst_28 [3] : vector<4x1x8x8xf32> to vector<4x1x8xf32>
    %56 = vector.shape_cast %55 : vector<4x1x8xf32> to vector<4x1x8x1xf32>
    %57 = vector.broadcast %56 : vector<4x1x8x1xf32> to vector<4x1x8x8xf32>
    %58 = arith.subf %54, %57 : vector<4x1x8x8xf32>
    %59 = math.exp %58 : vector<4x1x8x8xf32>
    %cst_29 = arith.constant dense<0.000000e+00> : vector<4x1x8xf32>
    %60 = vector.multi_reduction <add>, %59, %cst_29 [3] : vector<4x1x8x8xf32> to vector<4x1x8xf32>
    %61 = vector.shape_cast %60 : vector<4x1x8xf32> to vector<4x1x8x1xf32>
    %62 = tpu.reciprocal %61 {approx = true} : vector<4x1x8x1xf32> -> vector<4x1x8x1xf32>
    %63 = vector.broadcast %62 : vector<4x1x8x1xf32> to vector<4x1x8x8xf32>
    %64 = arith.mulf %59, %63 : vector<4x1x8x8xf32>
    %65 = vector.shape_cast %64 : vector<4x1x8x8xf32> to vector<4x8x8xf32>
    "tpu.trace_start"() <{level = 10 : i32, message = "bqk,bkd->bqd"}> : () -> ()
    %cst_30 = arith.constant dense<0.000000e+00> : vector<4x8x8xf32>
    %66 = tpu.matmul %65, %45, %cst_30 {dimension_numbers = #tpu.dot_dimension_numbers<[2], [1], [1], [2], [0, 0, 0, 1, 1, 2], [0], [0]>} : vector<4x8x8xf32>, vector<4x8x8xf32>, vector<4x8x8xf32> -> vector<4x8x8xf32>
    "tpu.trace_stop"() : () -> ()
    %67 = tpu.transpose %66, [1, 0, 2] : vector<4x8x8xf32> -> vector<8x4x8xf32>
    %68 = vector.shape_cast %67 : vector<8x4x8xf32> to vector<8x32xf32>
    %cst_31 = arith.constant dense<0.000000e+00> : vector<8x32xf32>
    %69 = tpu.matmul %68, %35, %cst_31 {dimension_numbers = #tpu.dot_dimension_numbers<[1], [0], [0], [1], [0, 0, 1, 1], [], []>} : vector<8x32xf32>, vector<32x32xf32>, vector<8x32xf32> -> vector<8x32xf32>
    %70 = arith.addf %69, %28 : vector<8x32xf32>
    %cst_32 = arith.constant dense<0.000000e+00> : vector<8xf32>
    %71 = vector.multi_reduction <add>, %70, %cst_32 [1] : vector<8x32xf32> to vector<8xf32>
    %72 = vector.shape_cast %71 : vector<8xf32> to vector<8x1xf32>
    %cst_33 = arith.constant 3.200000e+01 : f32
    %73 = vector.broadcast %cst_33 : f32 to vector<8x1xf32>
    %74 = arith.divf %72, %73 : vector<8x1xf32>
    %75 = vector.broadcast %74 : vector<8x1xf32> to vector<8x32xf32>
    %76 = arith.subf %70, %75 : vector<8x32xf32>
    %77 = arith.mulf %76, %76 : vector<8x32xf32>
    %cst_34 = arith.constant dense<0.000000e+00> : vector<8xf32>
    %78 = vector.multi_reduction <add>, %77, %cst_34 [1] : vector<8x32xf32> to vector<8xf32>
    %79 = vector.shape_cast %78 : vector<8xf32> to vector<8x1xf32>
    %cst_35 = arith.constant 3.200000e+01 : f32
    %80 = vector.broadcast %cst_35 : f32 to vector<8x1xf32>
    %81 = arith.divf %79, %80 : vector<8x1xf32>
    %82 = vector.broadcast %74 : vector<8x1xf32> to vector<8x32xf32>
    %83 = arith.subf %70, %82 : vector<8x32xf32>
    %cst_36 = arith.constant 9.99999997E-7 : f32
    %84 = vector.broadcast %cst_36 : f32 to vector<8x1xf32>
    %85 = arith.addf %81, %84 : vector<8x1xf32>
    %86 = math.rsqrt %85 : vector<8x1xf32>
    %87 = vector.broadcast %86 : vector<8x1xf32> to vector<8x32xf32>
    %88 = arith.mulf %83, %87 : vector<8x32xf32>
    %89 = vector.broadcast %36 : vector<1x32xf32> to vector<8x32xf32>
    %90 = arith.mulf %88, %89 : vector<8x32xf32>
    %91 = vector.broadcast %37 : vector<1x32xf32> to vector<8x32xf32>
    %92 = arith.addf %90, %91 : vector<8x32xf32>
    %c0_37 = arith.constant 0 : index
    %c0_38 = arith.constant 0 : index
    %c0_39 = arith.constant 0 : index
    %93 = vector.load %arg4[%c0_37, %c0_38, %c0_39] : memref<1x8x32xf32, #tpu.memory_space<vmem>>, vector<1x8x32xf32>
    %94 = vector.shape_cast %93 : vector<1x8x32xf32> to vector<8x32xf32>
    %c0_40 = arith.constant 0 : index
    %c0_41 = arith.constant 0 : index
    %95 = vector.load %arg12[%c0_40, %c0_41] : memref<32x32xf32, #tpu.memory_space<vmem>>, vector<32x32xf32>
    %cst_42 = arith.constant dense<0.000000e+00> : vector<8x32xf32>
    %96 = tpu.matmul %92, %95, %cst_42 {dimension_numbers = #tpu.dot_dimension_numbers<[1], [0], [0], [1], [0, 0, 1, 1], [], []>} : vector<8x32xf32>, vector<32x32xf32>, vector<8x32xf32> -> vector<8x32xf32>
    %c0_43 = arith.constant 0 : index
    %c0_44 = arith.constant 0 : index
    %97 = vector.load %arg13[%c0_43, %c0_44] : memref<32x64xf32, #tpu.memory_space<vmem>>, vector<32x64xf32>
    %cst_45 = arith.constant dense<0.000000e+00> : vector<8x64xf32>
    %98 = tpu.matmul %94, %97, %cst_45 {dimension_numbers = #tpu.dot_dimension_numbers<[1], [0], [0], [1], [0, 0, 1, 1], [], []>} : vector<8x32xf32>, vector<32x64xf32>, vector<8x64xf32> -> vector<8x64xf32>
    %99 = vector.extract_strided_slice %98 {offsets = [0, 0], sizes = [8, 32], strides = [1, 1]} : vector<8x64xf32> to vector<8x32xf32>
    %100 = vector.extract_strided_slice %98 {offsets = [0, 32], sizes = [8, 32], strides = [1, 1]} : vector<8x64xf32> to vector<8x32xf32>
    %c0_46 = arith.constant 0 : index
    %c0_47 = arith.constant 0 : index
    %c0_48 = arith.constant 0 : index
    %101 = vector.load %arg5[%c0_46, %c0_47, %c0_48] : memref<1x1x8xf32, #tpu.memory_space<vmem>>, vector<1x1x8xf32>
    %c0_49 = arith.constant 0 : index
    %c0_50 = arith.constant 0 : index
    %102 = vector.load %arg14[%c0_49, %c0_50] : memref<32x32xf32, #tpu.memory_space<vmem>>, vector<32x32xf32>
    %c0_51 = arith.constant 0 : index
    %c0_52 = arith.constant 0 : index
    %103 = vector.load %arg15[%c0_51, %c0_52] : memref<1x32xf32, #tpu.memory_space<vmem>>, vector<1x32xf32>
    %c0_53 = arith.constant 0 : index
    %c0_54 = arith.constant 0 : index
    %104 = vector.load %arg16[%c0_53, %c0_54] : memref<1x32xf32, #tpu.memory_space<vmem>>, vector<1x32xf32>
    %cst_55 = arith.constant 0.353553385 : f32
    %105 = vector.broadcast %cst_55 : f32 to vector<8x32xf32>
    %106 = arith.mulf %96, %105 : vector<8x32xf32>
    %107 = vector.shape_cast %106 : vector<8x32xf32> to vector<8x4x8xf32>
    %108 = tpu.transpose %107, [1, 0, 2] : vector<8x4x8xf32> -> vector<4x8x8xf32>
    %109 = vector.shape_cast %99 : vector<8x32xf32> to vector<8x4x8xf32>
    %110 = tpu.transpose %109, [1, 0, 2] : vector<8x4x8xf32> -> vector<4x8x8xf32>
    %111 = vector.shape_cast %100 : vector<8x32xf32> to vector<8x4x8xf32>
    %112 = tpu.transpose %111, [1, 0, 2] : vector<8x4x8xf32> -> vector<4x8x8xf32>
    "tpu.trace_start"() <{level = 10 : i32, message = "bqd,bkd->bqk"}> : () -> ()
    %cst_56 = arith.constant dense<0.000000e+00> : vector<4x8x8xf32>
    %113 = tpu.matmul %108, %110, %cst_56 {dimension_numbers = #tpu.dot_dimension_numbers<[2], [2], [1], [1], [0, 0, 0, 1, 1, 1], [0], [0]>} : vector<4x8x8xf32>, vector<4x8x8xf32>, vector<4x8x8xf32> -> vector<4x8x8xf32>
    "tpu.trace_stop"() : () -> ()
    %114 = vector.shape_cast %113 : vector<4x8x8xf32> to vector<4x1x8x8xf32>
    %115 = vector.shape_cast %101 : vector<1x1x8xf32> to vector<1x1x1x8xf32>
    %cst_57 = arith.constant 0.000000e+00 : f32
    %116 = vector.broadcast %cst_57 : f32 to vector<1x1x1x8xf32>
    %117 = arith.cmpf oeq, %115, %116 : vector<1x1x1x8xf32>
    %cst_58 = arith.constant -1.000000e+09 : f32
    %118 = vector.shape_cast %117 : vector<1x1x1x8xi1> to vector<1x1x1x8xi1>
    %119 = vector.broadcast %118 : vector<1x1x1x8xi1> to vector<4x1x8x8xi1>
    %120 = vector.broadcast %cst_58 : f32 to vector<4x1x8x8xf32>
    %121 = arith.select %119, %120, %114 : vector<4x1x8x8xi1>, vector<4x1x8x8xf32>
    %cst_59 = arith.constant dense<0xFF800000> : vector<4x1x8xf32>
    %122 = vector.multi_reduction <maximumf>, %121, %cst_59 [3] : vector<4x1x8x8xf32> to vector<4x1x8xf32>
    %123 = vector.shape_cast %122 : vector<4x1x8xf32> to vector<4x1x8x1xf32>
    %124 = vector.broadcast %123 : vector<4x1x8x1xf32> to vector<4x1x8x8xf32>
    %125 = arith.subf %121, %124 : vector<4x1x8x8xf32>
    %126 = math.exp %125 : vector<4x1x8x8xf32>
    %cst_60 = arith.constant dense<0.000000e+00> : vector<4x1x8xf32>
    %127 = vector.multi_reduction <add>, %126, %cst_60 [3] : vector<4x1x8x8xf32> to vector<4x1x8xf32>
    %128 = vector.shape_cast %127 : vector<4x1x8xf32> to vector<4x1x8x1xf32>
    %129 = tpu.reciprocal %128 {approx = true} : vector<4x1x8x1xf32> -> vector<4x1x8x1xf32>
    %130 = vector.broadcast %129 : vector<4x1x8x1xf32> to vector<4x1x8x8xf32>
    %131 = arith.mulf %126, %130 : vector<4x1x8x8xf32>
    %132 = vector.shape_cast %131 : vector<4x1x8x8xf32> to vector<4x8x8xf32>
    "tpu.trace_start"() <{level = 10 : i32, message = "bqk,bkd->bqd"}> : () -> ()
    %cst_61 = arith.constant dense<0.000000e+00> : vector<4x8x8xf32>
    %133 = tpu.matmul %132, %112, %cst_61 {dimension_numbers = #tpu.dot_dimension_numbers<[2], [1], [1], [2], [0, 0, 0, 1, 1, 2], [0], [0]>} : vector<4x8x8xf32>, vector<4x8x8xf32>, vector<4x8x8xf32> -> vector<4x8x8xf32>
    "tpu.trace_stop"() : () -> ()
    %134 = tpu.transpose %133, [1, 0, 2] : vector<4x8x8xf32> -> vector<8x4x8xf32>
    %135 = vector.shape_cast %134 : vector<8x4x8xf32> to vector<8x32xf32>
    %cst_62 = arith.constant dense<0.000000e+00> : vector<8x32xf32>
    %136 = tpu.matmul %135, %102, %cst_62 {dimension_numbers = #tpu.dot_dimension_numbers<[1], [0], [0], [1], [0, 0, 1, 1], [], []>} : vector<8x32xf32>, vector<32x32xf32>, vector<8x32xf32> -> vector<8x32xf32>
    %137 = arith.addf %136, %92 : vector<8x32xf32>
    %cst_63 = arith.constant dense<0.000000e+00> : vector<8xf32>
    %138 = vector.multi_reduction <add>, %137, %cst_63 [1] : vector<8x32xf32> to vector<8xf32>
    %139 = vector.shape_cast %138 : vector<8xf32> to vector<8x1xf32>
    %cst_64 = arith.constant 3.200000e+01 : f32
    %140 = vector.broadcast %cst_64 : f32 to vector<8x1xf32>
    %141 = arith.divf %139, %140 : vector<8x1xf32>
    %142 = vector.broadcast %141 : vector<8x1xf32> to vector<8x32xf32>
    %143 = arith.subf %137, %142 : vector<8x32xf32>
    %144 = arith.mulf %143, %143 : vector<8x32xf32>
    %cst_65 = arith.constant dense<0.000000e+00> : vector<8xf32>
    %145 = vector.multi_reduction <add>, %144, %cst_65 [1] : vector<8x32xf32> to vector<8xf32>
    %146 = vector.shape_cast %145 : vector<8xf32> to vector<8x1xf32>
    %cst_66 = arith.constant 3.200000e+01 : f32
    %147 = vector.broadcast %cst_66 : f32 to vector<8x1xf32>
    %148 = arith.divf %146, %147 : vector<8x1xf32>
    %149 = vector.broadcast %141 : vector<8x1xf32> to vector<8x32xf32>
    %150 = arith.subf %137, %149 : vector<8x32xf32>
    %cst_67 = arith.constant 9.99999997E-7 : f32
    %151 = vector.broadcast %cst_67 : f32 to vector<8x1xf32>
    %152 = arith.addf %148, %151 : vector<8x1xf32>
    %153 = math.rsqrt %152 : vector<8x1xf32>
    %154 = vector.broadcast %153 : vector<8x1xf32> to vector<8x32xf32>
    %155 = arith.mulf %150, %154 : vector<8x32xf32>
    %156 = vector.broadcast %103 : vector<1x32xf32> to vector<8x32xf32>
    %157 = arith.mulf %155, %156 : vector<8x32xf32>
    %158 = vector.broadcast %104 : vector<1x32xf32> to vector<8x32xf32>
    %159 = arith.addf %157, %158 : vector<8x32xf32>
    %c0_68 = arith.constant 0 : index
    %c0_69 = arith.constant 0 : index
    %160 = vector.load %arg17[%c0_68, %c0_69] : memref<32x64xf32, #tpu.memory_space<vmem>>, vector<32x64xf32>
    %cst_70 = arith.constant dense<0.000000e+00> : vector<8x64xf32>
    %161 = tpu.matmul %159, %160, %cst_70 {dimension_numbers = #tpu.dot_dimension_numbers<[1], [0], [0], [1], [0, 0, 1, 1], [], []>} : vector<8x32xf32>, vector<32x64xf32>, vector<8x64xf32> -> vector<8x64xf32>
    %c0_71 = arith.constant 0 : index
    %c0_72 = arith.constant 0 : index
    %162 = vector.load %arg18[%c0_71, %c0_72] : memref<1x64xf32, #tpu.memory_space<vmem>>, vector<1x64xf32>
    %163 = vector.broadcast %162 : vector<1x64xf32> to vector<8x64xf32>
    %164 = arith.addf %161, %163 : vector<8x64xf32>
    %cst_73 = arith.constant 0.000000e+00 : f32
    %165 = vector.broadcast %cst_73 : f32 to vector<8x64xf32>
    %166 = arith.maximumf %164, %165 : vector<8x64xf32>
    %c0_74 = arith.constant 0 : index
    %c0_75 = arith.constant 0 : index
    %167 = vector.load %arg19[%c0_74, %c0_75] : memref<64x32xf32, #tpu.memory_space<vmem>>, vector<64x32xf32>
    %cst_76 = arith.constant dense<0.000000e+00> : vector<8x32xf32>
    %168 = tpu.matmul %166, %167, %cst_76 {dimension_numbers = #tpu.dot_dimension_numbers<[1], [0], [0], [1], [0, 0, 1, 1], [], []>} : vector<8x64xf32>, vector<64x32xf32>, vector<8x32xf32> -> vector<8x32xf32>
    %c0_77 = arith.constant 0 : index
    %c0_78 = arith.constant 0 : index
    %169 = vector.load %arg20[%c0_77, %c0_78] : memref<1x32xf32, #tpu.memory_space<vmem>>, vector<1x32xf32>
    %170 = vector.broadcast %169 : vector<1x32xf32> to vector<8x32xf32>
    %171 = arith.addf %168, %170 : vector<8x32xf32>
    %172 = arith.addf %171, %159 : vector<8x32xf32>
    %c0_79 = arith.constant 0 : index
    %c0_80 = arith.constant 0 : index
    %173 = vector.load %arg21[%c0_79, %c0_80] : memref<1x32xf32, #tpu.memory_space<vmem>>, vector<1x32xf32>
    %c0_81 = arith.constant 0 : index
    %c0_82 = arith.constant 0 : index
    %174 = vector.load %arg22[%c0_81, %c0_82] : memref<1x32xf32, #tpu.memory_space<vmem>>, vector<1x32xf32>
    %cst_83 = arith.constant dense<0.000000e+00> : vector<8xf32>
    %175 = vector.multi_reduction <add>, %172, %cst_83 [1] : vector<8x32xf32> to vector<8xf32>
    %176 = vector.shape_cast %175 : vector<8xf32> to vector<8x1xf32>
    %cst_84 = arith.constant 3.200000e+01 : f32
    %177 = vector.broadcast %cst_84 : f32 to vector<8x1xf32>
    %178 = arith.divf %176, %177 : vector<8x1xf32>
    %179 = vector.broadcast %178 : vector<8x1xf32> to vector<8x32xf32>
    %180 = arith.subf %172, %179 : vector<8x32xf32>
    %181 = arith.mulf %180, %180 : vector<8x32xf32>
    %cst_85 = arith.constant dense<0.000000e+00> : vector<8xf32>
    %182 = vector.multi_reduction <add>, %181, %cst_85 [1] : vector<8x32xf32> to vector<8xf32>
    %183 = vector.shape_cast %182 : vector<8xf32> to vector<8x1xf32>
    %cst_86 = arith.constant 3.200000e+01 : f32
    %184 = vector.broadcast %cst_86 : f32 to vector<8x1xf32>
    %185 = arith.divf %183, %184 : vector<8x1xf32>
    %186 = vector.broadcast %178 : vector<8x1xf32> to vector<8x32xf32>
    %187 = arith.subf %172, %186 : vector<8x32xf32>
    %cst_87 = arith.constant 9.99999997E-7 : f32
    %188 = vector.broadcast %cst_87 : f32 to vector<8x1xf32>
    %189 = arith.addf %185, %188 : vector<8x1xf32>
    %190 = math.rsqrt %189 : vector<8x1xf32>
    %191 = vector.broadcast %190 : vector<8x1xf32> to vector<8x32xf32>
    %192 = arith.mulf %187, %191 : vector<8x32xf32>
    %193 = vector.broadcast %173 : vector<1x32xf32> to vector<8x32xf32>
    %194 = arith.mulf %192, %193 : vector<8x32xf32>
    %195 = vector.broadcast %174 : vector<1x32xf32> to vector<8x32xf32>
    %196 = arith.addf %194, %195 : vector<8x32xf32>
    %197 = vector.shape_cast %196 : vector<8x32xf32> to vector<1x8x32xf32>
    %c0_88 = arith.constant 0 : index
    %c0_89 = arith.constant 0 : index
    %c0_90 = arith.constant 0 : index
    %198 = vector.load %arg23[%c0_88, %c0_89, %c0_90] : memref<1x8x32xf32, #tpu.memory_space<vmem>>, vector<1x8x32xf32>
    tpu.vector_store %arg23[%c0_88, %c0_89, %c0_90], %197 {strides = array<i32>} : memref<1x8x32xf32, #tpu.memory_space<vmem>>, vector<1x8x32xf32>,
    return
  }
  func.func @transform_0(%arg0: i32) -> (i32, i32) {
    %c0_i32 = arith.constant 0 : i32
    %c0_i32_0 = arith.constant 0 : i32
    %c0_i32_1 = arith.constant 0 : i32
    return %c0_i32, %c0_i32_0 : i32, i32
  }
  func.func @transform_1(%arg0: i32) -> (i32, i32, i32) {
    %c0_i32 = arith.constant 0 : i32
    %c0_i32_0 = arith.constant 0 : i32
    %c0_i32_1 = arith.constant 0 : i32
    return %arg0, %c0_i32, %c0_i32_0 : i32, i32, i32
  }
  func.func @transform_2(%arg0: i32) -> (i32, i32, i32) {
    %c0_i32 = arith.constant 0 : i32
    %c0_i32_0 = arith.constant 0 : i32
    %c0_i32_1 = arith.constant 0 : i32
    return %arg0, %c0_i32, %c0_i32_0 : i32, i32, i32
  }
  func.func @transform_3(%arg0: i32) -> (i32, i32, i32) {
    %c0_i32 = arith.constant 0 : i32
    %c0_i32_0 = arith.constant 0 : i32
    %c0_i32_1 = arith.constant 0 : i32
    return %arg0, %c0_i32, %c0_i32_0 : i32, i32, i32
  }
  func.func @transform_4(%arg0: i32) -> (i32, i32, i32) {
    %c0_i32 = arith.constant 0 : i32
    %c0_i32_0 = arith.constant 0 : i32
    %c0_i32_1 = arith.constant 0 : i32
    return %arg0, %c0_i32, %c0_i32_0 : i32, i32, i32
  }
  func.func @transform_5(%arg0: i32) -> (i32, i32) {
    %c0_i32 = arith.constant 0 : i32
    %c0_i32_0 = arith.constant 0 : i32
    %c0_i32_1 = arith.constant 0 : i32
    return %c0_i32, %c0_i32_0 : i32, i32
  }
  func.func @transform_6(%arg0: i32) -> (i32, i32) {
    %c0_i32 = arith.constant 0 : i32
    %c0_i32_0 = arith.constant 0 : i32
    %c0_i32_1 = arith.constant 0 : i32
    return %c0_i32, %c0_i32_0 : i32, i32
  }
  func.func @transform_7(%arg0: i32) -> (i32, i32) {
    %c0_i32 = arith.constant 0 : i32
    %c0_i32_0 = arith.constant 0 : i32
    %c0_i32_1 = arith.constant 0 : i32
    return %c0_i32, %c0_i32_0 : i32, i32
  }
  func.func @transform_8(%arg0: i32) -> (i32, i32) {
    %c0_i32 = arith.constant 0 : i32
    %c0_i32_0 = arith.constant 0 : i32
    %c0_i32_1 = arith.constant 0 : i32
    return %c0_i32, %c0_i32_0 : i32, i32
  }
  func.func @transform_9(%arg0: i32) -> (i32, i32) {
    %c0_i32 = arith.constant 0 : i32
    %c0_i32_0 = arith.constant 0 : i32
    %c0_i32_1 = arith.constant 0 : i32
    return %c0_i32, %c0_i32_0 : i32, i32
  }
  func.func @transform_10(%arg0: i32) -> (i32, i32) {
    %c0_i32 = arith.constant 0 : i32
    %c0_i32_0 = arith.constant 0 : i32
    %c0_i32_1 = arith.constant 0 : i32
    return %c0_i32, %c0_i32_0 : i32, i32
  }
  func.func @transform_11(%arg0: i32) -> (i32, i32) {
    %c0_i32 = arith.constant 0 : i32
    %c0_i32_0 = arith.constant 0 : i32
    %c0_i32_1 = arith.constant 0 : i32
    return %c0_i32, %c0_i32_0 : i32, i32
  }
  func.func @transform_12(%arg0: i32) -> (i32, i32) {
    %c0_i32 = arith.constant 0 : i32
    %c0_i32_0 = arith.constant 0 : i32
    %c0_i32_1 = arith.constant 0 : i32
    return %c0_i32, %c0_i32_0 : i32, i32
  }
  func.func @transform_13(%arg0: i32) -> (i32, i32) {
    %c0_i32 = arith.constant 0 : i32
    %c0_i32_0 = arith.constant 0 : i32
    %c0_i32_1 = arith.constant 0 : i32
    return %c0_i32, %c0_i32_0 : i32, i32
  }
  func.func @transform_14(%arg0: i32) -> (i32, i32) {
    %c0_i32 = arith.constant 0 : i32
    %c0_i32_0 = arith.constant 0 : i32
    %c0_i32_1 = arith.constant 0 : i32
    return %c0_i32, %c0_i32_0 : i32, i32
  }
  func.func @transform_15(%arg0: i32) -> (i32, i32) {
    %c0_i32 = arith.constant 0 : i32
    %c0_i32_0 = arith.constant 0 : i32
    %c0_i32_1 = arith.constant 0 : i32
    return %c0_i32, %c0_i32_0 : i32, i32
  }
  func.func @transform_16(%arg0: i32) -> (i32, i32) {
    %c0_i32 = arith.constant 0 : i32
    %c0_i32_0 = arith.constant 0 : i32
    %c0_i32_1 = arith.constant 0 : i32
    return %c0_i32, %c0_i32_0 : i32, i32
  }
  func.func @transform_17(%arg0: i32) -> (i32, i32) {
    %c0_i32 = arith.constant 0 : i32
    %c0_i32_0 = arith.constant 0 : i32
    %c0_i32_1 = arith.constant 0 : i32
    return %c0_i32, %c0_i32_0 : i32, i32
  }
  func.func @transform_18(%arg0: i32) -> (i32, i32) {
    %c0_i32 = arith.constant 0 : i32
    %c0_i32_0 = arith.constant 0 : i32
    %c0_i32_1 = arith.constant 0 : i32
    return %c0_i32, %c0_i32_0 : i32, i32
  }
  func.func @transform_19(%arg0: i32) -> (i32, i32) {
    %c0_i32 = arith.constant 0 : i32
    %c0_i32_0 = arith.constant 0 : i32
    %c0_i32_1 = arith.constant 0 : i32
    return %c0_i32, %c0_i32_0 : i32, i32
  }
  func.func @transform_20(%arg0: i32) -> (i32, i32) {
    %c0_i32 = arith.constant 0 : i32
    %c0_i32_0 = arith.constant 0 : i32
    %c0_i32_1 = arith.constant 0 : i32
    return %c0_i32, %c0_i32_0 : i32, i32
  }
  func.func @transform_21(%arg0: i32) -> (i32, i32) {
    %c0_i32 = arith.constant 0 : i32
    %c0_i32_0 = arith.constant 0 : i32
    %c0_i32_1 = arith.constant 0 : i32
    return %c0_i32, %c0_i32_0 : i32, i32
  }
  func.func @transform_22(%arg0: i32) -> (i32, i32, i32) {
    %c0_i32 = arith.constant 0 : i32
    %c0_i32_0 = arith.constant 0 : i32
    %c0_i32_1 = arith.constant 0 : i32
    return %arg0, %c0_i32, %c0_i32_0 : i32, i32, i32
  }
}

</mosaic_0001>

<llo_original>
// kernel: tpu_custom_call.1
$region0: #{tpu_custom_call.1}
  #allocation0 [shape = 'u32[]', space=smem, size = 0x4, offset = 0x4, fixed_abs, tag = 'smem constant byte address 0x4 - core index']
  #allocation1 [shape = 'u32[144,128]{1,0:T(1,128)}', space=vmem, size = 0x12000, scoped, tag = 'internal scratch']
  %s0 = inlined_call_operand.hbm [shape: f32[8,32], index: 0, kind: input, shape index: {}]
  %s1 = inlined_call_operand.hbm [shape: f32[2,8,32], index: 1, kind: input, shape index: {}]
  %s2 = inlined_call_operand.hbm [shape: f32[2,8,8], index: 2, kind: input, shape index: {}]
  %s3 = inlined_call_operand.hbm [shape: f32[2,8,32], index: 3, kind: input, shape index: {}]
  %s4 = inlined_call_operand.hbm [shape: f32[2,1,8], index: 4, kind: input, shape index: {}]
  %s5 = inlined_call_operand.hbm [shape: f32[1,32], index: 5, kind: input, shape index: {}]
  %s6 = inlined_call_operand.hbm [shape: f32[1,32], index: 6, kind: input, shape index: {}]
  %s7 = inlined_call_operand.vmem [shape: f32[32,96], index: 7, kind: input, shape index: {}]
  %s8 = inlined_call_operand.vmem [shape: f32[32,32], index: 8, kind: input, shape index: {}]
  %s9 = inlined_call_operand.hbm [shape: f32[1,32], index: 9, kind: input, shape index: {}]
  %s10 = inlined_call_operand.hbm [shape: f32[1,32], index: 10, kind: input, shape index: {}]
  %s11 = inlined_call_operand.vmem [shape: f32[32,32], index: 11, kind: input, shape index: {}]
  %s12 = inlined_call_operand.vmem [shape: f32[32,64], index: 12, kind: input, shape index: {}]
  %s13 = inlined_call_operand.hbm [shape: f32[32,32], index: 13, kind: input, shape index: {}]
  %s14 = inlined_call_operand.hbm [shape: f32[1,32], index: 14, kind: input, shape index: {}]
  %s15 = inlined_call_operand.hbm [shape: f32[1,32], index: 15, kind: input, shape index: {}]
  %s16 = inlined_call_operand.hbm [shape: f32[32,64], index: 16, kind: input, shape index: {}]
  %s17 = inlined_call_operand.hbm [shape: f32[1,64], index: 17, kind: input, shape index: {}]
  %s18 = inlined_call_operand.vmem [shape: f32[64,32], index: 18, kind: input, shape index: {}]
  %s19 = inlined_call_operand.vmem [shape: f32[1,32], index: 19, kind: input, shape index: {}]
  %s20 = inlined_call_operand.vmem [shape: f32[1,32], index: 20, kind: input, shape index: {}]
  %s21 = inlined_call_operand.vmem [shape: f32[1,32], index: 21, kind: input, shape index: {}]
  %s22 = inlined_call_operand.hbm [shape: f32[2,8,32], index: 22, kind: output, shape index: {}]
  %s23 = sld [smem:[#allocation0]]
  $region177: #{tpu_custom_call.1} parent=0
    _
  %s25 = ssub.s32 1, %s23
  %s26 = scalar_select 0, %s25, %s23
  $region1: #{tpu_custom_call.1} parent=0
    #allocation2 [shape = 'u8[4096]{0}', space=vmem, size = 0x1000, scoped, tag = 'input window, operand 0, single buffered']
    #allocation3 [shape = 's32[2]{0}', space=sflag, size = 0x8, scoped, tag = 'scoped memory for tpu_custom_call.1']
    #allocation4 [shape = 's32[2]{0}', space=sflag, size = 0x8, scoped, tag = 'scoped memory for tpu_custom_call.1']
    #allocation5 [shape = 'u8[8192]{0}', space=vmem, size = 0x2000, scoped, tag = 'input window, operand 1']
    #allocation6 [shape = 's32[2]{0}', space=sflag, size = 0x8, scoped, tag = 'scoped memory for tpu_custom_call.1']
    #allocation7 [shape = 'u8[8192]{0}', space=vmem, size = 0x2000, scoped, tag = 'input window, operand 2']
    #allocation8 [shape = 'u8[8192]{0}', space=vmem, size = 0x2000, scoped, tag = 'input window, operand 3']
    #allocation9 [shape = 's32[2]{0}', space=sflag, size = 0x8, scoped, tag = 'scoped memory for tpu_custom_call.1']
    #allocation10 [shape = 'u8[1024]{0}', space=vmem, size = 0x400, scoped, tag = 'input window, operand 4']
    #allocation11 [shape = 'u8[512]{0}', space=vmem, size = 0x400, scoped, tag = 'input window, operand 5, single buffered']
    #allocation12 [shape = 's32[1]{0}', space=sflag, size = 0x4, scoped, tag = 'scoped memory for tpu_custom_call.1']
    #allocation13 [shape = 'u8[512]{0}', space=vmem, size = 0x400, scoped, tag = 'input window, operand 6, single buffered']
    #allocation14 [shape = 'u8[512]{0}', space=vmem, size = 0x400, scoped, tag = 'input window, operand 9, single buffered']
    #allocation15 [shape = 's32[1]{0}', space=sflag, size = 0x4, scoped, tag = 'scoped memory for tpu_custom_call.1']
    #allocation16 [shape = 'u8[512]{0}', space=vmem, size = 0x400, scoped, tag = 'input window, operand 10, single buffered']
    #allocation17 [shape = 'u8[16384]{0}', space=vmem, size = 0x4000, scoped, tag = 'input window, operand 13, single buffered']
    #allocation18 [shape = 's32[1]{0}', space=sflag, size = 0x4, scoped, tag = 'scoped memory for tpu_custom_call.1']
    #allocation19 [shape = 'u8[512]{0}', space=vmem, size = 0x400, scoped, tag = 'input window, operand 14, single buffered']
    #allocation20 [shape = 'u8[512]{0}', space=vmem, size = 0x400, scoped, tag = 'input window, operand 15, single buffered']
    #allocation21 [shape = 's32[1]{0}', space=sflag, size = 0x4, scoped, tag = 'scoped memory for tpu_custom_call.1']
    #allocation22 [shape = 'u8[16384]{0}', space=vmem, size = 0x4000, scoped, tag = 'input window, operand 16, single buffered']
    #allocation23 [shape = 'u8[512]{0}', space=vmem, size = 0x400, scoped, tag = 'input window, operand 17, single buffered']
    #allocation24 [shape = 's32[1]{0}', space=sflag, size = 0x4, scoped, tag = 'scoped memory for tpu_custom_call.1']
    #allocation25 [shape = 'u8[8192]{0}', space=vmem, size = 0x2000, scoped, tag = 'output window, operand 0']
    %27 = vsyncpa [#allocation3], 0
    %28 = vsyncpa [#allocation6], 0
    %s29 = scalar_lea.sflag [#allocation6], 1
    %30 = vsyncpa %s29, 0
    %31 = vsyncpa [#allocation9], 0
    %s32 = scalar_lea.sflag [#allocation9], 1
    %33 = vsyncpa %s32, 0
    %34 = vsyncpa [#allocation12], 0
    %35 = vsyncpa [#allocation15], 0
    %36 = vsyncpa [#allocation18], 0
    %37 = vsyncpa [#allocation21], 0
    %38 = vsyncpa [#allocation24], 0
    %39 = vsyncpa [#allocation4], 0
    %s40 = scalar_lea.sflag [#allocation4], 1
    %41 = vsyncpa %s40, 0
    loop: start=0, step=1, limit=4
    $region2: #{tpu_custom_call.1} parent=1 // loop_pre_header
      _
    $region3: #{tpu_custom_call.1} parent=1 // loop_header
      %s43 = sphi 0, %s47
      %p44 = scmp.ge.s32.totalorder %s43, 4
      %s51 = sphi 0, %s51
      %s53 = sphi 0, %s51
      %s54 = sphi 0, %s53
      %s68 = sphi 0, %s54
      %s74 = sphi 0, %s76
      %s77 = sphi 0, %s74
      %s78 = sphi 0, %s77
      %s94 = sphi 0, %s78
      %s100 = sphi 0, %s102
      %s103 = sphi 0, %s100
      %s104 = sphi 0, %s103
      %s120 = sphi 0, %s104
      %s126 = sphi 0, %s128
      %s129 = sphi 0, %s126
      %s130 = sphi 0, %s129
      %s146 = sphi 0, %s130
      %s152 = sphi 0, %s154
      %s155 = sphi 0, %s152
      %s156 = sphi 0, %s155
      %s172 = sphi 0, %s156
      %s176 = sphi 0, %s176
      %s178 = sphi 0, %s176
      %s179 = sphi 0, %s178
      %s193 = sphi 0, %s179
      %s197 = sphi 0, %s197
      %s199 = sphi 0, %s197
      %s200 = sphi 0, %s199
      %s214 = sphi 0, %s200
      %s218 = sphi 0, %s218
      %s220 = sphi 0, %s218
      %s221 = sphi 0, %s220
      %s235 = sphi 0, %s221
      %s239 = sphi 0, %s239
      %s241 = sphi 0, %s239
      %s242 = sphi 0, %s241
      %s256 = sphi 0, %s242
      %s260 = sphi 0, %s260
      %s262 = sphi 0, %s260
      %s263 = sphi 0, %s262
      %s277 = sphi 0, %s263
      %s281 = sphi 0, %s281
      %s283 = sphi 0, %s281
      %s284 = sphi 0, %s283
      %s298 = sphi 0, %s284
      %s302 = sphi 0, %s302
      %s304 = sphi 0, %s302
      %s305 = sphi 0, %s304
      %s319 = sphi 0, %s305
      %s323 = sphi 0, %s323
      %s325 = sphi 0, %s323
      %s326 = sphi 0, %s325
      %s340 = sphi 0, %s326
      %s344 = sphi 0, %s344
      %s346 = sphi 0, %s344
      %s347 = sphi 0, %s346
      %s361 = sphi 0, %s347
      %s365 = sphi 0, %s365
      %s367 = sphi 0, %s365
      %s368 = sphi 0, %s367
      %s382 = sphi 0, %s368
      %s386 = sphi 0, %s386
      %s388 = sphi 0, %s386
      %s389 = sphi 0, %s388
      %s403 = sphi 0, %s389
      %s407 = sphi 0, %s407
      %s409 = sphi 0, %s407
      %s410 = sphi 0, %s409
      %s424 = sphi 0, %s410
      %s428 = sphi 0, %s428
      %s430 = sphi 0, %s428
      %s431 = sphi 0, %s430
      %s445 = sphi 0, %s431
      %s449 = sphi 0, %s449
      %s451 = sphi 0, %s449
      %s452 = sphi 0, %s451
      %s466 = sphi 0, %s452
      %s470 = sphi 0, %s470
      %s472 = sphi 0, %s470
      %s473 = sphi 0, %s472
      %s487 = sphi 0, %s473
      %s491 = sphi 0, %s491
      %s493 = sphi 0, %s491
      %s494 = sphi 0, %s493
      %s508 = sphi 0, %s494
      %s512 = sphi 0, %s512
      %s514 = sphi 0, %s512
      %s515 = sphi 0, %s514
      %s529 = sphi 0, %s515
      %s535 = sphi 0, %s537
      %s538 = sphi 0, %s535
      %s539 = sphi 0, %s538
      %s555 = sphi 0, %s539
    $region4: #{tpu_custom_call.1} parent=1 // loop_header_branch
      %46 = sbr.rel (%p44) target = $region8
    $region5: #{tpu_custom_call.1} parent=1 // loop_body
      %s48 = ssub.s32 %s43, 1
      %s49 = ssub.s32 %s43, 2
      %s50 = sadd.s32 %s43, 1
      %s52 = sadd.s32 %s51, 1
      %p55 = scmp.eq.s32.totalorder %s43, 1
      %p56 = scmp.ne.s32.totalorder %s51, %s53
      %p57 = scmp.eq.s32.totalorder %s43, 0
      %p58 = por %p56, %p57
      %p59 = scmp.ne.s32.totalorder %s51, %s53
      %p60 = scmp.eq.s32.totalorder %s48, 1
      %p61 = por %p59, %p60
      %p62 = scmp.ne.s32.totalorder %s53, %s54
      %p63 = scmp.eq.s32.totalorder %s48, 0
      %p64 = por %p62, %p63
      %p65 = scmp.ne.s32.totalorder %s53, %s54
      %p66 = scmp.eq.s32.totalorder %s49, 1
      %p67 = por %p65, %p66
      %p69 = scmp.ne.s32.totalorder %s54, %s68
      %p70 = scmp.eq.s32.totalorder %s49, 0
      %p71 = por %p69, %p70
      %s72 = ssub.s32 %s43, %s50
      %p73 = scmp.eq.s32.totalorder %s72, 0
      %s75 = sadd.s32 %s74, 1
      %s76 = scalar_select %p73, %s74, %s75
      %p79 = pneg %p73
      %p80 = scmp.eq.s32.totalorder %s43, 1
      %p81 = por %p79, %p80
      %p82 = scmp.ne.s32.totalorder %s74, %s77
      %p83 = scmp.eq.s32.totalorder %s43, 0
      %p84 = por %p82, %p83
      %p85 = scmp.ne.s32.totalorder %s74, %s77
      %p86 = scmp.eq.s32.totalorder %s48, 1
      %p87 = por %p85, %p86
      %p88 = scmp.ne.s32.totalorder %s77, %s78
      %p89 = scmp.eq.s32.totalorder %s48, 0
      %p90 = por %p88, %p89
      %p91 = scmp.ne.s32.totalorder %s77, %s78
      %p92 = scmp.eq.s32.totalorder %s49, 1
      %p93 = por %p91, %p92
      %p95 = scmp.ne.s32.totalorder %s78, %s94
      %p96 = scmp.eq.s32.totalorder %s49, 0
      %p97 = por %p95, %p96
      %s98 = ssub.s32 %s43, %s50
      %p99 = scmp.eq.s32.totalorder %s98, 0
      %s101 = sadd.s32 %s100, 1
      %s102 = scalar_select %p99, %s100, %s101
      %p105 = pneg %p99
      %p106 = scmp.eq.s32.totalorder %s43, 1
      %p107 = por %p105, %p106
      %p108 = scmp.ne.s32.totalorder %s100, %s103
      %p109 = scmp.eq.s32.totalorder %s43, 0
      %p110 = por %p108, %p109
      %p111 = scmp.ne.s32.totalorder %s100, %s103
      %p112 = scmp.eq.s32.totalorder %s48, 1
      %p113 = por %p111, %p112
      %p114 = scmp.ne.s32.totalorder %s103, %s104
      %p115 = scmp.eq.s32.totalorder %s48, 0
      %p116 = por %p114, %p115
      %p117 = scmp.ne.s32.totalorder %s103, %s104
      %p118 = scmp.eq.s32.totalorder %s49, 1
      %p119 = por %p117, %p118
      %p121 = scmp.ne.s32.totalorder %s104, %s120
      %p122 = scmp.eq.s32.totalorder %s49, 0
      %p123 = por %p121, %p122
      %s124 = ssub.s32 %s43, %s50
      %p125 = scmp.eq.s32.totalorder %s124, 0
      %s127 = sadd.s32 %s126, 1
      %s128 = scalar_select %p125, %s126, %s127
      %p131 = pneg %p125
      %p132 = scmp.eq.s32.totalorder %s43, 1
      %p133 = por %p131, %p132
      %p134 = scmp.ne.s32.totalorder %s126, %s129
      %p135 = scmp.eq.s32.totalorder %s43, 0
      %p136 = por %p134, %p135
      %p137 = scmp.ne.s32.totalorder %s126, %s129
      %p138 = scmp.eq.s32.totalorder %s48, 1
      %p139 = por %p137, %p138
      %p140 = scmp.ne.s32.totalorder %s129, %s130
      %p141 = scmp.eq.s32.totalorder %s48, 0
      %p142 = por %p140, %p141
      %p143 = scmp.ne.s32.totalorder %s129, %s130
      %p144 = scmp.eq.s32.totalorder %s49, 1
      %p145 = por %p143, %p144
      %p147 = scmp.ne.s32.totalorder %s130, %s146
      %p148 = scmp.eq.s32.totalorder %s49, 0
      %p149 = por %p147, %p148
      %s150 = ssub.s32 %s43, %s50
      %p151 = scmp.eq.s32.totalorder %s150, 0
      %s153 = sadd.s32 %s152, 1
      %s154 = scalar_select %p151, %s152, %s153
      %p157 = pneg %p151
      %p158 = scmp.eq.s32.totalorder %s43, 1
      %p159 = por %p157, %p158
      %p160 = scmp.ne.s32.totalorder %s152, %s155
      %p161 = scmp.eq.s32.totalorder %s43, 0
      %p162 = por %p160, %p161
      %p163 = scmp.ne.s32.totalorder %s152, %s155
      %p164 = scmp.eq.s32.totalorder %s48, 1
      %p165 = por %p163, %p164
      %p166 = scmp.ne.s32.totalorder %s155, %s156
      %p167 = scmp.eq.s32.totalorder %s48, 0
      %p168 = por %p166, %p167
      %p169 = scmp.ne.s32.totalorder %s155, %s156
      %p170 = scmp.eq.s32.totalorder %s49, 1
      %p171 = por %p169, %p170
      %p173 = scmp.ne.s32.totalorder %s156, %s172
      %p174 = scmp.eq.s32.totalorder %s49, 0
      %p175 = por %p173, %p174
      %s177 = sadd.s32 %s176, 1
      %p180 = scmp.eq.s32.totalorder %s43, 1
      %p181 = scmp.ne.s32.totalorder %s176, %s178
      %p182 = scmp.eq.s32.totalorder %s43, 0
      %p183 = por %p181, %p182
      %p184 = scmp.ne.s32.totalorder %s176, %s178
      %p185 = scmp.eq.s32.totalorder %s48, 1
      %p186 = por %p184, %p185
      %p187 = scmp.ne.s32.totalorder %s178, %s179
      %p188 = scmp.eq.s32.totalorder %s48, 0
      %p189 = por %p187, %p188
      %p190 = scmp.ne.s32.totalorder %s178, %s179
      %p191 = scmp.eq.s32.totalorder %s49, 1
      %p192 = por %p190, %p191
      %p194 = scmp.ne.s32.totalorder %s179, %s193
      %p195 = scmp.eq.s32.totalorder %s49, 0
      %p196 = por %p194, %p195
      %s198 = sadd.s32 %s197, 1
      %p201 = scmp.eq.s32.totalorder %s43, 1
      %p202 = scmp.ne.s32.totalorder %s197, %s199
      %p203 = scmp.eq.s32.totalorder %s43, 0
      %p204 = por %p202, %p203
      %p205 = scmp.ne.s32.totalorder %s197, %s199
      %p206 = scmp.eq.s32.totalorder %s48, 1
      %p207 = por %p205, %p206
      %p208 = scmp.ne.s32.totalorder %s199, %s200
      %p209 = scmp.eq.s32.totalorder %s48, 0
      %p210 = por %p208, %p209
      %p211 = scmp.ne.s32.totalorder %s199, %s200
      %p212 = scmp.eq.s32.totalorder %s49, 1
      %p213 = por %p211, %p212
      %p215 = scmp.ne.s32.totalorder %s200, %s214
      %p216 = scmp.eq.s32.totalorder %s49, 0
      %p217 = por %p215, %p216
      %s219 = sadd.s32 %s218, 1
      %p222 = scmp.eq.s32.totalorder %s43, 1
      %p223 = scmp.ne.s32.totalorder %s218, %s220
      %p224 = scmp.eq.s32.totalorder %s43, 0
      %p225 = por %p223, %p224
      %p226 = scmp.ne.s32.totalorder %s218, %s220
      %p227 = scmp.eq.s32.totalorder %s48, 1
      %p228 = por %p226, %p227
      %p229 = scmp.ne.s32.totalorder %s220, %s221
      %p230 = scmp.eq.s32.totalorder %s48, 0
      %p231 = por %p229, %p230
      %p232 = scmp.ne.s32.totalorder %s220, %s221
      %p233 = scmp.eq.s32.totalorder %s49, 1
      %p234 = por %p232, %p233
      %p236 = scmp.ne.s32.totalorder %s221, %s235
      %p237 = scmp.eq.s32.totalorder %s49, 0
      %p238 = por %p236, %p237
      %s240 = sadd.s32 %s239, 1
      %p243 = scmp.eq.s32.totalorder %s43, 1
      %p244 = scmp.ne.s32.totalorder %s239, %s241
      %p245 = scmp.eq.s32.totalorder %s43, 0
      %p246 = por %p244, %p245
      %p247 = scmp.ne.s32.totalorder %s239, %s241
      %p248 = scmp.eq.s32.totalorder %s48, 1
      %p249 = por %p247, %p248
      %p250 = scmp.ne.s32.totalorder %s241, %s242
      %p251 = scmp.eq.s32.totalorder %s48, 0
      %p252 = por %p250, %p251
      %p253 = scmp.ne.s32.totalorder %s241, %s242
      %p254 = scmp.eq.s32.totalorder %s49, 1
      %p255 = por %p253, %p254
      %p257 = scmp.ne.s32.totalorder %s242, %s256
      %p258 = scmp.eq.s32.totalorder %s49, 0
      %p259 = por %p257, %p258
      %s261 = sadd.s32 %s260, 1
      %p264 = scmp.eq.s32.totalorder %s43, 1
      %p265 = scmp.ne.s32.totalorder %s260, %s262
      %p266 = scmp.eq.s32.totalorder %s43, 0
      %p267 = por %p265, %p266
      %p268 = scmp.ne.s32.totalorder %s260, %s262
      %p269 = scmp.eq.s32.totalorder %s48, 1
      %p270 = por %p268, %p269
      %p271 = scmp.ne.s32.totalorder %s262, %s263
      %p272 = scmp.eq.s32.totalorder %s48, 0
      %p273 = por %p271, %p272
      %p274 = scmp.ne.s32.totalorder %s262, %s263
      %p275 = scmp.eq.s32.totalorder %s49, 1
      %p276 = por %p274, %p275
      %p278 = scmp.ne.s32.totalorder %s263, %s277
      %p279 = scmp.eq.s32.totalorder %s49, 0
      %p280 = por %p278, %p279
      %s282 = sadd.s32 %s281, 1
      %p285 = scmp.eq.s32.totalorder %s43, 1
      %p286 = scmp.ne.s32.totalorder %s281, %s283
      %p287 = scmp.eq.s32.totalorder %s43, 0
      %p288 = por %p286, %p287
      %p289 = scmp.ne.s32.totalorder %s281, %s283
      %p290 = scmp.eq.s32.totalorder %s48, 1
      %p291 = por %p289, %p290
      %p292 = scmp.ne.s32.totalorder %s283, %s284
      %p293 = scmp.eq.s32.totalorder %s48, 0
      %p294 = por %p292, %p293
      %p295 = scmp.ne.s32.totalorder %s283, %s284
      %p296 = scmp.eq.s32.totalorder %s49, 1
      %p297 = por %p295, %p296
      %p299 = scmp.ne.s32.totalorder %s284, %s298
      %p300 = scmp.eq.s32.totalorder %s49, 0
      %p301 = por %p299, %p300
      %s303 = sadd.s32 %s302, 1
      %p306 = scmp.eq.s32.totalorder %s43, 1
      %p307 = scmp.ne.s32.totalorder %s302, %s304
      %p308 = scmp.eq.s32.totalorder %s43, 0
      %p309 = por %p307, %p308
      %p310 = scmp.ne.s32.totalorder %s302, %s304
      %p311 = scmp.eq.s32.totalorder %s48, 1
      %p312 = por %p310, %p311
      %p313 = scmp.ne.s32.totalorder %s304, %s305
      %p314 = scmp.eq.s32.totalorder %s48, 0
      %p315 = por %p313, %p314
      %p316 = scmp.ne.s32.totalorder %s304, %s305
      %p317 = scmp.eq.s32.totalorder %s49, 1
      %p318 = por %p316, %p317
      %p320 = scmp.ne.s32.totalorder %s305, %s319
      %p321 = scmp.eq.s32.totalorder %s49, 0
      %p322 = por %p320, %p321
      %s324 = sadd.s32 %s323, 1
      %p327 = scmp.eq.s32.totalorder %s43, 1
      %p328 = scmp.ne.s32.totalorder %s323, %s325
      %p329 = scmp.eq.s32.totalorder %s43, 0
      %p330 = por %p328, %p329
      %p331 = scmp.ne.s32.totalorder %s323, %s325
      %p332 = scmp.eq.s32.totalorder %s48, 1
      %p333 = por %p331, %p332
      %p334 = scmp.ne.s32.totalorder %s325, %s326
      %p335 = scmp.eq.s32.totalorder %s48, 0
      %p336 = por %p334, %p335
      %p337 = scmp.ne.s32.totalorder %s325, %s326
      %p338 = scmp.eq.s32.totalorder %s49, 1
      %p339 = por %p337, %p338
      %p341 = scmp.ne.s32.totalorder %s326, %s340
      %p342 = scmp.eq.s32.totalorder %s49, 0
      %p343 = por %p341, %p342
      %s345 = sadd.s32 %s344, 1
      %p348 = scmp.eq.s32.totalorder %s43, 1
      %p349 = scmp.ne.s32.totalorder %s344, %s346
      %p350 = scmp.eq.s32.totalorder %s43, 0
      %p351 = por %p349, %p350
      %p352 = scmp.ne.s32.totalorder %s344, %s346
      %p353 = scmp.eq.s32.totalorder %s48, 1
      %p354 = por %p352, %p353
      %p355 = scmp.ne.s32.totalorder %s346, %s347
      %p356 = scmp.eq.s32.totalorder %s48, 0
      %p357 = por %p355, %p356
      %p358 = scmp.ne.s32.totalorder %s346, %s347
      %p359 = scmp.eq.s32.totalorder %s49, 1
      %p360 = por %p358, %p359
      %p362 = scmp.ne.s32.totalorder %s347, %s361
      %p363 = scmp.eq.s32.totalorder %s49, 0
      %p364 = por %p362, %p363
      %s366 = sadd.s32 %s365, 1
      %p369 = scmp.eq.s32.totalorder %s43, 1
      %p370 = scmp.ne.s32.totalorder %s365, %s367
      %p371 = scmp.eq.s32.totalorder %s43, 0
      %p372 = por %p370, %p371
      %p373 = scmp.ne.s32.totalorder %s365, %s367
      %p374 = scmp.eq.s32.totalorder %s48, 1
      %p375 = por %p373, %p374
      %p376 = scmp.ne.s32.totalorder %s367, %s368
      %p377 = scmp.eq.s32.totalorder %s48, 0
      %p378 = por %p376, %p377
      %p379 = scmp.ne.s32.totalorder %s367, %s368
      %p380 = scmp.eq.s32.totalorder %s49, 1
      %p381 = por %p379, %p380
      %p383 = scmp.ne.s32.totalorder %s368, %s382
      %p384 = scmp.eq.s32.totalorder %s49, 0
      %p385 = por %p383, %p384
      %s387 = sadd.s32 %s386, 1
      %p390 = scmp.eq.s32.totalorder %s43, 1
      %p391 = scmp.ne.s32.totalorder %s386, %s388
      %p392 = scmp.eq.s32.totalorder %s43, 0
      %p393 = por %p391, %p392
      %p394 = scmp.ne.s32.totalorder %s386, %s388
      %p395 = scmp.eq.s32.totalorder %s48, 1
      %p396 = por %p394, %p395
      %p397 = scmp.ne.s32.totalorder %s388, %s389
      %p398 = scmp.eq.s32.totalorder %s48, 0
      %p399 = por %p397, %p398
      %p400 = scmp.ne.s32.totalorder %s388, %s389
      %p401 = scmp.eq.s32.totalorder %s49, 1
      %p402 = por %p400, %p401
      %p404 = scmp.ne.s32.totalorder %s389, %s403
      %p405 = scmp.eq.s32.totalorder %s49, 0
      %p406 = por %p404, %p405
      %s408 = sadd.s32 %s407, 1
      %p411 = scmp.eq.s32.totalorder %s43, 1
      %p412 = scmp.ne.s32.totalorder %s407, %s409
      %p413 = scmp.eq.s32.totalorder %s43, 0
      %p414 = por %p412, %p413
      %p415 = scmp.ne.s32.totalorder %s407, %s409
      %p416 = scmp.eq.s32.totalorder %s48, 1
      %p417 = por %p415, %p416
      %p418 = scmp.ne.s32.totalorder %s409, %s410
      %p419 = scmp.eq.s32.totalorder %s48, 0
      %p420 = por %p418, %p419
      %p421 = scmp.ne.s32.totalorder %s409, %s410
      %p422 = scmp.eq.s32.totalorder %s49, 1
      %p423 = por %p421, %p422
      %p425 = scmp.ne.s32.totalorder %s410, %s424
      %p426 = scmp.eq.s32.totalorder %s49, 0
      %p427 = por %p425, %p426
      %s429 = sadd.s32 %s428, 1
      %p432 = scmp.eq.s32.totalorder %s43, 1
      %p433 = scmp.ne.s32.totalorder %s428, %s430
      %p434 = scmp.eq.s32.totalorder %s43, 0
      %p435 = por %p433, %p434
      %p436 = scmp.ne.s32.totalorder %s428, %s430
      %p437 = scmp.eq.s32.totalorder %s48, 1
      %p438 = por %p436, %p437
      %p439 = scmp.ne.s32.totalorder %s430, %s431
      %p440 = scmp.eq.s32.totalorder %s48, 0
      %p441 = por %p439, %p440
      %p442 = scmp.ne.s32.totalorder %s430, %s431
      %p443 = scmp.eq.s32.totalorder %s49, 1
      %p444 = por %p442, %p443
      %p446 = scmp.ne.s32.totalorder %s431, %s445
      %p447 = scmp.eq.s32.totalorder %s49, 0
      %p448 = por %p446, %p447
      %s450 = sadd.s32 %s449, 1
      %p453 = scmp.eq.s32.totalorder %s43, 1
      %p454 = scmp.ne.s32.totalorder %s449, %s451
      %p455 = scmp.eq.s32.totalorder %s43, 0
      %p456 = por %p454, %p455
      %p457 = scmp.ne.s32.totalorder %s449, %s451
      %p458 = scmp.eq.s32.totalorder %s48, 1
      %p459 = por %p457, %p458
      %p460 = scmp.ne.s32.totalorder %s451, %s452
      %p461 = scmp.eq.s32.totalorder %s48, 0
      %p462 = por %p460, %p461
      %p463 = scmp.ne.s32.totalorder %s451, %s452
      %p464 = scmp.eq.s32.totalorder %s49, 1
      %p465 = por %p463, %p464
      %p467 = scmp.ne.s32.totalorder %s452, %s466
      %p468 = scmp.eq.s32.totalorder %s49, 0
      %p469 = por %p467, %p468
      %s471 = sadd.s32 %s470, 1
      %p474 = scmp.eq.s32.totalorder %s43, 1
      %p475 = scmp.ne.s32.totalorder %s470, %s472
      %p476 = scmp.eq.s32.totalorder %s43, 0
      %p477 = por %p475, %p476
      %p478 = scmp.ne.s32.totalorder %s470, %s472
      %p479 = scmp.eq.s32.totalorder %s48, 1
      %p480 = por %p478, %p479
      %p481 = scmp.ne.s32.totalorder %s472, %s473
      %p482 = scmp.eq.s32.totalorder %s48, 0
      %p483 = por %p481, %p482
      %p484 = scmp.ne.s32.totalorder %s472, %s473
      %p485 = scmp.eq.s32.totalorder %s49, 1
      %p486 = por %p484, %p485
      %p488 = scmp.ne.s32.totalorder %s473, %s487
      %p489 = scmp.eq.s32.totalorder %s49, 0
      %p490 = por %p488, %p489
      %s492 = sadd.s32 %s491, 1
      %p495 = scmp.eq.s32.totalorder %s43, 1
      %p496 = scmp.ne.s32.totalorder %s491, %s493
      %p497 = scmp.eq.s32.totalorder %s43, 0
      %p498 = por %p496, %p497
      %p499 = scmp.ne.s32.totalorder %s491, %s493
      %p500 = scmp.eq.s32.totalorder %s48, 1
      %p501 = por %p499, %p500
      %p502 = scmp.ne.s32.totalorder %s493, %s494
      %p503 = scmp.eq.s32.totalorder %s48, 0
      %p504 = por %p502, %p503
      %p505 = scmp.ne.s32.totalorder %s493, %s494
      %p506 = scmp.eq.s32.totalorder %s49, 1
      %p507 = por %p505, %p506
      %p509 = scmp.ne.s32.totalorder %s494, %s508
      %p510 = scmp.eq.s32.totalorder %s49, 0
      %p511 = por %p509, %p510
      %s513 = sadd.s32 %s512, 1
      %p516 = scmp.eq.s32.totalorder %s43, 1
      %p517 = scmp.ne.s32.totalorder %s512, %s514
      %p518 = scmp.eq.s32.totalorder %s43, 0
      %p519 = por %p517, %p518
      %p520 = scmp.ne.s32.totalorder %s512, %s514
      %p521 = scmp.eq.s32.totalorder %s48, 1
      %p522 = por %p520, %p521
      %p523 = scmp.ne.s32.totalorder %s514, %s515
      %p524 = scmp.eq.s32.totalorder %s48, 0
      %p525 = por %p523, %p524
      %p526 = scmp.ne.s32.totalorder %s514, %s515
      %p527 = scmp.eq.s32.totalorder %s49, 1
      %p528 = por %p526, %p527
      %p530 = scmp.ne.s32.totalorder %s515, %s529
      %p531 = scmp.eq.s32.totalorder %s49, 0
      %p532 = por %p530, %p531
      %s533 = ssub.s32 %s43, %s50
      %p534 = scmp.eq.s32.totalorder %s533, 0
      %s536 = sadd.s32 %s535, 1
      %s537 = scalar_select %p534, %s535, %s536
      %p540 = pneg %p534
      %p541 = scmp.eq.s32.totalorder %s43, 1
      %p542 = por %p540, %p541
      %p543 = scmp.ne.s32.totalorder %s535, %s538
      %p544 = scmp.eq.s32.totalorder %s43, 0
      %p545 = por %p543, %p544
      %p546 = scmp.ne.s32.totalorder %s535, %s538
      %p547 = scmp.eq.s32.totalorder %s48, 1
      %p548 = por %p546, %p547
      %p549 = scmp.ne.s32.totalorder %s538, %s539
      %p550 = scmp.eq.s32.totalorder %s48, 0
      %p551 = por %p549, %p550
      %p552 = scmp.ne.s32.totalorder %s538, %s539
      %p553 = scmp.eq.s32.totalorder %s49, 1
      %p554 = por %p552, %p553
      %p556 = scmp.ne.s32.totalorder %s539, %s555
      %p557 = scmp.eq.s32.totalorder %s49, 0
      %p558 = por %p556, %p557
      %p559 = scmp.le.s32.totalorder 1, %s43
      %p560 = scmp.lt.s32.totalorder %s43, 3
      %p561 = pnand %p559, %p560
      %p562 = pneg %p561
      // Predicated region
      $region9: #{tpu_custom_call.1} parent=5 // pred_check
        _
      $region10: #{tpu_custom_call.1} parent=5 // pred_check_branch
        %564 = sbr.rel (%p561) target = $region12
      $region11: #{tpu_custom_call.1} parent=5 // pred_region
        %s565 = ssub.s32 %s43, 1
        // Predicated region
        $region13: #{tpu_custom_call.1} parent=11 // pred_check
          %p566 = pneg %p64
        $region14: #{tpu_custom_call.1} parent=11 // pred_check_branch
          %568 = sbr.rel (%p566) target = $region16
        $region15: #{tpu_custom_call.1} parent=11 // pred_region
          %s570 = ssub.s32 128, 128
          %571 = vsyncadd [#allocation3], %s570
          %s573 = sshll.u32 [#allocation2], 4
          %s574 = int_to_ptr.vmem [resolvable:$true] %s573
          %576 = dma.hbm_to_vmem [thread:$0]  %s0, 128, %s574, [#allocation3]
        $region16: #{tpu_custom_call.1} parent=11 // pred_fallthru
          _
        // Predicated region
        $region17: #{tpu_custom_call.1} parent=11 // pred_check
          %p577 = pneg %p189
        $region18: #{tpu_custom_call.1} parent=11 // pred_check_branch
          %579 = sbr.rel (%p577) target = $region20
        $region19: #{tpu_custom_call.1} parent=11 // pred_region
          %s581 = ssub.s32 16, 16
          %582 = vsyncadd [#allocation12], %s581
          %s584 = sshll.u32 [#allocation11], 4
          %s585 = int_to_ptr.vmem [resolvable:$true] %s584
          %587 = dma.hbm_to_vmem [thread:$0]  %s5, 16, %s585, [#allocation12]
        $region20: #{tpu_custom_call.1} parent=11 // pred_fallthru
          _
        // Predicated region
        $region21: #{tpu_custom_call.1} parent=11 // pred_check
          %p588 = pneg %p210
        $region22: #{tpu_custom_call.1} parent=11 // pred_check_branch
          %590 = sbr.rel (%p588) target = $region24
        $region23: #{tpu_custom_call.1} parent=11 // pred_region
          %s592 = ssub.s32 16, 16
          %593 = vsyncadd [#allocation12], %s592
          %s595 = sshll.u32 [#allocation13], 4
          %s596 = int_to_ptr.vmem [resolvable:$true] %s595
          %598 = dma.hbm_to_vmem [thread:$0]  %s6, 16, %s596, [#allocation12]
        $region24: #{tpu_custom_call.1} parent=11 // pred_fallthru
          _
        // Predicated region
        $region25: #{tpu_custom_call.1} parent=11 // pred_check
          %p599 = pneg %p231
        $region26: #{tpu_custom_call.1} parent=11 // pred_check_branch
          %601 = sbr.rel (%p599) target = $region28
        $region27: #{tpu_custom_call.1} parent=11 // pred_region
          _
        $region28: #{tpu_custom_call.1} parent=11 // pred_fallthru
          _
        // Predicated region
        $region29: #{tpu_custom_call.1} parent=11 // pred_check
          %p602 = pneg %p252
        $region30: #{tpu_custom_call.1} parent=11 // pred_check_branch
          %604 = sbr.rel (%p602) target = $region32
        $region31: #{tpu_custom_call.1} parent=11 // pred_region
          _
        $region32: #{tpu_custom_call.1} parent=11 // pred_fallthru
          _
        // Predicated region
        $region33: #{tpu_custom_call.1} parent=11 // pred_check
          %p605 = pneg %p273
        $region34: #{tpu_custom_call.1} parent=11 // pred_check_branch
          %607 = sbr.rel (%p605) target = $region36
        $region35: #{tpu_custom_call.1} parent=11 // pred_region
          %s609 = ssub.s32 16, 16
          %610 = vsyncadd [#allocation15], %s609
          %s612 = sshll.u32 [#allocation14], 4
          %s613 = int_to_ptr.vmem [resolvable:$true] %s612
          %615 = dma.hbm_to_vmem [thread:$0]  %s9, 16, %s613, [#allocation15]
        $region36: #{tpu_custom_call.1} parent=11 // pred_fallthru
          _
        // Predicated region
        $region37: #{tpu_custom_call.1} parent=11 // pred_check
          %p616 = pneg %p294
        $region38: #{tpu_custom_call.1} parent=11 // pred_check_branch
          %618 = sbr.rel (%p616) target = $region40
        $region39: #{tpu_custom_call.1} parent=11 // pred_region
          %s620 = ssub.s32 16, 16
          %621 = vsyncadd [#allocation15], %s620
          %s623 = sshll.u32 [#allocation16], 4
          %s624 = int_to_ptr.vmem [resolvable:$true] %s623
          %626 = dma.hbm_to_vmem [thread:$0]  %s10, 16, %s624, [#allocation15]
        $region40: #{tpu_custom_call.1} parent=11 // pred_fallthru
          _
        // Predicated region
        $region41: #{tpu_custom_call.1} parent=11 // pred_check
          %p627 = pneg %p315
        $region42: #{tpu_custom_call.1} parent=11 // pred_check_branch
          %629 = sbr.rel (%p627) target = $region44
        $region43: #{tpu_custom_call.1} parent=11 // pred_region
          _
        $region44: #{tpu_custom_call.1} parent=11 // pred_fallthru
          _
        // Predicated region
        $region45: #{tpu_custom_call.1} parent=11 // pred_check
          %p630 = pneg %p336
        $region46: #{tpu_custom_call.1} parent=11 // pred_check_branch
          %632 = sbr.rel (%p630) target = $region48
        $region47: #{tpu_custom_call.1} parent=11 // pred_region
          _
        $region48: #{tpu_custom_call.1} parent=11 // pred_fallthru
          _
        // Predicated region
        $region49: #{tpu_custom_call.1} parent=11 // pred_check
          %p633 = pneg %p357
        $region50: #{tpu_custom_call.1} parent=11 // pred_check_branch
          %635 = sbr.rel (%p633) target = $region52
        $region51: #{tpu_custom_call.1} parent=11 // pred_region
          %s637 = ssub.s32 512, 512
          %638 = vsyncadd [#allocation18], %s637
          %s639 = sshll.u32 [#allocation17], 4
          %s640 = int_to_ptr.vmem [resolvable:$true] %s639
          %645 = dma.hbm_to_vmem [thread:$0]  %s13, 512, %s640, [#allocation18], 128, 128, 8
        $region52: #{tpu_custom_call.1} parent=11 // pred_fallthru
          _
        // Predicated region
        $region53: #{tpu_custom_call.1} parent=11 // pred_check
          %p646 = pneg %p378
        $region54: #{tpu_custom_call.1} parent=11 // pred_check_branch
          %648 = sbr.rel (%p646) target = $region56
        $region55: #{tpu_custom_call.1} parent=11 // pred_region
          %s650 = ssub.s32 16, 16
          %651 = vsyncadd [#allocation18], %s650
          %s653 = sshll.u32 [#allocation19], 4
          %s654 = int_to_ptr.vmem [resolvable:$true] %s653
          %656 = dma.hbm_to_vmem [thread:$0]  %s14, 16, %s654, [#allocation18]
        $region56: #{tpu_custom_call.1} parent=11 // pred_fallthru
          _
        // Predicated region
        $region57: #{tpu_custom_call.1} parent=11 // pred_check
          %p657 = pneg %p399
        $region58: #{tpu_custom_call.1} parent=11 // pred_check_branch
          %659 = sbr.rel (%p657) target = $region60
        $region59: #{tpu_custom_call.1} parent=11 // pred_region
          %s661 = ssub.s32 16, 16
          %662 = vsyncadd [#allocation21], %s661
          %s664 = sshll.u32 [#allocation20], 4
          %s665 = int_to_ptr.vmem [resolvable:$true] %s664
          %667 = dma.hbm_to_vmem [thread:$0]  %s15, 16, %s665, [#allocation21]
        $region60: #{tpu_custom_call.1} parent=11 // pred_fallthru
          _
        // Predicated region
        $region61: #{tpu_custom_call.1} parent=11 // pred_check
          %p668 = pneg %p420
        $region62: #{tpu_custom_call.1} parent=11 // pred_check_branch
          %670 = sbr.rel (%p668) target = $region64
        $region63: #{tpu_custom_call.1} parent=11 // pred_region
          %s672 = ssub.s32 512, 512
          %673 = vsyncadd [#allocation21], %s672
          %s674 = sshll.u32 [#allocation22], 4
          %s675 = int_to_ptr.vmem [resolvable:$true] %s674
          %680 = dma.hbm_to_vmem [thread:$0]  %s16, 512, %s675, [#allocation21], 128, 128, 8
        $region64: #{tpu_custom_call.1} parent=11 // pred_fallthru
          _
        // Predicated region
        $region65: #{tpu_custom_call.1} parent=11 // pred_check
          %p681 = pneg %p441
        $region66: #{tpu_custom_call.1} parent=11 // pred_check_branch
          %683 = sbr.rel (%p681) target = $region68
        $region67: #{tpu_custom_call.1} parent=11 // pred_region
          %s685 = ssub.s32 16, 16
          %686 = vsyncadd [#allocation24], %s685
          %s688 = sshll.u32 [#allocation23], 4
          %s689 = int_to_ptr.vmem [resolvable:$true] %s688
          %691 = dma.hbm_to_vmem [thread:$0]  %s17, 16, %s689, [#allocation24]
        $region68: #{tpu_custom_call.1} parent=11 // pred_fallthru
          _
        // Predicated region
        $region69: #{tpu_custom_call.1} parent=11 // pred_check
          %p692 = pneg %p462
        $region70: #{tpu_custom_call.1} parent=11 // pred_check_branch
          %694 = sbr.rel (%p692) target = $region72
        $region71: #{tpu_custom_call.1} parent=11 // pred_region
          _
        $region72: #{tpu_custom_call.1} parent=11 // pred_fallthru
          _
        // Predicated region
        $region73: #{tpu_custom_call.1} parent=11 // pred_check
          %p695 = pneg %p483
        $region74: #{tpu_custom_call.1} parent=11 // pred_check_branch
          %697 = sbr.rel (%p695) target = $region76
        $region75: #{tpu_custom_call.1} parent=11 // pred_region
          _
        $region76: #{tpu_custom_call.1} parent=11 // pred_fallthru
          _
        // Predicated region
        $region77: #{tpu_custom_call.1} parent=11 // pred_check
          %p698 = pneg %p504
        $region78: #{tpu_custom_call.1} parent=11 // pred_check_branch
          %700 = sbr.rel (%p698) target = $region80
        $region79: #{tpu_custom_call.1} parent=11 // pred_region
          _
        $region80: #{tpu_custom_call.1} parent=11 // pred_fallthru
          _
        // Predicated region
        $region81: #{tpu_custom_call.1} parent=11 // pred_check
          %p701 = pneg %p525
        $region82: #{tpu_custom_call.1} parent=11 // pred_check_branch
          %703 = sbr.rel (%p701) target = $region84
        $region83: #{tpu_custom_call.1} parent=11 // pred_region
          _
        $region84: #{tpu_custom_call.1} parent=11 // pred_fallthru
          _
      $region12: #{tpu_custom_call.1} parent=5 // pred_fallthru
        _
      %p704 = scmp.lt.s32.totalorder %s43, 2
      // Predicated region
      $region85: #{tpu_custom_call.1} parent=5 // pred_check
        %p705 = pneg %p704
      $region86: #{tpu_custom_call.1} parent=5 // pred_check_branch
        %707 = sbr.rel (%p705) target = $region88
      $region87: #{tpu_custom_call.1} parent=5 // pred_region
        // Predicated region
        $region89: #{tpu_custom_call.1} parent=87 // pred_check
          %p708 = pneg %p84
        $region90: #{tpu_custom_call.1} parent=87 // pred_check_branch
          %710 = sbr.rel (%p708) target = $region92
        $region91: #{tpu_custom_call.1} parent=87 // pred_region
          %s711 = sand.u32 %s43, 1
          %s712 = scalar_lea.sflag [#allocation6], %s711
          %s713 = sand.u32 %s74, 1
          %s714 = smul.addr %s713, 8
          %s715 = scalar_lea.vmem [#allocation5], %s714
          %s717 = ssub.s32 128, 128
          %718 = vsyncadd %s712, %s717
          %s719 = smul.addr %s43, 128
          %s720 = scalar_lea.hbm %s1, %s719
          %s722 = sshll.u32 %s715, 4
          %s723 = int_to_ptr.vmem [resolvable:$true] %s722
          %725 = dma.hbm_to_vmem [thread:$0]  %s720, 128, %s723, %s712
        $region92: #{tpu_custom_call.1} parent=87 // pred_fallthru
          _
        // Predicated region
        $region93: #{tpu_custom_call.1} parent=87 // pred_check
          %p726 = pneg %p110
        $region94: #{tpu_custom_call.1} parent=87 // pred_check_branch
          %728 = sbr.rel (%p726) target = $region96
        $region95: #{tpu_custom_call.1} parent=87 // pred_region
          %s729 = sand.u32 %s43, 1
          %s730 = scalar_lea.sflag [#allocation6], %s729
          %s731 = sand.u32 %s100, 1
          %s732 = smul.addr %s731, 8
          %s733 = scalar_lea.vmem [#allocation7], %s732
          %s735 = ssub.s32 128, 128
          %736 = vsyncadd %s730, %s735
          %s737 = smul.addr %s43, 128
          %s738 = scalar_lea.hbm %s2, %s737
          %s740 = sshll.u32 %s733, 4
          %s741 = int_to_ptr.vmem [resolvable:$true] %s740
          %743 = dma.hbm_to_vmem [thread:$0]  %s738, 128, %s741, %s730
        $region96: #{tpu_custom_call.1} parent=87 // pred_fallthru
          _
        // Predicated region
        $region97: #{tpu_custom_call.1} parent=87 // pred_check
          %p744 = pneg %p136
        $region98: #{tpu_custom_call.1} parent=87 // pred_check_branch
          %746 = sbr.rel (%p744) target = $region100
        $region99: #{tpu_custom_call.1} parent=87 // pred_region
          %s747 = sand.u32 %s43, 1
          %s748 = scalar_lea.sflag [#allocation9], %s747
          %s749 = sand.u32 %s126, 1
          %s750 = smul.addr %s749, 8
          %s751 = scalar_lea.vmem [#allocation8], %s750
          %s753 = ssub.s32 128, 128
          %754 = vsyncadd %s748, %s753
          %s755 = smul.addr %s43, 128
          %s756 = scalar_lea.hbm %s3, %s755
          %s758 = sshll.u32 %s751, 4
          %s759 = int_to_ptr.vmem [resolvable:$true] %s758
          %761 = dma.hbm_to_vmem [thread:$0]  %s756, 128, %s759, %s748
        $region100: #{tpu_custom_call.1} parent=87 // pred_fallthru
          _
        // Predicated region
        $region101: #{tpu_custom_call.1} parent=87 // pred_check
          %p762 = pneg %p162
        $region102: #{tpu_custom_call.1} parent=87 // pred_check_branch
          %764 = sbr.rel (%p762) target = $region104
        $region103: #{tpu_custom_call.1} parent=87 // pred_region
          %s765 = sand.u32 %s43, 1
          %s766 = scalar_lea.sflag [#allocation9], %s765
          %s767 = sand.u32 %s152, 1
          %s768 = scalar_lea.vmem [#allocation10], %s767
          %s770 = ssub.s32 16, 16
          %771 = vsyncadd %s766, %s770
          %s772 = smul.addr %s43, 16
          %s773 = scalar_lea.hbm %s4, %s772
          %s775 = sshll.u32 %s768, 4
          %s776 = int_to_ptr.vmem [resolvable:$true] %s775
          %778 = dma.hbm_to_vmem [thread:$0]  %s773, 16, %s776, %s766
        $region104: #{tpu_custom_call.1} parent=87 // pred_fallthru
          _
      $region88: #{tpu_custom_call.1} parent=5 // pred_fallthru
        _
      %p779 = scmp.le.s32.totalorder 1, %s43
      %p780 = scmp.lt.s32.totalorder %s43, 3
      %p781 = pnand %p779, %p780
      %p782 = pneg %p781
      // Predicated region
      $region105: #{tpu_custom_call.1} parent=5 // pred_check
        _
      $region106: #{tpu_custom_call.1} parent=5 // pred_check_branch
        %784 = sbr.rel (%p781) target = $region108
      $region107: #{tpu_custom_call.1} parent=5 // pred_region
        %s785 = ssub.s32 %s43, 1
        // Predicated region
        $region109: #{tpu_custom_call.1} parent=107 // pred_check
          %p786 = pneg %p64
        $region110: #{tpu_custom_call.1} parent=107 // pred_check_branch
          %788 = sbr.rel (%p786) target = $region112
        $region111: #{tpu_custom_call.1} parent=107 // pred_region
          %789 = dma.done [#allocation3], 128
        $region112: #{tpu_custom_call.1} parent=107 // pred_fallthru
          _
        %s790 = sand.u32 %s48, 1
        %s791 = scalar_lea.sflag [#allocation6], %s790
        %s792 = sand.u32 %s77, 1
        %s793 = smul.addr %s792, 8
        %s794 = scalar_lea.vmem [#allocation5], %s793
        // Predicated region
        $region113: #{tpu_custom_call.1} parent=107 // pred_check
          %p795 = pneg %p90
        $region114: #{tpu_custom_call.1} parent=107 // pred_check_branch
          %797 = sbr.rel (%p795) target = $region116
        $region115: #{tpu_custom_call.1} parent=107 // pred_region
          %798 = dma.done %s791, 128
        $region116: #{tpu_custom_call.1} parent=107 // pred_fallthru
          _
        %s799 = sand.u32 %s48, 1
        %s800 = scalar_lea.sflag [#allocation6], %s799
        %s801 = sand.u32 %s103, 1
        %s802 = smul.addr %s801, 8
        %s803 = scalar_lea.vmem [#allocation7], %s802
        // Predicated region
        $region117: #{tpu_custom_call.1} parent=107 // pred_check
          %p804 = pneg %p116
        $region118: #{tpu_custom_call.1} parent=107 // pred_check_branch
          %806 = sbr.rel (%p804) target = $region120
        $region119: #{tpu_custom_call.1} parent=107 // pred_region
          %807 = dma.done %s800, 128
        $region120: #{tpu_custom_call.1} parent=107 // pred_fallthru
          _
        %s808 = sand.u32 %s48, 1
        %s809 = scalar_lea.sflag [#allocation9], %s808
        %s810 = sand.u32 %s129, 1
        %s811 = smul.addr %s810, 8
        %s812 = scalar_lea.vmem [#allocation8], %s811
        // Predicated region
        $region121: #{tpu_custom_call.1} parent=107 // pred_check
          %p813 = pneg %p142
        $region122: #{tpu_custom_call.1} parent=107 // pred_check_branch
          %815 = sbr.rel (%p813) target = $region124
        $region123: #{tpu_custom_call.1} parent=107 // pred_region
          %816 = dma.done %s809, 128
        $region124: #{tpu_custom_call.1} parent=107 // pred_fallthru
          _
        %s817 = sand.u32 %s48, 1
        %s818 = scalar_lea.sflag [#allocation9], %s817
        %s819 = sand.u32 %s155, 1
        %s820 = scalar_lea.vmem [#allocation10], %s819
        // Predicated region
        $region125: #{tpu_custom_call.1} parent=107 // pred_check
          %p821 = pneg %p168
        $region126: #{tpu_custom_call.1} parent=107 // pred_check_branch
          %823 = sbr.rel (%p821) target = $region128
        $region127: #{tpu_custom_call.1} parent=107 // pred_region
          %824 = dma.done %s818, 16
        $region128: #{tpu_custom_call.1} parent=107 // pred_fallthru
          _
        // Predicated region
        $region129: #{tpu_custom_call.1} parent=107 // pred_check
          %p825 = pneg %p189
        $region130: #{tpu_custom_call.1} parent=107 // pred_check_branch
          %827 = sbr.rel (%p825) target = $region132
        $region131: #{tpu_custom_call.1} parent=107 // pred_region
          %828 = dma.done [#allocation12], 16
        $region132: #{tpu_custom_call.1} parent=107 // pred_fallthru
          _
        // Predicated region
        $region133: #{tpu_custom_call.1} parent=107 // pred_check
          %p829 = pneg %p210
        $region134: #{tpu_custom_call.1} parent=107 // pred_check_branch
          %831 = sbr.rel (%p829) target = $region136
        $region135: #{tpu_custom_call.1} parent=107 // pred_region
          %832 = dma.done [#allocation12], 16
        $region136: #{tpu_custom_call.1} parent=107 // pred_fallthru
          _
        // Predicated region
        $region137: #{tpu_custom_call.1} parent=107 // pred_check
          %p833 = pneg %p273
        $region138: #{tpu_custom_call.1} parent=107 // pred_check_branch
          %835 = sbr.rel (%p833) target = $region140
        $region139: #{tpu_custom_call.1} parent=107 // pred_region
          %836 = dma.done [#allocation15], 16
        $region140: #{tpu_custom_call.1} parent=107 // pred_fallthru
          _
        // Predicated region
        $region141: #{tpu_custom_call.1} parent=107 // pred_check
          %p837 = pneg %p294
        $region142: #{tpu_custom_call.1} parent=107 // pred_check_branch
          %839 = sbr.rel (%p837) target = $region144
        $region143: #{tpu_custom_call.1} parent=107 // pred_region
          %840 = dma.done [#allocation15], 16
        $region144: #{tpu_custom_call.1} parent=107 // pred_fallthru
          _
        // Predicated region
        $region145: #{tpu_custom_call.1} parent=107 // pred_check
          %p841 = pneg %p357
        $region146: #{tpu_custom_call.1} parent=107 // pred_check_branch
          %843 = sbr.rel (%p841) target = $region148
        $region147: #{tpu_custom_call.1} parent=107 // pred_region
          %844 = dma.done [#allocation18], 512
        $region148: #{tpu_custom_call.1} parent=107 // pred_fallthru
          _
        // Predicated region
        $region149: #{tpu_custom_call.1} parent=107 // pred_check
          %p845 = pneg %p378
        $region150: #{tpu_custom_call.1} parent=107 // pred_check_branch
          %847 = sbr.rel (%p845) target = $region152
        $region151: #{tpu_custom_call.1} parent=107 // pred_region
          %848 = dma.done [#allocation18], 16
        $region152: #{tpu_custom_call.1} parent=107 // pred_fallthru
          _
        // Predicated region
        $region153: #{tpu_custom_call.1} parent=107 // pred_check
          %p849 = pneg %p399
        $region154: #{tpu_custom_call.1} parent=107 // pred_check_branch
          %851 = sbr.rel (%p849) target = $region156
        $region155: #{tpu_custom_call.1} parent=107 // pred_region
          %852 = dma.done [#allocation21], 16
        $region156: #{tpu_custom_call.1} parent=107 // pred_fallthru
          _
        // Predicated region
        $region157: #{tpu_custom_call.1} parent=107 // pred_check
          %p853 = pneg %p420
        $region158: #{tpu_custom_call.1} parent=107 // pred_check_branch
          %855 = sbr.rel (%p853) target = $region160
        $region159: #{tpu_custom_call.1} parent=107 // pred_region
          %856 = dma.done [#allocation21], 512
        $region160: #{tpu_custom_call.1} parent=107 // pred_fallthru
          _
        // Predicated region
        $region161: #{tpu_custom_call.1} parent=107 // pred_check
          %p857 = pneg %p441
        $region162: #{tpu_custom_call.1} parent=107 // pred_check_branch
          %859 = sbr.rel (%p857) target = $region164
        $region163: #{tpu_custom_call.1} parent=107 // pred_region
          %860 = dma.done [#allocation24], 16
        $region164: #{tpu_custom_call.1} parent=107 // pred_fallthru
          _
        %p861 = pneg %p64
        %p862 = pneg %p61
        %s863 = sand.u32 %s48, 1
        %s864 = scalar_lea.sflag [#allocation6], %s863
        %s865 = sand.u32 %s77, 1
        %s866 = smul.addr %s865, 8
        %s867 = scalar_lea.vmem [#allocation5], %s866
        %p868 = pneg %p90
        %p869 = pneg %p87
        %s870 = sand.u32 %s48, 1
        %s871 = scalar_lea.sflag [#allocation6], %s870
        %s872 = sand.u32 %s103, 1
        %s873 = smul.addr %s872, 8
        %s874 = scalar_lea.vmem [#allocation7], %s873
        %p875 = pneg %p116
        %p876 = pneg %p113
        %s877 = sand.u32 %s48, 1
        %s878 = scalar_lea.sflag [#allocation9], %s877
        %s879 = sand.u32 %s129, 1
        %s880 = smul.addr %s879, 8
        %s881 = scalar_lea.vmem [#allocation8], %s880
        %p882 = pneg %p142
        %p883 = pneg %p139
        %s884 = sand.u32 %s48, 1
        %s885 = scalar_lea.sflag [#allocation9], %s884
        %s886 = sand.u32 %s155, 1
        %s887 = scalar_lea.vmem [#allocation10], %s886
        %p888 = pneg %p168
        %p889 = pneg %p165
        %p890 = pneg %p189
        %p891 = pneg %p186
        %p892 = pneg %p210
        %p893 = pneg %p207
        %p894 = pneg %p231
        %p895 = pneg %p228
        %p896 = pneg %p252
        %p897 = pneg %p249
        %p898 = pneg %p273
        %p899 = pneg %p270
        %p900 = pneg %p294
        %p901 = pneg %p291
        %p902 = pneg %p315
        %p903 = pneg %p312
        %p904 = pneg %p336
        %p905 = pneg %p333
        %p906 = pneg %p357
        %p907 = pneg %p354
        %p908 = pneg %p378
        %p909 = pneg %p375
        %p910 = pneg %p399
        %p911 = pneg %p396
        %p912 = pneg %p420
        %p913 = pneg %p417
        %p914 = pneg %p441
        %p915 = pneg %p438
        %p916 = pneg %p462
        %p917 = pneg %p459
        %p918 = pneg %p483
        %p919 = pneg %p480
        %p920 = pneg %p504
        %p921 = pneg %p501
        %p922 = pneg %p525
        %p923 = pneg %p522
        %p924 = pneg %p551
        %p925 = pneg %p548
        %s926 = sand.u32 %s538, 1
        %s927 = scalar_lea.sflag [#allocation4], %s926
        %s928 = sand.u32 %s538, 1
        %s929 = smul.addr %s928, 8
        %s930 = scalar_lea.vmem [#allocation25], %s929
        %v931 = vld [vmem:[%s794] sm:$0xff]
        %v932 = vld [vmem:[#allocation2] sm:$0xff]
        %v933 = vadd.f32 %v931, %v932
        %v934 = vld [vmem:[#allocation11] sm:$0x1]
        %v935 = vld [vmem:[#allocation13] sm:$0x1]
        %vm936 = vcmask 261120
        %v937 = vsel %vm936, %v933, 0.0
        %938 = vadd.xlane.f32.xlu0 %v937
        %v939 = vpop.xlane.xlu0 %938
        %v940 = vrcp.pop 32.0
        %v941 = vmul.f32 %v939, %v940
        %v942 = vsub.f32 %v933, %v941
        %v943 = vmul.f32 %v942, %v942
        %v944 = vsel %vm936, %v943, 0.0
        %945 = vadd.xlane.f32.xlu0 %v944
        %v946 = vpop.xlane.xlu0 %945
        %v947 = vmul.f32 %v946, %v940
        %v948 = vadd.f32 %v947, 1e-06
        %v949 = vrsqrt.pop %v948
        %v950 = vmul.f32 %v942, %v949
        %v952 = vlaneseq
        %v953 = vshrl.u32 %v952, 7
        %v954 = vsub.s32 0, %v953
        %v955 = vrot.slane %v934, %v954
        %v957 = vmul.f32 %v950, %v955
        %v959 = vlaneseq
        %v960 = vshrl.u32 %v959, 7
        %v961 = vsub.s32 0, %v960
        %v962 = vrot.slane %v935, %v961
        %v964 = vadd.f32 %v957, %v962
        %v965 = vld [vmem:[%s7] sm:$0xff]
        %v966 = vld [vmem:[%s7 + $0x8] sm:$0xff]
        %v967 = vld [vmem:[%s7 + $0x10] sm:$0xff]
        %v968 = vld [vmem:[%s7 + $0x18] sm:$0xff]
        %v970 = vsel %vm936, %v964, 0
        %972 = vmatprep.subr.mxu0 0.0
        %973 = vmatpush1.msra.mxu0 %v965
        %974 = vmatprep.subr.mxu0 0.0
        %975 = vmatpush1.msra.mxu0 %v966
        %976 = vmatprep.subr.mxu0 0.0
        %977 = vmatpush1.msra.mxu0 %v967
        %978 = vmatprep.subr.mxu0 0.0
        %979 = vmatpush1.msra.mxu0 %v968
        %980 = vmatprep.subr.mxu0 0.0
        %981 = vmatpush1.msra.mxu0 0.0
        %982 = vmatprep.subr.mxu0 0.0
        %983 = vmatpush1.msra.mxu0 0.0
        %984 = vmatprep.subr.mxu0 0.0
        %985 = vmatpush1.msra.mxu0 0.0
        %986 = vmatprep.subr.mxu0 0.0
        %987 = vmatpush1.msra.mxu0 0.0
        %988 = vmatprep.subr.mxu0 0.0
        %989 = vmatpush1.msra.mxu0 0.0
        %990 = vmatprep.subr.mxu0 0.0
        %991 = vmatpush1.msra.mxu0 0.0
        %992 = vmatprep.subr.mxu0 0.0
        %993 = vmatpush1.msra.mxu0 0.0
        %994 = vmatprep.subr.mxu0 0.0
        %995 = vmatpush1.msra.mxu0 0.0
        %996 = vmatprep.subr.mxu0 0.0
        %997 = vmatpush1.msra.mxu0 0.0
        %998 = vmatprep.subr.mxu0 0.0
        %999 = vmatpush1.msra.mxu0 0.0
        %1000 = vmatprep.subr.mxu0 0.0
        %1001 = vmatpush1.msra.mxu0 0.0
        %1002 = vmatprep.subr.mxu0 0.0
        %1003 = vmatpush1.msra.mxu0 0.0
        %1004 = vmatprep.subr.mxu0 0.0
        %1005 = vmatpush1.msra.mxu0 0.0
        %1006 = vmatprep.subr.mxu0 0.0
        %1007 = vmatpush1.msra.mxu0 0.0
        %1008 = vmatprep.subr.mxu0 0.0
        %1009 = vmatpush1.msra.mxu0 0.0
        %1010 = vmatprep.subr.mxu0 0.0
        %1011 = vmatpush1.msra.mxu0 0.0
        %1012 = vmatprep.subr.mxu0 0.0
        %1013 = vmatpush1.msra.mxu0 0.0
        %1014 = vmatprep.subr.mxu0 0.0
        %1015 = vmatpush1.msra.mxu0 0.0
        %1016 = vmatprep.subr.mxu0 0.0
        %1017 = vmatpush1.msra.mxu0 0.0
        %1018 = vmatprep.subr.mxu0 0.0
        %1019 = vmatpush1.msra.mxu0 0.0
        %1020 = vmatprep.subr.mxu0 0.0
        %1021 = vmatpush1.msra.mxu0 0.0
        %1022 = vmatprep.subr.mxu0 0.0
        %1023 = vmatpush1.msra.mxu0 0.0
        %1024 = vmatprep.subr.mxu0 0.0
        %1025 = vmatpush1.msra.mxu0 0.0
        %1026 = vmatprep.subr.mxu0 0.0
        %1027 = vmatpush1.msra.mxu0 0.0
        %1028 = vmatprep.subr.mxu0 0.0
        %1029 = vmatpush1.msra.mxu0 0.0
        %1030 = vmatprep.subr.mxu0 0.0
        %1031 = vmatpush1.msra.mxu0 0.0
        %1032 = vmatprep.subr.mxu0 0.0
        %1033 = vmatpush1.msra.mxu0 0.0
        %1034 = vmatprep.subr.mxu0 0.0
        %1035 = vmatpush1.msra.mxu0 0.0
        %1036 = vmatprep.mubr.f32.mxu0 0.0
        %1037 = vmatmul.mubr.f32.gmra.mrb[0].mxu0 %v970
        %v1038 = vpop.f32.mrb[0].mxu0
        %v1039 = vadd.f32 0.0, %v1038
        %v1040 = vpop.f32.mrb[0].mxu0
        %1041 = vdwg.mxu0
        %v1042 = vld [vmem:[%s803] sm:$0xff]
        %v1043 = vld [vmem:[%s8] sm:$0xff]
        %v1044 = vld [vmem:[%s8 + $0x8] sm:$0xff]
        %v1045 = vld [vmem:[%s8 + $0x10] sm:$0xff]
        %v1046 = vld [vmem:[%s8 + $0x18] sm:$0xff]
        %v1047 = vld [vmem:[#allocation14] sm:$0x1]
        %v1048 = vld [vmem:[#allocation16] sm:$0x1]
        %v1049 = vmul.f32 %v1039, 0.35355338
        %1051 = vrot.lane.b32.xlu0 %v1049, 120
        %v1052 = vpop.permute.xlu0 %1051
        %1054 = vrot.lane.b32.xlu0 %v1049, 112
        %v1055 = vpop.permute.xlu0 %1054
        %1057 = vrot.lane.b32.xlu0 %v1049, 104
        %v1058 = vpop.permute.xlu0 %1057
        %v1060 = vcombine.low %v1049, %v1055
        %v1061 = vcombine.high %v1049, %v1055
        %v1063 = vunpack.c.l.s4 1983009808
        %v1064 = vunpack.c.0.s8 %v1063
        %v1065 = vlaneseq
        %v1066 = vshrl.u32 %v1065, 7
        %v1067 = vsub.s32 %v1064, %v1066
        %v1068 = vrot.slane %v1060, %v1067
        %v1070 = vunpack.c.l.s4 1983009808
        %v1071 = vunpack.c.0.s8 %v1070
        %v1072 = vlaneseq
        %v1073 = vshrl.u32 %v1072, 7
        %v1074 = vsub.s32 %v1071, %v1073
        %v1075 = vrot.slane %v1061, %v1074
        %v1076 = vcombine.low %v1052, %v1058
        %v1077 = vcombine.high %v1052, %v1058
        %v1079 = vunpack.c.l.s4 1983009808
        %v1080 = vunpack.c.0.s8 %v1079
        %v1081 = vlaneseq
        %v1082 = vshrl.u32 %v1081, 7
        %v1083 = vsub.s32 %v1080, %v1082
        %v1084 = vrot.slane %v1076, %v1083
        %v1086 = vunpack.c.l.s4 1983009808
        %v1087 = vunpack.c.0.s8 %v1086
        %v1088 = vlaneseq
        %v1089 = vshrl.u32 %v1088, 7
        %v1090 = vsub.s32 %v1087, %v1089
        %v1091 = vrot.slane %v1077, %v1090
        %v1092 = vcombine.low %v1068, %v1084
        %v1093 = vcombine.high %v1068, %v1084
        %v1095 = vunpack.c.l.s4 1934713408
        %v1096 = vunpack.c.0.s8 %v1095
        %v1097 = vlaneseq
        %v1098 = vshrl.u32 %v1097, 7
        %v1099 = vsub.s32 %v1096, %v1098
        %v1100 = vrot.slane %v1092, %v1099
        %v1102 = vunpack.c.l.s4 1934713408
        %v1103 = vunpack.c.0.s8 %v1102
        %v1104 = vlaneseq
        %v1105 = vshrl.u32 %v1104, 7
        %v1106 = vsub.s32 %v1103, %v1105
        %v1107 = vrot.slane %v1093, %v1106
        %v1108 = vcombine.low %v1075, %v1091
        %v1109 = vcombine.high %v1075, %v1091
        %v1111 = vunpack.c.l.s4 1934713408
        %v1112 = vunpack.c.0.s8 %v1111
        %v1113 = vlaneseq
        %v1114 = vshrl.u32 %v1113, 7
        %v1115 = vsub.s32 %v1112, %v1114
        %v1116 = vrot.slane %v1108, %v1115
        %v1118 = vunpack.c.l.s4 1934713408
        %v1119 = vunpack.c.0.s8 %v1118
        %v1120 = vlaneseq
        %v1121 = vshrl.u32 %v1120, 7
        %v1122 = vsub.s32 %v1119, %v1121
        %v1123 = vrot.slane %v1109, %v1122
        %v1124 = vcombine.high %v1100, 0.0
        %v1125 = vcombine.high %v1107, 0.0
        %v1126 = vcombine.high %v1116, 0.0
        %v1127 = vcombine.high %v1123, 0.0
        %v1128 = vcombine.low %v1100, %v1107
        %v1130 = vunpack.c.l.s4 1983009808
        %v1131 = vunpack.c.0.s8 %v1130
        %v1132 = vlaneseq
        %v1133 = vshrl.u32 %v1132, 7
        %v1134 = vsub.s32 %v1131, %v1133
        %v1135 = vrot.slane %v1128, %v1134
        %v1136 = vcombine.low %v1124, %v1125
        %v1138 = vunpack.c.l.s4 1983009808
        %v1139 = vunpack.c.0.s8 %v1138
        %v1140 = vlaneseq
        %v1141 = vshrl.u32 %v1140, 7
        %v1142 = vsub.s32 %v1139, %v1141
        %v1143 = vrot.slane %v1136, %v1142
        %v1144 = vcombine.low %v1116, %v1123
        %v1146 = vunpack.c.l.s4 1983009808
        %v1147 = vunpack.c.0.s8 %v1146
        %v1148 = vlaneseq
        %v1149 = vshrl.u32 %v1148, 7
        %v1150 = vsub.s32 %v1147, %v1149
        %v1151 = vrot.slane %v1144, %v1150
        %v1152 = vcombine.low %v1126, %v1127
        %v1154 = vunpack.c.l.s4 1983009808
        %v1155 = vunpack.c.0.s8 %v1154
        %v1156 = vlaneseq
        %v1157 = vshrl.u32 %v1156, 7
        %v1158 = vsub.s32 %v1155, %v1157
        %v1159 = vrot.slane %v1152, %v1158
        %v1160 = vcombine.low %v1135, %v1143
        %v1161 = vcombine.high %v1135, %v1143
        %v1163 = vunpack.c.l.s4 1934713408
        %v1164 = vunpack.c.0.s8 %v1163
        %v1165 = vlaneseq
        %v1166 = vshrl.u32 %v1165, 7
        %v1167 = vsub.s32 %v1164, %v1166
        %v1168 = vrot.slane %v1160, %v1167
        %v1170 = vunpack.c.l.s4 1934713408
        %v1171 = vunpack.c.0.s8 %v1170
        %v1172 = vlaneseq
        %v1173 = vshrl.u32 %v1172, 7
        %v1174 = vsub.s32 %v1171, %v1173
        %v1175 = vrot.slane %v1161, %v1174
        %v1176 = vcombine.low %v1151, %v1159
        %v1177 = vcombine.high %v1151, %v1159
        %v1179 = vunpack.c.l.s4 1934713408
        %v1180 = vunpack.c.0.s8 %v1179
        %v1181 = vlaneseq
        %v1182 = vshrl.u32 %v1181, 7
        %v1183 = vsub.s32 %v1180, %v1182
        %v1184 = vrot.slane %v1176, %v1183
        %v1186 = vunpack.c.l.s4 1934713408
        %v1187 = vunpack.c.0.s8 %v1186
        %v1188 = vlaneseq
        %v1189 = vshrl.u32 %v1188, 7
        %v1190 = vsub.s32 %v1187, %v1189
        %v1191 = vrot.slane %v1177, %v1190
        %v1192 = vcombine.low %v1168, %v1184
        %v1193 = vcombine.high %v1168, %v1184
        %v1194 = vcombine.low %v1175, %v1191
        %v1195 = vcombine.high %v1175, %v1191
        %1197 = vrot.lane.b32.xlu0 %v1039, 120
        %v1198 = vpop.permute.xlu0 %1197
        %1199 = vrot.lane.b32.xlu0 %v1039, 112
        %v1200 = vpop.permute.xlu0 %1199
        %1201 = vrot.lane.b32.xlu0 %v1039, 104
        %v1202 = vpop.permute.xlu0 %1201
        %1203 = vrot.lane.b32.xlu0 %v1039, 96
        %v1204 = vpop.permute.xlu0 %1203
        %1205 = vrot.lane.b32.xlu0 %v1198, 96
        %v1206 = vpop.permute.xlu0 %1205
        %1207 = vrot.lane.b32.xlu0 %v1200, 96
        %v1208 = vpop.permute.xlu0 %1207
        %1209 = vrot.lane.b32.xlu0 %v1202, 96
        %v1210 = vpop.permute.xlu0 %1209
        %v1215 = vcombine.low %v1204, %v1208
        %v1216 = vcombine.high %v1204, %v1208
        %v1218 = vunpack.c.l.s4 1983009808
        %v1219 = vunpack.c.0.s8 %v1218
        %v1220 = vlaneseq
        %v1221 = vshrl.u32 %v1220, 7
        %v1222 = vsub.s32 %v1219, %v1221
        %v1223 = vrot.slane %v1215, %v1222
        %v1225 = vunpack.c.l.s4 1983009808
        %v1226 = vunpack.c.0.s8 %v1225
        %v1227 = vlaneseq
        %v1228 = vshrl.u32 %v1227, 7
        %v1229 = vsub.s32 %v1226, %v1228
        %v1230 = vrot.slane %v1216, %v1229
        %v1231 = vcombine.low %v1206, %v1210
        %v1232 = vcombine.high %v1206, %v1210
        %v1234 = vunpack.c.l.s4 1983009808
        %v1235 = vunpack.c.0.s8 %v1234
        %v1236 = vlaneseq
        %v1237 = vshrl.u32 %v1236, 7
        %v1238 = vsub.s32 %v1235, %v1237
        %v1239 = vrot.slane %v1231, %v1238
        %v1241 = vunpack.c.l.s4 1983009808
        %v1242 = vunpack.c.0.s8 %v1241
        %v1243 = vlaneseq
        %v1244 = vshrl.u32 %v1243, 7
        %v1245 = vsub.s32 %v1242, %v1244
        %v1246 = vrot.slane %v1232, %v1245
        %v1247 = vcombine.low %v1223, %v1239
        %v1248 = vcombine.high %v1223, %v1239
        %v1250 = vunpack.c.l.s4 1934713408
        %v1251 = vunpack.c.0.s8 %v1250
        %v1252 = vlaneseq
        %v1253 = vshrl.u32 %v1252, 7
        %v1254 = vsub.s32 %v1251, %v1253
        %v1255 = vrot.slane %v1247, %v1254
        %v1257 = vunpack.c.l.s4 1934713408
        %v1258 = vunpack.c.0.s8 %v1257
        %v1259 = vlaneseq
        %v1260 = vshrl.u32 %v1259, 7
        %v1261 = vsub.s32 %v1258, %v1260
        %v1262 = vrot.slane %v1248, %v1261
        %v1263 = vcombine.low %v1230, %v1246
        %v1264 = vcombine.high %v1230, %v1246
        %v1266 = vunpack.c.l.s4 1934713408
        %v1267 = vunpack.c.0.s8 %v1266
        %v1268 = vlaneseq
        %v1269 = vshrl.u32 %v1268, 7
        %v1270 = vsub.s32 %v1267, %v1269
        %v1271 = vrot.slane %v1263, %v1270
        %v1273 = vunpack.c.l.s4 1934713408
        %v1274 = vunpack.c.0.s8 %v1273
        %v1275 = vlaneseq
        %v1276 = vshrl.u32 %v1275, 7
        %v1277 = vsub.s32 %v1274, %v1276
        %v1278 = vrot.slane %v1264, %v1277
        %v1279 = vcombine.high %v1255, 0.0
        %v1280 = vcombine.high %v1262, 0.0
        %v1281 = vcombine.high %v1271, 0.0
        %v1282 = vcombine.high %v1278, 0.0
        %v1283 = vcombine.low %v1255, %v1262
        %v1285 = vunpack.c.l.s4 1983009808
        %v1286 = vunpack.c.0.s8 %v1285
        %v1287 = vlaneseq
        %v1288 = vshrl.u32 %v1287, 7
        %v1289 = vsub.s32 %v1286, %v1288
        %v1290 = vrot.slane %v1283, %v1289
        %v1291 = vcombine.low %v1279, %v1280
        %v1293 = vunpack.c.l.s4 1983009808
        %v1294 = vunpack.c.0.s8 %v1293
        %v1295 = vlaneseq
        %v1296 = vshrl.u32 %v1295, 7
        %v1297 = vsub.s32 %v1294, %v1296
        %v1298 = vrot.slane %v1291, %v1297
        %v1299 = vcombine.low %v1271, %v1278
        %v1301 = vunpack.c.l.s4 1983009808
        %v1302 = vunpack.c.0.s8 %v1301
        %v1303 = vlaneseq
        %v1304 = vshrl.u32 %v1303, 7
        %v1305 = vsub.s32 %v1302, %v1304
        %v1306 = vrot.slane %v1299, %v1305
        %v1307 = vcombine.low %v1281, %v1282
        %v1309 = vunpack.c.l.s4 1983009808
        %v1310 = vunpack.c.0.s8 %v1309
        %v1311 = vlaneseq
        %v1312 = vshrl.u32 %v1311, 7
        %v1313 = vsub.s32 %v1310, %v1312
        %v1314 = vrot.slane %v1307, %v1313
        %v1315 = vcombine.low %v1290, %v1298
        %v1316 = vcombine.high %v1290, %v1298
        %v1318 = vunpack.c.l.s4 1934713408
        %v1319 = vunpack.c.0.s8 %v1318
        %v1320 = vlaneseq
        %v1321 = vshrl.u32 %v1320, 7
        %v1322 = vsub.s32 %v1319, %v1321
        %v1323 = vrot.slane %v1315, %v1322
        %v1325 = vunpack.c.l.s4 1934713408
        %v1326 = vunpack.c.0.s8 %v1325
        %v1327 = vlaneseq
        %v1328 = vshrl.u32 %v1327, 7
        %v1329 = vsub.s32 %v1326, %v1328
        %v1330 = vrot.slane %v1316, %v1329
        %v1331 = vcombine.low %v1306, %v1314
        %v1332 = vcombine.high %v1306, %v1314
        %v1334 = vunpack.c.l.s4 1934713408
        %v1335 = vunpack.c.0.s8 %v1334
        %v1336 = vlaneseq
        %v1337 = vshrl.u32 %v1336, 7
        %v1338 = vsub.s32 %v1335, %v1337
        %v1339 = vrot.slane %v1331, %v1338
        %v1341 = vunpack.c.l.s4 1934713408
        %v1342 = vunpack.c.0.s8 %v1341
        %v1343 = vlaneseq
        %v1344 = vshrl.u32 %v1343, 7
        %v1345 = vsub.s32 %v1342, %v1344
        %v1346 = vrot.slane %v1332, %v1345
        %v1347 = vcombine.low %v1323, %v1339
        %v1348 = vcombine.high %v1323, %v1339
        %v1349 = vcombine.low %v1330, %v1346
        %v1350 = vcombine.high %v1330, %v1346
        %1351 = vrot.lane.b32.xlu0 %v1039, 64
        %v1352 = vpop.permute.xlu0 %1351
        %1353 = vrot.lane.b32.xlu0 %v1198, 64
        %v1354 = vpop.permute.xlu0 %1353
        %1355 = vrot.lane.b32.xlu0 %v1200, 64
        %v1356 = vpop.permute.xlu0 %1355
        %1357 = vrot.lane.b32.xlu0 %v1202, 64
        %v1358 = vpop.permute.xlu0 %1357
        %v1363 = vcombine.low %v1352, %v1356
        %v1364 = vcombine.high %v1352, %v1356
        %v1366 = vunpack.c.l.s4 1983009808
        %v1367 = vunpack.c.0.s8 %v1366
        %v1368 = vlaneseq
        %v1369 = vshrl.u32 %v1368, 7
        %v1370 = vsub.s32 %v1367, %v1369
        %v1371 = vrot.slane %v1363, %v1370
        %v1373 = vunpack.c.l.s4 1983009808
        %v1374 = vunpack.c.0.s8 %v1373
        %v1375 = vlaneseq
        %v1376 = vshrl.u32 %v1375, 7
        %v1377 = vsub.s32 %v1374, %v1376
        %v1378 = vrot.slane %v1364, %v1377
        %v1379 = vcombine.low %v1354, %v1358
        %v1380 = vcombine.high %v1354, %v1358
        %v1382 = vunpack.c.l.s4 1983009808
        %v1383 = vunpack.c.0.s8 %v1382
        %v1384 = vlaneseq
        %v1385 = vshrl.u32 %v1384, 7
        %v1386 = vsub.s32 %v1383, %v1385
        %v1387 = vrot.slane %v1379, %v1386
        %v1389 = vunpack.c.l.s4 1983009808
        %v1390 = vunpack.c.0.s8 %v1389
        %v1391 = vlaneseq
        %v1392 = vshrl.u32 %v1391, 7
        %v1393 = vsub.s32 %v1390, %v1392
        %v1394 = vrot.slane %v1380, %v1393
        %v1395 = vcombine.low %v1371, %v1387
        %v1396 = vcombine.high %v1371, %v1387
        %v1398 = vunpack.c.l.s4 1934713408
        %v1399 = vunpack.c.0.s8 %v1398
        %v1400 = vlaneseq
        %v1401 = vshrl.u32 %v1400, 7
        %v1402 = vsub.s32 %v1399, %v1401
        %v1403 = vrot.slane %v1395, %v1402
        %v1405 = vunpack.c.l.s4 1934713408
        %v1406 = vunpack.c.0.s8 %v1405
        %v1407 = vlaneseq
        %v1408 = vshrl.u32 %v1407, 7
        %v1409 = vsub.s32 %v1406, %v1408
        %v1410 = vrot.slane %v1396, %v1409
        %v1411 = vcombine.low %v1378, %v1394
        %v1412 = vcombine.high %v1378, %v1394
        %v1414 = vunpack.c.l.s4 1934713408
        %v1415 = vunpack.c.0.s8 %v1414
        %v1416 = vlaneseq
        %v1417 = vshrl.u32 %v1416, 7
        %v1418 = vsub.s32 %v1415, %v1417
        %v1419 = vrot.slane %v1411, %v1418
        %v1421 = vunpack.c.l.s4 1934713408
        %v1422 = vunpack.c.0.s8 %v1421
        %v1423 = vlaneseq
        %v1424 = vshrl.u32 %v1423, 7
        %v1425 = vsub.s32 %v1422, %v1424
        %v1426 = vrot.slane %v1412, %v1425
        %v1427 = vcombine.high %v1403, 0.0
        %v1428 = vcombine.high %v1410, 0.0
        %v1429 = vcombine.high %v1419, 0.0
        %v1430 = vcombine.high %v1426, 0.0
        %v1431 = vcombine.low %v1403, %v1410
        %v1433 = vunpack.c.l.s4 1983009808
        %v1434 = vunpack.c.0.s8 %v1433
        %v1435 = vlaneseq
        %v1436 = vshrl.u32 %v1435, 7
        %v1437 = vsub.s32 %v1434, %v1436
        %v1438 = vrot.slane %v1431, %v1437
        %v1439 = vcombine.low %v1427, %v1428
        %v1441 = vunpack.c.l.s4 1983009808
        %v1442 = vunpack.c.0.s8 %v1441
        %v1443 = vlaneseq
        %v1444 = vshrl.u32 %v1443, 7
        %v1445 = vsub.s32 %v1442, %v1444
        %v1446 = vrot.slane %v1439, %v1445
        %v1447 = vcombine.low %v1419, %v1426
        %v1449 = vunpack.c.l.s4 1983009808
        %v1450 = vunpack.c.0.s8 %v1449
        %v1451 = vlaneseq
        %v1452 = vshrl.u32 %v1451, 7
        %v1453 = vsub.s32 %v1450, %v1452
        %v1454 = vrot.slane %v1447, %v1453
        %v1455 = vcombine.low %v1429, %v1430
        %v1457 = vunpack.c.l.s4 1983009808
        %v1458 = vunpack.c.0.s8 %v1457
        %v1459 = vlaneseq
        %v1460 = vshrl.u32 %v1459, 7
        %v1461 = vsub.s32 %v1458, %v1460
        %v1462 = vrot.slane %v1455, %v1461
        %v1463 = vcombine.low %v1438, %v1446
        %v1464 = vcombine.high %v1438, %v1446
        %v1466 = vunpack.c.l.s4 1934713408
        %v1467 = vunpack.c.0.s8 %v1466
        %v1468 = vlaneseq
        %v1469 = vshrl.u32 %v1468, 7
        %v1470 = vsub.s32 %v1467, %v1469
        %v1471 = vrot.slane %v1463, %v1470
        %v1473 = vunpack.c.l.s4 1934713408
        %v1474 = vunpack.c.0.s8 %v1473
        %v1475 = vlaneseq
        %v1476 = vshrl.u32 %v1475, 7
        %v1477 = vsub.s32 %v1474, %v1476
        %v1478 = vrot.slane %v1464, %v1477
        %v1479 = vcombine.low %v1454, %v1462
        %v1480 = vcombine.high %v1454, %v1462
        %v1482 = vunpack.c.l.s4 1934713408
        %v1483 = vunpack.c.0.s8 %v1482
        %v1484 = vlaneseq
        %v1485 = vshrl.u32 %v1484, 7
        %v1486 = vsub.s32 %v1483, %v1485
        %v1487 = vrot.slane %v1479, %v1486
        %v1489 = vunpack.c.l.s4 1934713408
        %v1490 = vunpack.c.0.s8 %v1489
        %v1491 = vlaneseq
        %v1492 = vshrl.u32 %v1491, 7
        %v1493 = vsub.s32 %v1490, %v1492
        %v1494 = vrot.slane %v1480, %v1493
        %v1495 = vcombine.low %v1471, %v1487
        %v1496 = vcombine.high %v1471, %v1487
        %v1497 = vcombine.low %v1478, %v1494
        %v1498 = vcombine.high %v1478, %v1494
        %vm1499 = vcmask 64512
        %v1501 = vsel %vm1499, %v1192, 0
        %v1504 = vsel %vm1499, %v1347, 0
        %1506 = vmatprep.subr.mxu0 0.0
        %1507 = vmatpush1.xpose.msra.mxu0 %v1504
        %1508 = vmatprep.subr.mxu0 0.0
        %1509 = vmatpush1.xpose.msra.mxu0 0.0
        %1510 = vmatprep.subr.mxu0 0.0
        %1511 = vmatpush1.xpose.msra.mxu0 0.0
        %1512 = vmatprep.subr.mxu0 0.0
        %1513 = vmatpush1.xpose.msra.mxu0 0.0
        %1514 = vmatprep.subr.mxu0 0.0
        %1515 = vmatpush1.xpose.msra.mxu0 0.0
        %1516 = vmatprep.subr.mxu0 0.0
        %1517 = vmatpush1.xpose.msra.mxu0 0.0
        %1518 = vmatprep.subr.mxu0 0.0
        %1519 = vmatpush1.xpose.msra.mxu0 0.0
        %1520 = vmatprep.subr.mxu0 0.0
        %1521 = vmatpush1.xpose.msra.mxu0 0.0
        %1522 = vmatprep.subr.mxu0 0.0
        %1523 = vmatpush1.xpose.msra.mxu0 0.0
        %1524 = vmatprep.subr.mxu0 0.0
        %1525 = vmatpush1.xpose.msra.mxu0 0.0
        %1526 = vmatprep.subr.mxu0 0.0
        %1527 = vmatpush1.xpose.msra.mxu0 0.0
        %1528 = vmatprep.subr.mxu0 0.0
        %1529 = vmatpush1.xpose.msra.mxu0 0.0
        %1530 = vmatprep.subr.mxu0 0.0
        %1531 = vmatpush1.xpose.msra.mxu0 0.0
        %1532 = vmatprep.subr.mxu0 0.0
        %1533 = vmatpush1.xpose.msra.mxu0 0.0
        %1534 = vmatprep.subr.mxu0 0.0
        %1535 = vmatpush1.xpose.msra.mxu0 0.0
        %1536 = vmatprep.subr.mxu0 0.0
        %1537 = vmatpush1.xpose.msra.mxu0 0.0
        %1538 = vmatprep.subr.mxu0 0.0
        %1539 = vmatpush1.xpose.msra.mxu0 0.0
        %1540 = vmatprep.subr.mxu0 0.0
        %1541 = vmatpush1.xpose.msra.mxu0 0.0
        %1542 = vmatprep.subr.mxu0 0.0
        %1543 = vmatpush1.xpose.msra.mxu0 0.0
        %1544 = vmatprep.subr.mxu0 0.0
        %1545 = vmatpush1.xpose.msra.mxu0 0.0
        %1546 = vmatprep.subr.mxu0 0.0
        %1547 = vmatpush1.xpose.msra.mxu0 0.0
        %1548 = vmatprep.subr.mxu0 0.0
        %1549 = vmatpush1.xpose.msra.mxu0 0.0
        %1550 = vmatprep.subr.mxu0 0.0
        %1551 = vmatpush1.xpose.msra.mxu0 0.0
        %1552 = vmatprep.subr.mxu0 0.0
        %1553 = vmatpush1.xpose.msra.mxu0 0.0
        %1554 = vmatprep.subr.mxu0 0.0
        %1555 = vmatpush1.xpose.msra.mxu0 0.0
        %1556 = vmatprep.subr.mxu0 0.0
        %1557 = vmatpush1.xpose.msra.mxu0 0.0
        %1558 = vmatprep.subr.mxu0 0.0
        %1559 = vmatpush1.xpose.msra.mxu0 0.0
        %1560 = vmatprep.subr.mxu0 0.0
        %1561 = vmatpush1.xpose.msra.mxu0 0.0
        %1562 = vmatprep.subr.mxu0 0.0
        %1563 = vmatpush1.xpose.msra.mxu0 0.0
        %1564 = vmatprep.subr.mxu0 0.0
        %1565 = vmatpush1.xpose.msra.mxu0 0.0
        %1566 = vmatprep.subr.mxu0 0.0
        %1567 = vmatpush1.xpose.msra.mxu0 0.0
        %1568 = vmatprep.subr.mxu0 0.0
        %1569 = vmatpush1.xpose.msra.mxu0 0.0
        %1570 = vmatprep.mubr.f32.mxu0 0.0
        %1571 = vmatmul.mubr.f32.gmra.mrb[0].mxu0 %v1501
        %v1572 = vpop.f32.mrb[0].mxu0
        %v1573 = vadd.f32 0.0, %v1572
        %v1574 = vpop.f32.mrb[0].mxu0
        %1575 = vdwg.mxu0
        %v1577 = vsel %vm1499, %v1193, 0
        %v1580 = vsel %vm1499, %v1348, 0
        %1582 = vmatprep.subr.mxu0 0.0
        %1583 = vmatpush1.xpose.msra.mxu0 %v1580
        %1584 = vmatprep.subr.mxu0 0.0
        %1585 = vmatpush1.xpose.msra.mxu0 0.0
        %1586 = vmatprep.subr.mxu0 0.0
        %1587 = vmatpush1.xpose.msra.mxu0 0.0
        %1588 = vmatprep.subr.mxu0 0.0
        %1589 = vmatpush1.xpose.msra.mxu0 0.0
        %1590 = vmatprep.subr.mxu0 0.0
        %1591 = vmatpush1.xpose.msra.mxu0 0.0
        %1592 = vmatprep.subr.mxu0 0.0
        %1593 = vmatpush1.xpose.msra.mxu0 0.0
        %1594 = vmatprep.subr.mxu0 0.0
        %1595 = vmatpush1.xpose.msra.mxu0 0.0
        %1596 = vmatprep.subr.mxu0 0.0
        %1597 = vmatpush1.xpose.msra.mxu0 0.0
        %1598 = vmatprep.subr.mxu0 0.0
        %1599 = vmatpush1.xpose.msra.mxu0 0.0
        %1600 = vmatprep.subr.mxu0 0.0
        %1601 = vmatpush1.xpose.msra.mxu0 0.0
        %1602 = vmatprep.subr.mxu0 0.0
        %1603 = vmatpush1.xpose.msra.mxu0 0.0
        %1604 = vmatprep.subr.mxu0 0.0
        %1605 = vmatpush1.xpose.msra.mxu0 0.0
        %1606 = vmatprep.subr.mxu0 0.0
        %1607 = vmatpush1.xpose.msra.mxu0 0.0
        %1608 = vmatprep.subr.mxu0 0.0
        %1609 = vmatpush1.xpose.msra.mxu0 0.0
        %1610 = vmatprep.subr.mxu0 0.0
        %1611 = vmatpush1.xpose.msra.mxu0 0.0
        %1612 = vmatprep.subr.mxu0 0.0
        %1613 = vmatpush1.xpose.msra.mxu0 0.0
        %1614 = vmatprep.subr.mxu0 0.0
        %1615 = vmatpush1.xpose.msra.mxu0 0.0
        %1616 = vmatprep.subr.mxu0 0.0
        %1617 = vmatpush1.xpose.msra.mxu0 0.0
        %1618 = vmatprep.subr.mxu0 0.0
        %1619 = vmatpush1.xpose.msra.mxu0 0.0
        %1620 = vmatprep.subr.mxu0 0.0
        %1621 = vmatpush1.xpose.msra.mxu0 0.0
        %1622 = vmatprep.subr.mxu0 0.0
        %1623 = vmatpush1.xpose.msra.mxu0 0.0
        %1624 = vmatprep.subr.mxu0 0.0
        %1625 = vmatpush1.xpose.msra.mxu0 0.0
        %1626 = vmatprep.subr.mxu0 0.0
        %1627 = vmatpush1.xpose.msra.mxu0 0.0
        %1628 = vmatprep.subr.mxu0 0.0
        %1629 = vmatpush1.xpose.msra.mxu0 0.0
        %1630 = vmatprep.subr.mxu0 0.0
        %1631 = vmatpush1.xpose.msra.mxu0 0.0
        %1632 = vmatprep.subr.mxu0 0.0
        %1633 = vmatpush1.xpose.msra.mxu0 0.0
        %1634 = vmatprep.subr.mxu0 0.0
        %1635 = vmatpush1.xpose.msra.mxu0 0.0
        %1636 = vmatprep.subr.mxu0 0.0
        %1637 = vmatpush1.xpose.msra.mxu0 0.0
        %1638 = vmatprep.subr.mxu0 0.0
        %1639 = vmatpush1.xpose.msra.mxu0 0.0
        %1640 = vmatprep.subr.mxu0 0.0
        %1641 = vmatpush1.xpose.msra.mxu0 0.0
        %1642 = vmatprep.subr.mxu0 0.0
        %1643 = vmatpush1.xpose.msra.mxu0 0.0
        %1644 = vmatprep.subr.mxu0 0.0
        %1645 = vmatpush1.xpose.msra.mxu0 0.0
        %1646 = vmatprep.mubr.f32.mxu0 0.0
        %1647 = vmatmul.mubr.f32.gmra.mrb[0].mxu0 %v1577
        %v1648 = vpop.f32.mrb[0].mxu0
        %v1649 = vadd.f32 0.0, %v1648
        %v1650 = vpop.f32.mrb[0].mxu0
        %1651 = vdwg.mxu0
        %v1653 = vsel %vm1499, %v1194, 0
        %v1656 = vsel %vm1499, %v1349, 0
        %1658 = vmatprep.subr.mxu0 0.0
        %1659 = vmatpush1.xpose.msra.mxu0 %v1656
        %1660 = vmatprep.subr.mxu0 0.0
        %1661 = vmatpush1.xpose.msra.mxu0 0.0
        %1662 = vmatprep.subr.mxu0 0.0
        %1663 = vmatpush1.xpose.msra.mxu0 0.0
        %1664 = vmatprep.subr.mxu0 0.0
        %1665 = vmatpush1.xpose.msra.mxu0 0.0
        %1666 = vmatprep.subr.mxu0 0.0
        %1667 = vmatpush1.xpose.msra.mxu0 0.0
        %1668 = vmatprep.subr.mxu0 0.0
        %1669 = vmatpush1.xpose.msra.mxu0 0.0
        %1670 = vmatprep.subr.mxu0 0.0
        %1671 = vmatpush1.xpose.msra.mxu0 0.0
        %1672 = vmatprep.subr.mxu0 0.0
        %1673 = vmatpush1.xpose.msra.mxu0 0.0
        %1674 = vmatprep.subr.mxu0 0.0
        %1675 = vmatpush1.xpose.msra.mxu0 0.0
        %1676 = vmatprep.subr.mxu0 0.0
        %1677 = vmatpush1.xpose.msra.mxu0 0.0
        %1678 = vmatprep.subr.mxu0 0.0
        %1679 = vmatpush1.xpose.msra.mxu0 0.0
        %1680 = vmatprep.subr.mxu0 0.0
        %1681 = vmatpush1.xpose.msra.mxu0 0.0
        %1682 = vmatprep.subr.mxu0 0.0
        %1683 = vmatpush1.xpose.msra.mxu0 0.0
        %1684 = vmatprep.subr.mxu0 0.0
        %1685 = vmatpush1.xpose.msra.mxu0 0.0
        %1686 = vmatprep.subr.mxu0 0.0
        %1687 = vmatpush1.xpose.msra.mxu0 0.0
        %1688 = vmatprep.subr.mxu0 0.0
        %1689 = vmatpush1.xpose.msra.mxu0 0.0
        %1690 = vmatprep.subr.mxu0 0.0
        %1691 = vmatpush1.xpose.msra.mxu0 0.0
        %1692 = vmatprep.subr.mxu0 0.0
        %1693 = vmatpush1.xpose.msra.mxu0 0.0
        %1694 = vmatprep.subr.mxu0 0.0
        %1695 = vmatpush1.xpose.msra.mxu0 0.0
        %1696 = vmatprep.subr.mxu0 0.0
        %1697 = vmatpush1.xpose.msra.mxu0 0.0
        %1698 = vmatprep.subr.mxu0 0.0
        %1699 = vmatpush1.xpose.msra.mxu0 0.0
        %1700 = vmatprep.subr.mxu0 0.0
        %1701 = vmatpush1.xpose.msra.mxu0 0.0
        %1702 = vmatprep.subr.mxu0 0.0
        %1703 = vmatpush1.xpose.msra.mxu0 0.0
        %1704 = vmatprep.subr.mxu0 0.0
        %1705 = vmatpush1.xpose.msra.mxu0 0.0
        %1706 = vmatprep.subr.mxu0 0.0
        %1707 = vmatpush1.xpose.msra.mxu0 0.0
        %1708 = vmatprep.subr.mxu0 0.0
        %1709 = vmatpush1.xpose.msra.mxu0 0.0
        %1710 = vmatprep.subr.mxu0 0.0
        %1711 = vmatpush1.xpose.msra.mxu0 0.0
        %1712 = vmatprep.subr.mxu0 0.0
        %1713 = vmatpush1.xpose.msra.mxu0 0.0
        %1714 = vmatprep.subr.mxu0 0.0
        %1715 = vmatpush1.xpose.msra.mxu0 0.0
        %1716 = vmatprep.subr.mxu0 0.0
        %1717 = vmatpush1.xpose.msra.mxu0 0.0
        %1718 = vmatprep.subr.mxu0 0.0
        %1719 = vmatpush1.xpose.msra.mxu0 0.0
        %1720 = vmatprep.subr.mxu0 0.0
        %1721 = vmatpush1.xpose.msra.mxu0 0.0
        %1722 = vmatprep.mubr.f32.mxu0 0.0
        %1723 = vmatmul.mubr.f32.gmra.mrb[0].mxu0 %v1653
        %v1724 = vpop.f32.mrb[0].mxu0
        %v1725 = vadd.f32 0.0, %v1724
        %v1726 = vpop.f32.mrb[0].mxu0
        %1727 = vdwg.mxu0
        %v1729 = vsel %vm1499, %v1195, 0
        %v1732 = vsel %vm1499, %v1350, 0
        %1734 = vmatprep.subr.mxu0 0.0
        %1735 = vmatpush1.xpose.msra.mxu0 %v1732
        %1736 = vmatprep.subr.mxu0 0.0
        %1737 = vmatpush1.xpose.msra.mxu0 0.0
        %1738 = vmatprep.subr.mxu0 0.0
        %1739 = vmatpush1.xpose.msra.mxu0 0.0
        %1740 = vmatprep.subr.mxu0 0.0
        %1741 = vmatpush1.xpose.msra.mxu0 0.0
        %1742 = vmatprep.subr.mxu0 0.0
        %1743 = vmatpush1.xpose.msra.mxu0 0.0
        %1744 = vmatprep.subr.mxu0 0.0
        %1745 = vmatpush1.xpose.msra.mxu0 0.0
        %1746 = vmatprep.subr.mxu0 0.0
        %1747 = vmatpush1.xpose.msra.mxu0 0.0
        %1748 = vmatprep.subr.mxu0 0.0
        %1749 = vmatpush1.xpose.msra.mxu0 0.0
        %1750 = vmatprep.subr.mxu0 0.0
        %1751 = vmatpush1.xpose.msra.mxu0 0.0
        %1752 = vmatprep.subr.mxu0 0.0
        %1753 = vmatpush1.xpose.msra.mxu0 0.0
        %1754 = vmatprep.subr.mxu0 0.0
        %1755 = vmatpush1.xpose.msra.mxu0 0.0
        %1756 = vmatprep.subr.mxu0 0.0
        %1757 = vmatpush1.xpose.msra.mxu0 0.0
        %1758 = vmatprep.subr.mxu0 0.0
        %1759 = vmatpush1.xpose.msra.mxu0 0.0
        %1760 = vmatprep.subr.mxu0 0.0
        %1761 = vmatpush1.xpose.msra.mxu0 0.0
        %1762 = vmatprep.subr.mxu0 0.0
        %1763 = vmatpush1.xpose.msra.mxu0 0.0
        %1764 = vmatprep.subr.mxu0 0.0
        %1765 = vmatpush1.xpose.msra.mxu0 0.0
        %1766 = vmatprep.subr.mxu0 0.0
        %1767 = vmatpush1.xpose.msra.mxu0 0.0
        %1768 = vmatprep.subr.mxu0 0.0
        %1769 = vmatpush1.xpose.msra.mxu0 0.0
        %1770 = vmatprep.subr.mxu0 0.0
        %1771 = vmatpush1.xpose.msra.mxu0 0.0
        %1772 = vmatprep.subr.mxu0 0.0
        %1773 = vmatpush1.xpose.msra.mxu0 0.0
        %1774 = vmatprep.subr.mxu0 0.0
        %1775 = vmatpush1.xpose.msra.mxu0 0.0
        %1776 = vmatprep.subr.mxu0 0.0
        %1777 = vmatpush1.xpose.msra.mxu0 0.0
        %1778 = vmatprep.subr.mxu0 0.0
        %1779 = vmatpush1.xpose.msra.mxu0 0.0
        %1780 = vmatprep.subr.mxu0 0.0
        %1781 = vmatpush1.xpose.msra.mxu0 0.0
        %1782 = vmatprep.subr.mxu0 0.0
        %1783 = vmatpush1.xpose.msra.mxu0 0.0
        %1784 = vmatprep.subr.mxu0 0.0
        %1785 = vmatpush1.xpose.msra.mxu0 0.0
        %1786 = vmatprep.subr.mxu0 0.0
        %1787 = vmatpush1.xpose.msra.mxu0 0.0
        %1788 = vmatprep.subr.mxu0 0.0
        %1789 = vmatpush1.xpose.msra.mxu0 0.0
        %1790 = vmatprep.subr.mxu0 0.0
        %1791 = vmatpush1.xpose.msra.mxu0 0.0
        %1792 = vmatprep.subr.mxu0 0.0
        %1793 = vmatpush1.xpose.msra.mxu0 0.0
        %1794 = vmatprep.subr.mxu0 0.0
        %1795 = vmatpush1.xpose.msra.mxu0 0.0
        %1796 = vmatprep.subr.mxu0 0.0
        %1797 = vmatpush1.xpose.msra.mxu0 0.0
        %1798 = vmatprep.mubr.f32.mxu0 0.0
        %1799 = vmatmul.mubr.f32.gmra.mrb[0].mxu0 %v1729
        %v1800 = vpop.f32.mrb[0].mxu0
        %v1801 = vadd.f32 0.0, %v1800
        %v1802 = vpop.f32.mrb[0].mxu0
        %1803 = vdwg.mxu0
        %vm1804 = vcmp.eq.f32.partialorder %v1042, 0.0
        %v1805 = vsel %vm1804, 1, 0
        %vm1806 = vcmp.eq.s32.totalorder %v1805, 1
        %v1807 = vsel %vm1806, -1e+09, %v1573
        %v1808 = vsel %vm1806, -1e+09, %v1649
        %v1809 = vsel %vm1806, -1e+09, %v1725
        %v1810 = vsel %vm1806, -1e+09, %v1801
        %v1811 = vsel %vm1499, %v1807, -inf
        %1812 = vmax.xlane.f32.xlu0 %v1811
        %v1813 = vpop.xlane.xlu0 %1812
        %v1814 = vsel %vm1499, %v1808, -inf
        %1815 = vmax.xlane.f32.xlu0 %v1814
        %v1816 = vpop.xlane.xlu0 %1815
        %v1817 = vsel %vm1499, %v1809, -inf
        %1818 = vmax.xlane.f32.xlu0 %v1817
        %v1819 = vpop.xlane.xlu0 %1818
        %v1820 = vsel %vm1499, %v1810, -inf
        %1821 = vmax.xlane.f32.xlu0 %v1820
        %v1822 = vpop.xlane.xlu0 %1821
        %v1823 = vsub.f32 %v1807, %v1813
        %v1824 = vsub.f32 %v1808, %v1816
        %v1825 = vsub.f32 %v1809, %v1819
        %v1826 = vsub.f32 %v1810, %v1822
        %v1827 = vmul.f32 %v1823, 1.442695
        %v1828 = vpow.pop %v1827
        %v1829 = vmul.f32 %v1824, 1.442695
        %v1830 = vpow.pop %v1829
        %v1831 = vmul.f32 %v1825, 1.442695
        %v1832 = vpow.pop %v1831
        %v1833 = vmul.f32 %v1826, 1.442695
        %v1834 = vpow.pop %v1833
        %v1835 = vsel %vm1499, %v1828, 0.0
        %1836 = vadd.xlane.f32.xlu0 %v1835
        %v1837 = vpop.xlane.xlu0 %1836
        %v1838 = vsel %vm1499, %v1830, 0.0
        %1839 = vadd.xlane.f32.xlu0 %v1838
        %v1840 = vpop.xlane.xlu0 %1839
        %v1841 = vsel %vm1499, %v1832, 0.0
        %1842 = vadd.xlane.f32.xlu0 %v1841
        %v1843 = vpop.xlane.xlu0 %1842
        %v1844 = vsel %vm1499, %v1834, 0.0
        %1845 = vadd.xlane.f32.xlu0 %v1844
        %v1846 = vpop.xlane.xlu0 %1845
        %v1847 = vrcp.pop %v1837
        %v1848 = vrcp.pop %v1840
        %v1849 = vrcp.pop %v1843
        %v1850 = vrcp.pop %v1846
        %v1851 = vmul.f32 %v1828, %v1847
        %v1852 = vmul.f32 %v1830, %v1848
        %v1853 = vmul.f32 %v1832, %v1849
        %v1854 = vmul.f32 %v1834, %v1850
        %v1856 = vsel %vm1499, %v1851, 0
        %1858 = vmatprep.subr.mxu0 0.0
        %1859 = vmatpush1.msra.mxu0 %v1495
        %1860 = vmatprep.subr.mxu0 0.0
        %1861 = vmatpush1.msra.mxu0 0.0
        %1862 = vmatprep.subr.mxu0 0.0
        %1863 = vmatpush1.msra.mxu0 0.0
        %1864 = vmatprep.subr.mxu0 0.0
        %1865 = vmatpush1.msra.mxu0 0.0
        %1866 = vmatprep.subr.mxu0 0.0
        %1867 = vmatpush1.msra.mxu0 0.0
        %1868 = vmatprep.subr.mxu0 0.0
        %1869 = vmatpush1.msra.mxu0 0.0
        %1870 = vmatprep.subr.mxu0 0.0
        %1871 = vmatpush1.msra.mxu0 0.0
        %1872 = vmatprep.subr.mxu0 0.0
        %1873 = vmatpush1.msra.mxu0 0.0
        %1874 = vmatprep.subr.mxu0 0.0
        %1875 = vmatpush1.msra.mxu0 0.0
        %1876 = vmatprep.subr.mxu0 0.0
        %1877 = vmatpush1.msra.mxu0 0.0
        %1878 = vmatprep.subr.mxu0 0.0
        %1879 = vmatpush1.msra.mxu0 0.0
        %1880 = vmatprep.subr.mxu0 0.0
        %1881 = vmatpush1.msra.mxu0 0.0
        %1882 = vmatprep.subr.mxu0 0.0
        %1883 = vmatpush1.msra.mxu0 0.0
        %1884 = vmatprep.subr.mxu0 0.0
        %1885 = vmatpush1.msra.mxu0 0.0
        %1886 = vmatprep.subr.mxu0 0.0
        %1887 = vmatpush1.msra.mxu0 0.0
        %1888 = vmatprep.subr.mxu0 0.0
        %1889 = vmatpush1.msra.mxu0 0.0
        %1890 = vmatprep.subr.mxu0 0.0
        %1891 = vmatpush1.msra.mxu0 0.0
        %1892 = vmatprep.subr.mxu0 0.0
        %1893 = vmatpush1.msra.mxu0 0.0
        %1894 = vmatprep.subr.mxu0 0.0
        %1895 = vmatpush1.msra.mxu0 0.0
        %1896 = vmatprep.subr.mxu0 0.0
        %1897 = vmatpush1.msra.mxu0 0.0
        %1898 = vmatprep.subr.mxu0 0.0
        %1899 = vmatpush1.msra.mxu0 0.0
        %1900 = vmatprep.subr.mxu0 0.0
        %1901 = vmatpush1.msra.mxu0 0.0
        %1902 = vmatprep.subr.mxu0 0.0
        %1903 = vmatpush1.msra.mxu0 0.0
        %1904 = vmatprep.subr.mxu0 0.0
        %1905 = vmatpush1.msra.mxu0 0.0
        %1906 = vmatprep.subr.mxu0 0.0
        %1907 = vmatpush1.msra.mxu0 0.0
        %1908 = vmatprep.subr.mxu0 0.0
        %1909 = vmatpush1.msra.mxu0 0.0
        %1910 = vmatprep.subr.mxu0 0.0
        %1911 = vmatpush1.msra.mxu0 0.0
        %1912 = vmatprep.subr.mxu0 0.0
        %1913 = vmatpush1.msra.mxu0 0.0
        %1914 = vmatprep.subr.mxu0 0.0
        %1915 = vmatpush1.msra.mxu0 0.0
        %1916 = vmatprep.subr.mxu0 0.0
        %1917 = vmatpush1.msra.mxu0 0.0
        %1918 = vmatprep.subr.mxu0 0.0
        %1919 = vmatpush1.msra.mxu0 0.0
        %1920 = vmatprep.subr.mxu0 0.0
        %1921 = vmatpush1.msra.mxu0 0.0
        %1922 = vmatprep.mubr.f32.mxu0 0.0
        %1923 = vmatmul.mubr.f32.gmra.mrb[0].mxu0 %v1856
        %v1924 = vpop.f32.mrb[0].mxu0
        %v1925 = vadd.f32 0.0, %v1924
        %v1926 = vpop.f32.mrb[0].mxu0
        %1927 = vdwg.mxu0
        %v1929 = vsel %vm1499, %v1852, 0
        %1931 = vmatprep.subr.mxu0 0.0
        %1932 = vmatpush1.msra.mxu0 %v1496
        %1933 = vmatprep.subr.mxu0 0.0
        %1934 = vmatpush1.msra.mxu0 0.0
        %1935 = vmatprep.subr.mxu0 0.0
        %1936 = vmatpush1.msra.mxu0 0.0
        %1937 = vmatprep.subr.mxu0 0.0
        %1938 = vmatpush1.msra.mxu0 0.0
        %1939 = vmatprep.subr.mxu0 0.0
        %1940 = vmatpush1.msra.mxu0 0.0
        %1941 = vmatprep.subr.mxu0 0.0
        %1942 = vmatpush1.msra.mxu0 0.0
        %1943 = vmatprep.subr.mxu0 0.0
        %1944 = vmatpush1.msra.mxu0 0.0
        %1945 = vmatprep.subr.mxu0 0.0
        %1946 = vmatpush1.msra.mxu0 0.0
        %1947 = vmatprep.subr.mxu0 0.0
        %1948 = vmatpush1.msra.mxu0 0.0
        %1949 = vmatprep.subr.mxu0 0.0
        %1950 = vmatpush1.msra.mxu0 0.0
        %1951 = vmatprep.subr.mxu0 0.0
        %1952 = vmatpush1.msra.mxu0 0.0
        %1953 = vmatprep.subr.mxu0 0.0
        %1954 = vmatpush1.msra.mxu0 0.0
        %1955 = vmatprep.subr.mxu0 0.0
        %1956 = vmatpush1.msra.mxu0 0.0
        %1957 = vmatprep.subr.mxu0 0.0
        %1958 = vmatpush1.msra.mxu0 0.0
        %1959 = vmatprep.subr.mxu0 0.0
        %1960 = vmatpush1.msra.mxu0 0.0
        %1961 = vmatprep.subr.mxu0 0.0
        %1962 = vmatpush1.msra.mxu0 0.0
        %1963 = vmatprep.subr.mxu0 0.0
        %1964 = vmatpush1.msra.mxu0 0.0
        %1965 = vmatprep.subr.mxu0 0.0
        %1966 = vmatpush1.msra.mxu0 0.0
        %1967 = vmatprep.subr.mxu0 0.0
        %1968 = vmatpush1.msra.mxu0 0.0
        %1969 = vmatprep.subr.mxu0 0.0
        %1970 = vmatpush1.msra.mxu0 0.0
        %1971 = vmatprep.subr.mxu0 0.0
        %1972 = vmatpush1.msra.mxu0 0.0
        %1973 = vmatprep.subr.mxu0 0.0
        %1974 = vmatpush1.msra.mxu0 0.0
        %1975 = vmatprep.subr.mxu0 0.0
        %1976 = vmatpush1.msra.mxu0 0.0
        %1977 = vmatprep.subr.mxu0 0.0
        %1978 = vmatpush1.msra.mxu0 0.0
        %1979 = vmatprep.subr.mxu0 0.0
        %1980 = vmatpush1.msra.mxu0 0.0
        %1981 = vmatprep.subr.mxu0 0.0
        %1982 = vmatpush1.msra.mxu0 0.0
        %1983 = vmatprep.subr.mxu0 0.0
        %1984 = vmatpush1.msra.mxu0 0.0
        %1985 = vmatprep.subr.mxu0 0.0
        %1986 = vmatpush1.msra.mxu0 0.0
        %1987 = vmatprep.subr.mxu0 0.0
        %1988 = vmatpush1.msra.mxu0 0.0
        %1989 = vmatprep.subr.mxu0 0.0
        %1990 = vmatpush1.msra.mxu0 0.0
        %1991 = vmatprep.subr.mxu0 0.0
        %1992 = vmatpush1.msra.mxu0 0.0
        %1993 = vmatprep.subr.mxu0 0.0
        %1994 = vmatpush1.msra.mxu0 0.0
        %1995 = vmatprep.mubr.f32.mxu0 0.0
        %1996 = vmatmul.mubr.f32.gmra.mrb[0].mxu0 %v1929
        %v1997 = vpop.f32.mrb[0].mxu0
        %v1998 = vadd.f32 0.0, %v1997
        %v1999 = vpop.f32.mrb[0].mxu0
        %2000 = vdwg.mxu0
        %v2002 = vsel %vm1499, %v1853, 0
        %2004 = vmatprep.subr.mxu0 0.0
        %2005 = vmatpush1.msra.mxu0 %v1497
        %2006 = vmatprep.subr.mxu0 0.0
        %2007 = vmatpush1.msra.mxu0 0.0
        %2008 = vmatprep.subr.mxu0 0.0
        %2009 = vmatpush1.msra.mxu0 0.0
        %2010 = vmatprep.subr.mxu0 0.0
        %2011 = vmatpush1.msra.mxu0 0.0
        %2012 = vmatprep.subr.mxu0 0.0
        %2013 = vmatpush1.msra.mxu0 0.0
        %2014 = vmatprep.subr.mxu0 0.0
        %2015 = vmatpush1.msra.mxu0 0.0
        %2016 = vmatprep.subr.mxu0 0.0
        %2017 = vmatpush1.msra.mxu0 0.0
        %2018 = vmatprep.subr.mxu0 0.0
        %2019 = vmatpush1.msra.mxu0 0.0
        %2020 = vmatprep.subr.mxu0 0.0
        %2021 = vmatpush1.msra.mxu0 0.0
        %2022 = vmatprep.subr.mxu0 0.0
        %2023 = vmatpush1.msra.mxu0 0.0
        %2024 = vmatprep.subr.mxu0 0.0
        %2025 = vmatpush1.msra.mxu0 0.0
        %2026 = vmatprep.subr.mxu0 0.0
        %2027 = vmatpush1.msra.mxu0 0.0
        %2028 = vmatprep.subr.mxu0 0.0
        %2029 = vmatpush1.msra.mxu0 0.0
        %2030 = vmatprep.subr.mxu0 0.0
        %2031 = vmatpush1.msra.mxu0 0.0
        %2032 = vmatprep.subr.mxu0 0.0
        %2033 = vmatpush1.msra.mxu0 0.0
        %2034 = vmatprep.subr.mxu0 0.0
        %2035 = vmatpush1.msra.mxu0 0.0
        %2036 = vmatprep.subr.mxu0 0.0
        %2037 = vmatpush1.msra.mxu0 0.0
        %2038 = vmatprep.subr.mxu0 0.0
        %2039 = vmatpush1.msra.mxu0 0.0
        %2040 = vmatprep.subr.mxu0 0.0
        %2041 = vmatpush1.msra.mxu0 0.0
        %2042 = vmatprep.subr.mxu0 0.0
        %2043 = vmatpush1.msra.mxu0 0.0
        %2044 = vmatprep.subr.mxu0 0.0
        %2045 = vmatpush1.msra.mxu0 0.0
        %2046 = vmatprep.subr.mxu0 0.0
        %2047 = vmatpush1.msra.mxu0 0.0
        %2048 = vmatprep.subr.mxu0 0.0
        %2049 = vmatpush1.msra.mxu0 0.0
        %2050 = vmatprep.subr.mxu0 0.0
        %2051 = vmatpush1.msra.mxu0 0.0
        %2052 = vmatprep.subr.mxu0 0.0
        %2053 = vmatpush1.msra.mxu0 0.0
        %2054 = vmatprep.subr.mxu0 0.0
        %2055 = vmatpush1.msra.mxu0 0.0
        %2056 = vmatprep.subr.mxu0 0.0
        %2057 = vmatpush1.msra.mxu0 0.0
        %2058 = vmatprep.subr.mxu0 0.0
        %2059 = vmatpush1.msra.mxu0 0.0
        %2060 = vmatprep.subr.mxu0 0.0
        %2061 = vmatpush1.msra.mxu0 0.0
        %2062 = vmatprep.subr.mxu0 0.0
        %2063 = vmatpush1.msra.mxu0 0.0
        %2064 = vmatprep.subr.mxu0 0.0
        %2065 = vmatpush1.msra.mxu0 0.0
        %2066 = vmatprep.subr.mxu0 0.0
        %2067 = vmatpush1.msra.mxu0 0.0
        %2068 = vmatprep.mubr.f32.mxu0 0.0
        %2069 = vmatmul.mubr.f32.gmra.mrb[0].mxu0 %v2002
        %v2070 = vpop.f32.mrb[0].mxu0
        %v2071 = vadd.f32 0.0, %v2070
        %v2072 = vpop.f32.mrb[0].mxu0
        %2073 = vdwg.mxu0
        %v2075 = vsel %vm1499, %v1854, 0
        %2077 = vmatprep.subr.mxu0 0.0
        %2078 = vmatpush1.msra.mxu0 %v1498
        %2079 = vmatprep.subr.mxu0 0.0
        %2080 = vmatpush1.msra.mxu0 0.0
        %2081 = vmatprep.subr.mxu0 0.0
        %2082 = vmatpush1.msra.mxu0 0.0
        %2083 = vmatprep.subr.mxu0 0.0
        %2084 = vmatpush1.msra.mxu0 0.0
        %2085 = vmatprep.subr.mxu0 0.0
        %2086 = vmatpush1.msra.mxu0 0.0
        %2087 = vmatprep.subr.mxu0 0.0
        %2088 = vmatpush1.msra.mxu0 0.0
        %2089 = vmatprep.subr.mxu0 0.0
        %2090 = vmatpush1.msra.mxu0 0.0
        %2091 = vmatprep.subr.mxu0 0.0
        %2092 = vmatpush1.msra.mxu0 0.0
        %2093 = vmatprep.subr.mxu0 0.0
        %2094 = vmatpush1.msra.mxu0 0.0
        %2095 = vmatprep.subr.mxu0 0.0
        %2096 = vmatpush1.msra.mxu0 0.0
        %2097 = vmatprep.subr.mxu0 0.0
        %2098 = vmatpush1.msra.mxu0 0.0
        %2099 = vmatprep.subr.mxu0 0.0
        %2100 = vmatpush1.msra.mxu0 0.0
        %2101 = vmatprep.subr.mxu0 0.0
        %2102 = vmatpush1.msra.mxu0 0.0
        %2103 = vmatprep.subr.mxu0 0.0
        %2104 = vmatpush1.msra.mxu0 0.0
        %2105 = vmatprep.subr.mxu0 0.0
        %2106 = vmatpush1.msra.mxu0 0.0
        %2107 = vmatprep.subr.mxu0 0.0
        %2108 = vmatpush1.msra.mxu0 0.0
        %2109 = vmatprep.subr.mxu0 0.0
        %2110 = vmatpush1.msra.mxu0 0.0
        %2111 = vmatprep.subr.mxu0 0.0
        %2112 = vmatpush1.msra.mxu0 0.0
        %2113 = vmatprep.subr.mxu0 0.0
        %2114 = vmatpush1.msra.mxu0 0.0
        %2115 = vmatprep.subr.mxu0 0.0
        %2116 = vmatpush1.msra.mxu0 0.0
        %2117 = vmatprep.subr.mxu0 0.0
        %2118 = vmatpush1.msra.mxu0 0.0
        %2119 = vmatprep.subr.mxu0 0.0
        %2120 = vmatpush1.msra.mxu0 0.0
        %2121 = vmatprep.subr.mxu0 0.0
        %2122 = vmatpush1.msra.mxu0 0.0
        %2123 = vmatprep.subr.mxu0 0.0
        %2124 = vmatpush1.msra.mxu0 0.0
        %2125 = vmatprep.subr.mxu0 0.0
        %2126 = vmatpush1.msra.mxu0 0.0
        %2127 = vmatprep.subr.mxu0 0.0
        %2128 = vmatpush1.msra.mxu0 0.0
        %2129 = vmatprep.subr.mxu0 0.0
        %2130 = vmatpush1.msra.mxu0 0.0
        %2131 = vmatprep.subr.mxu0 0.0
        %2132 = vmatpush1.msra.mxu0 0.0
        %2133 = vmatprep.subr.mxu0 0.0
        %2134 = vmatpush1.msra.mxu0 0.0
        %2135 = vmatprep.subr.mxu0 0.0
        %2136 = vmatpush1.msra.mxu0 0.0
        %2137 = vmatprep.subr.mxu0 0.0
        %2138 = vmatpush1.msra.mxu0 0.0
        %2139 = vmatprep.subr.mxu0 0.0
        %2140 = vmatpush1.msra.mxu0 0.0
        %2141 = vmatprep.mubr.f32.mxu0 0.0
        %2142 = vmatmul.mubr.f32.gmra.mrb[0].mxu0 %v2075
        %v2143 = vpop.f32.mrb[0].mxu0
        %v2144 = vadd.f32 0.0, %v2143
        %v2145 = vpop.f32.mrb[0].mxu0
        %2146 = vdwg.mxu0
        %v2147 = vcombine.low %v1925, %v2071
        %v2148 = vcombine.high %v1925, %v2071
        %v2150 = vunpack.c.l.s4 1983009808
        %v2151 = vunpack.c.0.s8 %v2150
        %v2152 = vlaneseq
        %v2153 = vshrl.u32 %v2152, 7
        %v2154 = vsub.s32 %v2151, %v2153
        %v2155 = vrot.slane %v2147, %v2154
        %v2157 = vunpack.c.l.s4 1983009808
        %v2158 = vunpack.c.0.s8 %v2157
        %v2159 = vlaneseq
        %v2160 = vshrl.u32 %v2159, 7
        %v2161 = vsub.s32 %v2158, %v2160
        %v2162 = vrot.slane %v2148, %v2161
        %v2163 = vcombine.low %v1998, %v2144
        %v2164 = vcombine.high %v1998, %v2144
        %v2166 = vunpack.c.l.s4 1983009808
        %v2167 = vunpack.c.0.s8 %v2166
        %v2168 = vlaneseq
        %v2169 = vshrl.u32 %v2168, 7
        %v2170 = vsub.s32 %v2167, %v2169
        %v2171 = vrot.slane %v2163, %v2170
        %v2173 = vunpack.c.l.s4 1983009808
        %v2174 = vunpack.c.0.s8 %v2173
        %v2175 = vlaneseq
        %v2176 = vshrl.u32 %v2175, 7
        %v2177 = vsub.s32 %v2174, %v2176
        %v2178 = vrot.slane %v2164, %v2177
        %v2179 = vcombine.low %v2155, %v2171
        %v2180 = vcombine.high %v2155, %v2171
        %v2182 = vunpack.c.l.s4 1934713408
        %v2183 = vunpack.c.0.s8 %v2182
        %v2184 = vlaneseq
        %v2185 = vshrl.u32 %v2184, 7
        %v2186 = vsub.s32 %v2183, %v2185
        %v2187 = vrot.slane %v2179, %v2186
        %v2189 = vunpack.c.l.s4 1934713408
        %v2190 = vunpack.c.0.s8 %v2189
        %v2191 = vlaneseq
        %v2192 = vshrl.u32 %v2191, 7
        %v2193 = vsub.s32 %v2190, %v2192
        %v2194 = vrot.slane %v2180, %v2193
        %v2195 = vcombine.low %v2162, %v2178
        %v2196 = vcombine.high %v2162, %v2178
        %v2198 = vunpack.c.l.s4 1934713408
        %v2199 = vunpack.c.0.s8 %v2198
        %v2200 = vlaneseq
        %v2201 = vshrl.u32 %v2200, 7
        %v2202 = vsub.s32 %v2199, %v2201
        %v2203 = vrot.slane %v2195, %v2202
        %v2205 = vunpack.c.l.s4 1934713408
        %v2206 = vunpack.c.0.s8 %v2205
        %v2207 = vlaneseq
        %v2208 = vshrl.u32 %v2207, 7
        %v2209 = vsub.s32 %v2206, %v2208
        %v2210 = vrot.slane %v2196, %v2209
        %v2211 = vcombine.high %v2187, 0.0
        %v2212 = vcombine.high %v2194, 0.0
        %v2213 = vcombine.high %v2203, 0.0
        %v2214 = vcombine.high %v2210, 0.0
        %v2215 = vcombine.low %v2187, %v2194
        %v2217 = vunpack.c.l.s4 1983009808
        %v2218 = vunpack.c.0.s8 %v2217
        %v2219 = vlaneseq
        %v2220 = vshrl.u32 %v2219, 7
        %v2221 = vsub.s32 %v2218, %v2220
        %v2222 = vrot.slane %v2215, %v2221
        %v2223 = vcombine.low %v2211, %v2212
        %v2225 = vunpack.c.l.s4 1983009808
        %v2226 = vunpack.c.0.s8 %v2225
        %v2227 = vlaneseq
        %v2228 = vshrl.u32 %v2227, 7
        %v2229 = vsub.s32 %v2226, %v2228
        %v2230 = vrot.slane %v2223, %v2229
        %v2231 = vcombine.low %v2203, %v2210
        %v2233 = vunpack.c.l.s4 1983009808
        %v2234 = vunpack.c.0.s8 %v2233
        %v2235 = vlaneseq
        %v2236 = vshrl.u32 %v2235, 7
        %v2237 = vsub.s32 %v2234, %v2236
        %v2238 = vrot.slane %v2231, %v2237
        %v2239 = vcombine.low %v2213, %v2214
        %v2241 = vunpack.c.l.s4 1983009808
        %v2242 = vunpack.c.0.s8 %v2241
        %v2243 = vlaneseq
        %v2244 = vshrl.u32 %v2243, 7
        %v2245 = vsub.s32 %v2242, %v2244
        %v2246 = vrot.slane %v2239, %v2245
        %v2247 = vcombine.low %v2222, %v2230
        %v2248 = vcombine.high %v2222, %v2230
        %v2250 = vunpack.c.l.s4 1934713408
        %v2251 = vunpack.c.0.s8 %v2250
        %v2252 = vlaneseq
        %v2253 = vshrl.u32 %v2252, 7
        %v2254 = vsub.s32 %v2251, %v2253
        %v2255 = vrot.slane %v2247, %v2254
        %v2257 = vunpack.c.l.s4 1934713408
        %v2258 = vunpack.c.0.s8 %v2257
        %v2259 = vlaneseq
        %v2260 = vshrl.u32 %v2259, 7
        %v2261 = vsub.s32 %v2258, %v2260
        %v2262 = vrot.slane %v2248, %v2261
        %v2263 = vcombine.low %v2238, %v2246
        %v2264 = vcombine.high %v2238, %v2246
        %v2266 = vunpack.c.l.s4 1934713408
        %v2267 = vunpack.c.0.s8 %v2266
        %v2268 = vlaneseq
        %v2269 = vshrl.u32 %v2268, 7
        %v2270 = vsub.s32 %v2267, %v2269
        %v2271 = vrot.slane %v2263, %v2270
        %v2273 = vunpack.c.l.s4 1934713408
        %v2274 = vunpack.c.0.s8 %v2273
        %v2275 = vlaneseq
        %v2276 = vshrl.u32 %v2275, 7
        %v2277 = vsub.s32 %v2274, %v2276
        %v2278 = vrot.slane %v2264, %v2277
        %v2279 = vcombine.low %v2255, %v2271
        %v2280 = vcombine.high %v2255, %v2271
        %v2281 = vcombine.low %v2262, %v2278
        %v2282 = vcombine.high %v2262, %v2278
        %2284 = vrot.lane.b32.xlu0 %v2280, 8
        %v2285 = vpop.permute.xlu0 %2284
        %2288 = vrot.lane.b32.xlu0 %v2281, 16
        %v2289 = vpop.permute.xlu0 %2288
        %2292 = vrot.lane.b32.xlu0 %v2282, 24
        %v2293 = vpop.permute.xlu0 %2292
        %v2295 = vsel %vm1499, %v2279, %v2285
        %vm2296 = vcmask 130048
        %v2297 = vsel %vm2296, %v2295, %v2289
        %vm2298 = vcmask 195584
        %v2299 = vsel %vm2298, %v2297, %v2293
        %v2301 = vsel %vm936, %v2299, 0
        %2303 = vmatprep.subr.mxu0 0.0
        %2304 = vmatpush1.msra.mxu0 %v1043
        %2305 = vmatprep.subr.mxu0 0.0
        %2306 = vmatpush1.msra.mxu0 %v1044
        %2307 = vmatprep.subr.mxu0 0.0
        %2308 = vmatpush1.msra.mxu0 %v1045
        %2309 = vmatprep.subr.mxu0 0.0
        %2310 = vmatpush1.msra.mxu0 %v1046
        %2311 = vmatprep.subr.mxu0 0.0
        %2312 = vmatpush1.msra.mxu0 0.0
        %2313 = vmatprep.subr.mxu0 0.0
        %2314 = vmatpush1.msra.mxu0 0.0
        %2315 = vmatprep.subr.mxu0 0.0
        %2316 = vmatpush1.msra.mxu0 0.0
        %2317 = vmatprep.subr.mxu0 0.0
        %2318 = vmatpush1.msra.mxu0 0.0
        %2319 = vmatprep.subr.mxu0 0.0
        %2320 = vmatpush1.msra.mxu0 0.0
        %2321 = vmatprep.subr.mxu0 0.0
        %2322 = vmatpush1.msra.mxu0 0.0
        %2323 = vmatprep.subr.mxu0 0.0
        %2324 = vmatpush1.msra.mxu0 0.0
        %2325 = vmatprep.subr.mxu0 0.0
        %2326 = vmatpush1.msra.mxu0 0.0
        %2327 = vmatprep.subr.mxu0 0.0
        %2328 = vmatpush1.msra.mxu0 0.0
        %2329 = vmatprep.subr.mxu0 0.0
        %2330 = vmatpush1.msra.mxu0 0.0
        %2331 = vmatprep.subr.mxu0 0.0
        %2332 = vmatpush1.msra.mxu0 0.0
        %2333 = vmatprep.subr.mxu0 0.0
        %2334 = vmatpush1.msra.mxu0 0.0
        %2335 = vmatprep.subr.mxu0 0.0
        %2336 = vmatpush1.msra.mxu0 0.0
        %2337 = vmatprep.subr.mxu0 0.0
        %2338 = vmatpush1.msra.mxu0 0.0
        %2339 = vmatprep.subr.mxu0 0.0
        %2340 = vmatpush1.msra.mxu0 0.0
        %2341 = vmatprep.subr.mxu0 0.0
        %2342 = vmatpush1.msra.mxu0 0.0
        %2343 = vmatprep.subr.mxu0 0.0
        %2344 = vmatpush1.msra.mxu0 0.0
        %2345 = vmatprep.subr.mxu0 0.0
        %2346 = vmatpush1.msra.mxu0 0.0
        %2347 = vmatprep.subr.mxu0 0.0
        %2348 = vmatpush1.msra.mxu0 0.0
        %2349 = vmatprep.subr.mxu0 0.0
        %2350 = vmatpush1.msra.mxu0 0.0
        %2351 = vmatprep.subr.mxu0 0.0
        %2352 = vmatpush1.msra.mxu0 0.0
        %2353 = vmatprep.subr.mxu0 0.0
        %2354 = vmatpush1.msra.mxu0 0.0
        %2355 = vmatprep.subr.mxu0 0.0
        %2356 = vmatpush1.msra.mxu0 0.0
        %2357 = vmatprep.subr.mxu0 0.0
        %2358 = vmatpush1.msra.mxu0 0.0
        %2359 = vmatprep.subr.mxu0 0.0
        %2360 = vmatpush1.msra.mxu0 0.0
        %2361 = vmatprep.subr.mxu0 0.0
        %2362 = vmatpush1.msra.mxu0 0.0
        %2363 = vmatprep.subr.mxu0 0.0
        %2364 = vmatpush1.msra.mxu0 0.0
        %2365 = vmatprep.subr.mxu0 0.0
        %2366 = vmatpush1.msra.mxu0 0.0
        %2367 = vmatprep.mubr.f32.mxu0 0.0
        %2368 = vmatmul.mubr.f32.gmra.mrb[0].mxu0 %v2301
        %v2369 = vpop.f32.mrb[0].mxu0
        %v2370 = vadd.f32 %v964, %v2369
        %v2371 = vpop.f32.mrb[0].mxu0
        %2372 = vdwg.mxu0
        %v2373 = vsel %vm936, %v2370, 0.0
        %2374 = vadd.xlane.f32.xlu0 %v2373
        %v2375 = vpop.xlane.xlu0 %2374
        %v2376 = vmul.f32 %v2375, %v940
        %v2377 = vsub.f32 %v2370, %v2376
        %v2378 = vmul.f32 %v2377, %v2377
        %v2379 = vsel %vm936, %v2378, 0.0
        %2380 = vadd.xlane.f32.xlu0 %v2379
        %v2381 = vpop.xlane.xlu0 %2380
        %v2382 = vmul.f32 %v2381, %v940
        %v2383 = vadd.f32 %v2382, 1e-06
        %v2384 = vrsqrt.pop %v2383
        %v2385 = vmul.f32 %v2377, %v2384
        %v2387 = vlaneseq
        %v2388 = vshrl.u32 %v2387, 7
        %v2389 = vsub.s32 0, %v2388
        %v2390 = vrot.slane %v1047, %v2389
        %v2392 = vmul.f32 %v2385, %v2390
        %v2394 = vlaneseq
        %v2395 = vshrl.u32 %v2394, 7
        %v2396 = vsub.s32 0, %v2395
        %v2397 = vrot.slane %v1048, %v2396
        %v2399 = vadd.f32 %v2392, %v2397
        %v2400 = vld [vmem:[%s812] sm:$0xff]
        %v2401 = vld [vmem:[%s11] sm:$0xff]
        %v2402 = vld [vmem:[%s11 + $0x8] sm:$0xff]
        %v2403 = vld [vmem:[%s11 + $0x10] sm:$0xff]
        %v2404 = vld [vmem:[%s11 + $0x18] sm:$0xff]
        %v2406 = vsel %vm936, %v2399, 0
        %2408 = vmatprep.subr.mxu0 0.0
        %2409 = vmatpush1.msra.mxu0 %v2401
        %2410 = vmatprep.subr.mxu0 0.0
        %2411 = vmatpush1.msra.mxu0 %v2402
        %2412 = vmatprep.subr.mxu0 0.0
        %2413 = vmatpush1.msra.mxu0 %v2403
        %2414 = vmatprep.subr.mxu0 0.0
        %2415 = vmatpush1.msra.mxu0 %v2404
        %2416 = vmatprep.subr.mxu0 0.0
        %2417 = vmatpush1.msra.mxu0 0.0
        %2418 = vmatprep.subr.mxu0 0.0
        %2419 = vmatpush1.msra.mxu0 0.0
        %2420 = vmatprep.subr.mxu0 0.0
        %2421 = vmatpush1.msra.mxu0 0.0
        %2422 = vmatprep.subr.mxu0 0.0
        %2423 = vmatpush1.msra.mxu0 0.0
        %2424 = vmatprep.subr.mxu0 0.0
        %2425 = vmatpush1.msra.mxu0 0.0
        %2426 = vmatprep.subr.mxu0 0.0
        %2427 = vmatpush1.msra.mxu0 0.0
        %2428 = vmatprep.subr.mxu0 0.0
        %2429 = vmatpush1.msra.mxu0 0.0
        %2430 = vmatprep.subr.mxu0 0.0
        %2431 = vmatpush1.msra.mxu0 0.0
        %2432 = vmatprep.subr.mxu0 0.0
        %2433 = vmatpush1.msra.mxu0 0.0
        %2434 = vmatprep.subr.mxu0 0.0
        %2435 = vmatpush1.msra.mxu0 0.0
        %2436 = vmatprep.subr.mxu0 0.0
        %2437 = vmatpush1.msra.mxu0 0.0
        %2438 = vmatprep.subr.mxu0 0.0
        %2439 = vmatpush1.msra.mxu0 0.0
        %2440 = vmatprep.subr.mxu0 0.0
        %2441 = vmatpush1.msra.mxu0 0.0
        %2442 = vmatprep.subr.mxu0 0.0
        %2443 = vmatpush1.msra.mxu0 0.0
        %2444 = vmatprep.subr.mxu0 0.0
        %2445 = vmatpush1.msra.mxu0 0.0
        %2446 = vmatprep.subr.mxu0 0.0
        %2447 = vmatpush1.msra.mxu0 0.0
        %2448 = vmatprep.subr.mxu0 0.0
        %2449 = vmatpush1.msra.mxu0 0.0
        %2450 = vmatprep.subr.mxu0 0.0
        %2451 = vmatpush1.msra.mxu0 0.0
        %2452 = vmatprep.subr.mxu0 0.0
        %2453 = vmatpush1.msra.mxu0 0.0
        %2454 = vmatprep.subr.mxu0 0.0
        %2455 = vmatpush1.msra.mxu0 0.0
        %2456 = vmatprep.subr.mxu0 0.0
        %2457 = vmatpush1.msra.mxu0 0.0
        %2458 = vmatprep.subr.mxu0 0.0
        %2459 = vmatpush1.msra.mxu0 0.0
        %2460 = vmatprep.subr.mxu0 0.0
        %2461 = vmatpush1.msra.mxu0 0.0
        %2462 = vmatprep.subr.mxu0 0.0
        %2463 = vmatpush1.msra.mxu0 0.0
        %2464 = vmatprep.subr.mxu0 0.0
        %2465 = vmatpush1.msra.mxu0 0.0
        %2466 = vmatprep.subr.mxu0 0.0
        %2467 = vmatpush1.msra.mxu0 0.0
        %2468 = vmatprep.subr.mxu0 0.0
        %2469 = vmatpush1.msra.mxu0 0.0
        %2470 = vmatprep.subr.mxu0 0.0
        %2471 = vmatpush1.msra.mxu0 0.0
        %2472 = vmatprep.mubr.f32.mxu0 0.0
        %2473 = vmatmul.mubr.f32.gmra.mrb[0].mxu0 %v2406
        %v2474 = vpop.f32.mrb[0].mxu0
        %v2475 = vadd.f32 0.0, %v2474
        %v2476 = vpop.f32.mrb[0].mxu0
        %2477 = vdwg.mxu0
        %v2478 = vld [vmem:[%s12] sm:$0xff]
        %v2479 = vld [vmem:[%s12 + $0x8] sm:$0xff]
        %v2480 = vld [vmem:[%s12 + $0x10] sm:$0xff]
        %v2481 = vld [vmem:[%s12 + $0x18] sm:$0xff]
        %v2483 = vsel %vm936, %v2400, 0
        %2485 = vmatprep.subr.mxu0 0.0
        %2486 = vmatpush1.msra.mxu0 %v2478
        %2487 = vmatprep.subr.mxu0 0.0
        %2488 = vmatpush1.msra.mxu0 %v2479
        %2489 = vmatprep.subr.mxu0 0.0
        %2490 = vmatpush1.msra.mxu0 %v2480
        %2491 = vmatprep.subr.mxu0 0.0
        %2492 = vmatpush1.msra.mxu0 %v2481
        %2493 = vmatprep.subr.mxu0 0.0
        %2494 = vmatpush1.msra.mxu0 0.0
        %2495 = vmatprep.subr.mxu0 0.0
        %2496 = vmatpush1.msra.mxu0 0.0
        %2497 = vmatprep.subr.mxu0 0.0
        %2498 = vmatpush1.msra.mxu0 0.0
        %2499 = vmatprep.subr.mxu0 0.0
        %2500 = vmatpush1.msra.mxu0 0.0
        %2501 = vmatprep.subr.mxu0 0.0
        %2502 = vmatpush1.msra.mxu0 0.0
        %2503 = vmatprep.subr.mxu0 0.0
        %2504 = vmatpush1.msra.mxu0 0.0
        %2505 = vmatprep.subr.mxu0 0.0
        %2506 = vmatpush1.msra.mxu0 0.0
        %2507 = vmatprep.subr.mxu0 0.0
        %2508 = vmatpush1.msra.mxu0 0.0
        %2509 = vmatprep.subr.mxu0 0.0
        %2510 = vmatpush1.msra.mxu0 0.0
        %2511 = vmatprep.subr.mxu0 0.0
        %2512 = vmatpush1.msra.mxu0 0.0
        %2513 = vmatprep.subr.mxu0 0.0
        %2514 = vmatpush1.msra.mxu0 0.0
        %2515 = vmatprep.subr.mxu0 0.0
        %2516 = vmatpush1.msra.mxu0 0.0
        %2517 = vmatprep.subr.mxu0 0.0
        %2518 = vmatpush1.msra.mxu0 0.0
        %2519 = vmatprep.subr.mxu0 0.0
        %2520 = vmatpush1.msra.mxu0 0.0
        %2521 = vmatprep.subr.mxu0 0.0
        %2522 = vmatpush1.msra.mxu0 0.0
        %2523 = vmatprep.subr.mxu0 0.0
        %2524 = vmatpush1.msra.mxu0 0.0
        %2525 = vmatprep.subr.mxu0 0.0
        %2526 = vmatpush1.msra.mxu0 0.0
        %2527 = vmatprep.subr.mxu0 0.0
        %2528 = vmatpush1.msra.mxu0 0.0
        %2529 = vmatprep.subr.mxu0 0.0
        %2530 = vmatpush1.msra.mxu0 0.0
        %2531 = vmatprep.subr.mxu0 0.0
        %2532 = vmatpush1.msra.mxu0 0.0
        %2533 = vmatprep.subr.mxu0 0.0
        %2534 = vmatpush1.msra.mxu0 0.0
        %2535 = vmatprep.subr.mxu0 0.0
        %2536 = vmatpush1.msra.mxu0 0.0
        %2537 = vmatprep.subr.mxu0 0.0
        %2538 = vmatpush1.msra.mxu0 0.0
        %2539 = vmatprep.subr.mxu0 0.0
        %2540 = vmatpush1.msra.mxu0 0.0
        %2541 = vmatprep.subr.mxu0 0.0
        %2542 = vmatpush1.msra.mxu0 0.0
        %2543 = vmatprep.subr.mxu0 0.0
        %2544 = vmatpush1.msra.mxu0 0.0
        %2545 = vmatprep.subr.mxu0 0.0
        %2546 = vmatpush1.msra.mxu0 0.0
        %2547 = vmatprep.subr.mxu0 0.0
        %2548 = vmatpush1.msra.mxu0 0.0
        %2549 = vmatprep.mubr.f32.mxu0 0.0
        %2550 = vmatmul.mubr.f32.gmra.mrb[0].mxu0 %v2483
        %v2551 = vpop.f32.mrb[0].mxu0
        %v2552 = vadd.f32 0.0, %v2551
        %v2553 = vpop.f32.mrb[0].mxu0
        %2554 = vdwg.mxu0
        %v2555 = vld [vmem:[%s820] sm:$0x1]
        %v2556 = vld [vmem:[#allocation17] sm:$0xff]
        %v2557 = vld [vmem:[#allocation17 + $0x8] sm:$0xff]
        %v2558 = vld [vmem:[#allocation17 + $0x10] sm:$0xff]
        %v2559 = vld [vmem:[#allocation17 + $0x18] sm:$0xff]
        %v2560 = vld [vmem:[#allocation19] sm:$0x1]
        %v2561 = vld [vmem:[#allocation20] sm:$0x1]
        %v2562 = vmul.f32 %v2475, 0.35355338
        %2564 = vrot.lane.b32.xlu0 %v2562, 120
        %v2565 = vpop.permute.xlu0 %2564
        %2567 = vrot.lane.b32.xlu0 %v2562, 112
        %v2568 = vpop.permute.xlu0 %2567
        %2570 = vrot.lane.b32.xlu0 %v2562, 104
        %v2571 = vpop.permute.xlu0 %2570
        %v2573 = vcombine.low %v2562, %v2568
        %v2574 = vcombine.high %v2562, %v2568
        %v2576 = vunpack.c.l.s4 1983009808
        %v2577 = vunpack.c.0.s8 %v2576
        %v2578 = vlaneseq
        %v2579 = vshrl.u32 %v2578, 7
        %v2580 = vsub.s32 %v2577, %v2579
        %v2581 = vrot.slane %v2573, %v2580
        %v2583 = vunpack.c.l.s4 1983009808
        %v2584 = vunpack.c.0.s8 %v2583
        %v2585 = vlaneseq
        %v2586 = vshrl.u32 %v2585, 7
        %v2587 = vsub.s32 %v2584, %v2586
        %v2588 = vrot.slane %v2574, %v2587
        %v2589 = vcombine.low %v2565, %v2571
        %v2590 = vcombine.high %v2565, %v2571
        %v2592 = vunpack.c.l.s4 1983009808
        %v2593 = vunpack.c.0.s8 %v2592
        %v2594 = vlaneseq
        %v2595 = vshrl.u32 %v2594, 7
        %v2596 = vsub.s32 %v2593, %v2595
        %v2597 = vrot.slane %v2589, %v2596
        %v2599 = vunpack.c.l.s4 1983009808
        %v2600 = vunpack.c.0.s8 %v2599
        %v2601 = vlaneseq
        %v2602 = vshrl.u32 %v2601, 7
        %v2603 = vsub.s32 %v2600, %v2602
        %v2604 = vrot.slane %v2590, %v2603
        %v2605 = vcombine.low %v2581, %v2597
        %v2606 = vcombine.high %v2581, %v2597
        %v2608 = vunpack.c.l.s4 1934713408
        %v2609 = vunpack.c.0.s8 %v2608
        %v2610 = vlaneseq
        %v2611 = vshrl.u32 %v2610, 7
        %v2612 = vsub.s32 %v2609, %v2611
        %v2613 = vrot.slane %v2605, %v2612
        %v2615 = vunpack.c.l.s4 1934713408
        %v2616 = vunpack.c.0.s8 %v2615
        %v2617 = vlaneseq
        %v2618 = vshrl.u32 %v2617, 7
        %v2619 = vsub.s32 %v2616, %v2618
        %v2620 = vrot.slane %v2606, %v2619
        %v2621 = vcombine.low %v2588, %v2604
        %v2622 = vcombine.high %v2588, %v2604
        %v2624 = vunpack.c.l.s4 1934713408
        %v2625 = vunpack.c.0.s8 %v2624
        %v2626 = vlaneseq
        %v2627 = vshrl.u32 %v2626, 7
        %v2628 = vsub.s32 %v2625, %v2627
        %v2629 = vrot.slane %v2621, %v2628
        %v2631 = vunpack.c.l.s4 1934713408
        %v2632 = vunpack.c.0.s8 %v2631
        %v2633 = vlaneseq
        %v2634 = vshrl.u32 %v2633, 7
        %v2635 = vsub.s32 %v2632, %v2634
        %v2636 = vrot.slane %v2622, %v2635
        %v2637 = vcombine.high %v2613, 0.0
        %v2638 = vcombine.high %v2620, 0.0
        %v2639 = vcombine.high %v2629, 0.0
        %v2640 = vcombine.high %v2636, 0.0
        %v2641 = vcombine.low %v2613, %v2620
        %v2643 = vunpack.c.l.s4 1983009808
        %v2644 = vunpack.c.0.s8 %v2643
        %v2645 = vlaneseq
        %v2646 = vshrl.u32 %v2645, 7
        %v2647 = vsub.s32 %v2644, %v2646
        %v2648 = vrot.slane %v2641, %v2647
        %v2649 = vcombine.low %v2637, %v2638
        %v2651 = vunpack.c.l.s4 1983009808
        %v2652 = vunpack.c.0.s8 %v2651
        %v2653 = vlaneseq
        %v2654 = vshrl.u32 %v2653, 7
        %v2655 = vsub.s32 %v2652, %v2654
        %v2656 = vrot.slane %v2649, %v2655
        %v2657 = vcombine.low %v2629, %v2636
        %v2659 = vunpack.c.l.s4 1983009808
        %v2660 = vunpack.c.0.s8 %v2659
        %v2661 = vlaneseq
        %v2662 = vshrl.u32 %v2661, 7
        %v2663 = vsub.s32 %v2660, %v2662
        %v2664 = vrot.slane %v2657, %v2663
        %v2665 = vcombine.low %v2639, %v2640
        %v2667 = vunpack.c.l.s4 1983009808
        %v2668 = vunpack.c.0.s8 %v2667
        %v2669 = vlaneseq
        %v2670 = vshrl.u32 %v2669, 7
        %v2671 = vsub.s32 %v2668, %v2670
        %v2672 = vrot.slane %v2665, %v2671
        %v2673 = vcombine.low %v2648, %v2656
        %v2674 = vcombine.high %v2648, %v2656
        %v2676 = vunpack.c.l.s4 1934713408
        %v2677 = vunpack.c.0.s8 %v2676
        %v2678 = vlaneseq
        %v2679 = vshrl.u32 %v2678, 7
        %v2680 = vsub.s32 %v2677, %v2679
        %v2681 = vrot.slane %v2673, %v2680
        %v2683 = vunpack.c.l.s4 1934713408
        %v2684 = vunpack.c.0.s8 %v2683
        %v2685 = vlaneseq
        %v2686 = vshrl.u32 %v2685, 7
        %v2687 = vsub.s32 %v2684, %v2686
        %v2688 = vrot.slane %v2674, %v2687
        %v2689 = vcombine.low %v2664, %v2672
        %v2690 = vcombine.high %v2664, %v2672
        %v2692 = vunpack.c.l.s4 1934713408
        %v2693 = vunpack.c.0.s8 %v2692
        %v2694 = vlaneseq
        %v2695 = vshrl.u32 %v2694, 7
        %v2696 = vsub.s32 %v2693, %v2695
        %v2697 = vrot.slane %v2689, %v2696
        %v2699 = vunpack.c.l.s4 1934713408
        %v2700 = vunpack.c.0.s8 %v2699
        %v2701 = vlaneseq
        %v2702 = vshrl.u32 %v2701, 7
        %v2703 = vsub.s32 %v2700, %v2702
        %v2704 = vrot.slane %v2690, %v2703
        %v2705 = vcombine.low %v2681, %v2697
        %v2706 = vcombine.high %v2681, %v2697
        %v2707 = vcombine.low %v2688, %v2704
        %v2708 = vcombine.high %v2688, %v2704
        %2710 = vrot.lane.b32.xlu0 %v2552, 120
        %v2711 = vpop.permute.xlu0 %2710
        %2713 = vrot.lane.b32.xlu0 %v2552, 112
        %v2714 = vpop.permute.xlu0 %2713
        %2716 = vrot.lane.b32.xlu0 %v2552, 104
        %v2717 = vpop.permute.xlu0 %2716
        %v2719 = vcombine.low %v2552, %v2714
        %v2720 = vcombine.high %v2552, %v2714
        %v2722 = vunpack.c.l.s4 1983009808
        %v2723 = vunpack.c.0.s8 %v2722
        %v2724 = vlaneseq
        %v2725 = vshrl.u32 %v2724, 7
        %v2726 = vsub.s32 %v2723, %v2725
        %v2727 = vrot.slane %v2719, %v2726
        %v2729 = vunpack.c.l.s4 1983009808
        %v2730 = vunpack.c.0.s8 %v2729
        %v2731 = vlaneseq
        %v2732 = vshrl.u32 %v2731, 7
        %v2733 = vsub.s32 %v2730, %v2732
        %v2734 = vrot.slane %v2720, %v2733
        %v2735 = vcombine.low %v2711, %v2717
        %v2736 = vcombine.high %v2711, %v2717
        %v2738 = vunpack.c.l.s4 1983009808
        %v2739 = vunpack.c.0.s8 %v2738
        %v2740 = vlaneseq
        %v2741 = vshrl.u32 %v2740, 7
        %v2742 = vsub.s32 %v2739, %v2741
        %v2743 = vrot.slane %v2735, %v2742
        %v2745 = vunpack.c.l.s4 1983009808
        %v2746 = vunpack.c.0.s8 %v2745
        %v2747 = vlaneseq
        %v2748 = vshrl.u32 %v2747, 7
        %v2749 = vsub.s32 %v2746, %v2748
        %v2750 = vrot.slane %v2736, %v2749
        %v2751 = vcombine.low %v2727, %v2743
        %v2752 = vcombine.high %v2727, %v2743
        %v2754 = vunpack.c.l.s4 1934713408
        %v2755 = vunpack.c.0.s8 %v2754
        %v2756 = vlaneseq
        %v2757 = vshrl.u32 %v2756, 7
        %v2758 = vsub.s32 %v2755, %v2757
        %v2759 = vrot.slane %v2751, %v2758
        %v2761 = vunpack.c.l.s4 1934713408
        %v2762 = vunpack.c.0.s8 %v2761
        %v2763 = vlaneseq
        %v2764 = vshrl.u32 %v2763, 7
        %v2765 = vsub.s32 %v2762, %v2764
        %v2766 = vrot.slane %v2752, %v2765
        %v2767 = vcombine.low %v2734, %v2750
        %v2768 = vcombine.high %v2734, %v2750
        %v2770 = vunpack.c.l.s4 1934713408
        %v2771 = vunpack.c.0.s8 %v2770
        %v2772 = vlaneseq
        %v2773 = vshrl.u32 %v2772, 7
        %v2774 = vsub.s32 %v2771, %v2773
        %v2775 = vrot.slane %v2767, %v2774
        %v2777 = vunpack.c.l.s4 1934713408
        %v2778 = vunpack.c.0.s8 %v2777
        %v2779 = vlaneseq
        %v2780 = vshrl.u32 %v2779, 7
        %v2781 = vsub.s32 %v2778, %v2780
        %v2782 = vrot.slane %v2768, %v2781
        %v2783 = vcombine.high %v2759, 0.0
        %v2784 = vcombine.high %v2766, 0.0
        %v2785 = vcombine.high %v2775, 0.0
        %v2786 = vcombine.high %v2782, 0.0
        %v2787 = vcombine.low %v2759, %v2766
        %v2789 = vunpack.c.l.s4 1983009808
        %v2790 = vunpack.c.0.s8 %v2789
        %v2791 = vlaneseq
        %v2792 = vshrl.u32 %v2791, 7
        %v2793 = vsub.s32 %v2790, %v2792
        %v2794 = vrot.slane %v2787, %v2793
        %v2795 = vcombine.low %v2783, %v2784
        %v2797 = vunpack.c.l.s4 1983009808
        %v2798 = vunpack.c.0.s8 %v2797
        %v2799 = vlaneseq
        %v2800 = vshrl.u32 %v2799, 7
        %v2801 = vsub.s32 %v2798, %v2800
        %v2802 = vrot.slane %v2795, %v2801
        %v2803 = vcombine.low %v2775, %v2782
        %v2805 = vunpack.c.l.s4 1983009808
        %v2806 = vunpack.c.0.s8 %v2805
        %v2807 = vlaneseq
        %v2808 = vshrl.u32 %v2807, 7
        %v2809 = vsub.s32 %v2806, %v2808
        %v2810 = vrot.slane %v2803, %v2809
        %v2811 = vcombine.low %v2785, %v2786
        %v2813 = vunpack.c.l.s4 1983009808
        %v2814 = vunpack.c.0.s8 %v2813
        %v2815 = vlaneseq
        %v2816 = vshrl.u32 %v2815, 7
        %v2817 = vsub.s32 %v2814, %v2816
        %v2818 = vrot.slane %v2811, %v2817
        %v2819 = vcombine.low %v2794, %v2802
        %v2820 = vcombine.high %v2794, %v2802
        %v2822 = vunpack.c.l.s4 1934713408
        %v2823 = vunpack.c.0.s8 %v2822
        %v2824 = vlaneseq
        %v2825 = vshrl.u32 %v2824, 7
        %v2826 = vsub.s32 %v2823, %v2825
        %v2827 = vrot.slane %v2819, %v2826
        %v2829 = vunpack.c.l.s4 1934713408
        %v2830 = vunpack.c.0.s8 %v2829
        %v2831 = vlaneseq
        %v2832 = vshrl.u32 %v2831, 7
        %v2833 = vsub.s32 %v2830, %v2832
        %v2834 = vrot.slane %v2820, %v2833
        %v2835 = vcombine.low %v2810, %v2818
        %v2836 = vcombine.high %v2810, %v2818
        %v2838 = vunpack.c.l.s4 1934713408
        %v2839 = vunpack.c.0.s8 %v2838
        %v2840 = vlaneseq
        %v2841 = vshrl.u32 %v2840, 7
        %v2842 = vsub.s32 %v2839, %v2841
        %v2843 = vrot.slane %v2835, %v2842
        %v2845 = vunpack.c.l.s4 1934713408
        %v2846 = vunpack.c.0.s8 %v2845
        %v2847 = vlaneseq
        %v2848 = vshrl.u32 %v2847, 7
        %v2849 = vsub.s32 %v2846, %v2848
        %v2850 = vrot.slane %v2836, %v2849
        %v2851 = vcombine.low %v2827, %v2843
        %v2852 = vcombine.high %v2827, %v2843
        %v2853 = vcombine.low %v2834, %v2850
        %v2854 = vcombine.high %v2834, %v2850
        %2855 = vrot.lane.b32.xlu0 %v2552, 96
        %v2856 = vpop.permute.xlu0 %2855
        %2857 = vrot.lane.b32.xlu0 %v2711, 96
        %v2858 = vpop.permute.xlu0 %2857
        %2859 = vrot.lane.b32.xlu0 %v2714, 96
        %v2860 = vpop.permute.xlu0 %2859
        %2861 = vrot.lane.b32.xlu0 %v2717, 96
        %v2862 = vpop.permute.xlu0 %2861
        %v2867 = vcombine.low %v2856, %v2860
        %v2868 = vcombine.high %v2856, %v2860
        %v2870 = vunpack.c.l.s4 1983009808
        %v2871 = vunpack.c.0.s8 %v2870
        %v2872 = vlaneseq
        %v2873 = vshrl.u32 %v2872, 7
        %v2874 = vsub.s32 %v2871, %v2873
        %v2875 = vrot.slane %v2867, %v2874
        %v2877 = vunpack.c.l.s4 1983009808
        %v2878 = vunpack.c.0.s8 %v2877
        %v2879 = vlaneseq
        %v2880 = vshrl.u32 %v2879, 7
        %v2881 = vsub.s32 %v2878, %v2880
        %v2882 = vrot.slane %v2868, %v2881
        %v2883 = vcombine.low %v2858, %v2862
        %v2884 = vcombine.high %v2858, %v2862
        %v2886 = vunpack.c.l.s4 1983009808
        %v2887 = vunpack.c.0.s8 %v2886
        %v2888 = vlaneseq
        %v2889 = vshrl.u32 %v2888, 7
        %v2890 = vsub.s32 %v2887, %v2889
        %v2891 = vrot.slane %v2883, %v2890
        %v2893 = vunpack.c.l.s4 1983009808
        %v2894 = vunpack.c.0.s8 %v2893
        %v2895 = vlaneseq
        %v2896 = vshrl.u32 %v2895, 7
        %v2897 = vsub.s32 %v2894, %v2896
        %v2898 = vrot.slane %v2884, %v2897
        %v2899 = vcombine.low %v2875, %v2891
        %v2900 = vcombine.high %v2875, %v2891
        %v2902 = vunpack.c.l.s4 1934713408
        %v2903 = vunpack.c.0.s8 %v2902
        %v2904 = vlaneseq
        %v2905 = vshrl.u32 %v2904, 7
        %v2906 = vsub.s32 %v2903, %v2905
        %v2907 = vrot.slane %v2899, %v2906
        %v2909 = vunpack.c.l.s4 1934713408
        %v2910 = vunpack.c.0.s8 %v2909
        %v2911 = vlaneseq
        %v2912 = vshrl.u32 %v2911, 7
        %v2913 = vsub.s32 %v2910, %v2912
        %v2914 = vrot.slane %v2900, %v2913
        %v2915 = vcombine.low %v2882, %v2898
        %v2916 = vcombine.high %v2882, %v2898
        %v2918 = vunpack.c.l.s4 1934713408
        %v2919 = vunpack.c.0.s8 %v2918
        %v2920 = vlaneseq
        %v2921 = vshrl.u32 %v2920, 7
        %v2922 = vsub.s32 %v2919, %v2921
        %v2923 = vrot.slane %v2915, %v2922
        %v2925 = vunpack.c.l.s4 1934713408
        %v2926 = vunpack.c.0.s8 %v2925
        %v2927 = vlaneseq
        %v2928 = vshrl.u32 %v2927, 7
        %v2929 = vsub.s32 %v2926, %v2928
        %v2930 = vrot.slane %v2916, %v2929
        %v2931 = vcombine.high %v2907, 0.0
        %v2932 = vcombine.high %v2914, 0.0
        %v2933 = vcombine.high %v2923, 0.0
        %v2934 = vcombine.high %v2930, 0.0
        %v2935 = vcombine.low %v2907, %v2914
        %v2937 = vunpack.c.l.s4 1983009808
        %v2938 = vunpack.c.0.s8 %v2937
        %v2939 = vlaneseq
        %v2940 = vshrl.u32 %v2939, 7
        %v2941 = vsub.s32 %v2938, %v2940
        %v2942 = vrot.slane %v2935, %v2941
        %v2943 = vcombine.low %v2931, %v2932
        %v2945 = vunpack.c.l.s4 1983009808
        %v2946 = vunpack.c.0.s8 %v2945
        %v2947 = vlaneseq
        %v2948 = vshrl.u32 %v2947, 7
        %v2949 = vsub.s32 %v2946, %v2948
        %v2950 = vrot.slane %v2943, %v2949
        %v2951 = vcombine.low %v2923, %v2930
        %v2953 = vunpack.c.l.s4 1983009808
        %v2954 = vunpack.c.0.s8 %v2953
        %v2955 = vlaneseq
        %v2956 = vshrl.u32 %v2955, 7
        %v2957 = vsub.s32 %v2954, %v2956
        %v2958 = vrot.slane %v2951, %v2957
        %v2959 = vcombine.low %v2933, %v2934
        %v2961 = vunpack.c.l.s4 1983009808
        %v2962 = vunpack.c.0.s8 %v2961
        %v2963 = vlaneseq
        %v2964 = vshrl.u32 %v2963, 7
        %v2965 = vsub.s32 %v2962, %v2964
        %v2966 = vrot.slane %v2959, %v2965
        %v2967 = vcombine.low %v2942, %v2950
        %v2968 = vcombine.high %v2942, %v2950
        %v2970 = vunpack.c.l.s4 1934713408
        %v2971 = vunpack.c.0.s8 %v2970
        %v2972 = vlaneseq
        %v2973 = vshrl.u32 %v2972, 7
        %v2974 = vsub.s32 %v2971, %v2973
        %v2975 = vrot.slane %v2967, %v2974
        %v2977 = vunpack.c.l.s4 1934713408
        %v2978 = vunpack.c.0.s8 %v2977
        %v2979 = vlaneseq
        %v2980 = vshrl.u32 %v2979, 7
        %v2981 = vsub.s32 %v2978, %v2980
        %v2982 = vrot.slane %v2968, %v2981
        %v2983 = vcombine.low %v2958, %v2966
        %v2984 = vcombine.high %v2958, %v2966
        %v2986 = vunpack.c.l.s4 1934713408
        %v2987 = vunpack.c.0.s8 %v2986
        %v2988 = vlaneseq
        %v2989 = vshrl.u32 %v2988, 7
        %v2990 = vsub.s32 %v2987, %v2989
        %v2991 = vrot.slane %v2983, %v2990
        %v2993 = vunpack.c.l.s4 1934713408
        %v2994 = vunpack.c.0.s8 %v2993
        %v2995 = vlaneseq
        %v2996 = vshrl.u32 %v2995, 7
        %v2997 = vsub.s32 %v2994, %v2996
        %v2998 = vrot.slane %v2984, %v2997
        %v2999 = vcombine.low %v2975, %v2991
        %v3000 = vcombine.high %v2975, %v2991
        %v3001 = vcombine.low %v2982, %v2998
        %v3002 = vcombine.high %v2982, %v2998
        %v3004 = vsel %vm1499, %v2705, 0
        %v3007 = vsel %vm1499, %v2851, 0
        %3009 = vmatprep.subr.mxu0 0.0
        %3010 = vmatpush1.xpose.msra.mxu0 %v3007
        %3011 = vmatprep.subr.mxu0 0.0
        %3012 = vmatpush1.xpose.msra.mxu0 0.0
        %3013 = vmatprep.subr.mxu0 0.0
        %3014 = vmatpush1.xpose.msra.mxu0 0.0
        %3015 = vmatprep.subr.mxu0 0.0
        %3016 = vmatpush1.xpose.msra.mxu0 0.0
        %3017 = vmatprep.subr.mxu0 0.0
        %3018 = vmatpush1.xpose.msra.mxu0 0.0
        %3019 = vmatprep.subr.mxu0 0.0
        %3020 = vmatpush1.xpose.msra.mxu0 0.0
        %3021 = vmatprep.subr.mxu0 0.0
        %3022 = vmatpush1.xpose.msra.mxu0 0.0
        %3023 = vmatprep.subr.mxu0 0.0
        %3024 = vmatpush1.xpose.msra.mxu0 0.0
        %3025 = vmatprep.subr.mxu0 0.0
        %3026 = vmatpush1.xpose.msra.mxu0 0.0
        %3027 = vmatprep.subr.mxu0 0.0
        %3028 = vmatpush1.xpose.msra.mxu0 0.0
        %3029 = vmatprep.subr.mxu0 0.0
        %3030 = vmatpush1.xpose.msra.mxu0 0.0
        %3031 = vmatprep.subr.mxu0 0.0
        %3032 = vmatpush1.xpose.msra.mxu0 0.0
        %3033 = vmatprep.subr.mxu0 0.0
        %3034 = vmatpush1.xpose.msra.mxu0 0.0
        %3035 = vmatprep.subr.mxu0 0.0
        %3036 = vmatpush1.xpose.msra.mxu0 0.0
        %3037 = vmatprep.subr.mxu0 0.0
        %3038 = vmatpush1.xpose.msra.mxu0 0.0
        %3039 = vmatprep.subr.mxu0 0.0
        %3040 = vmatpush1.xpose.msra.mxu0 0.0
        %3041 = vmatprep.subr.mxu0 0.0
        %3042 = vmatpush1.xpose.msra.mxu0 0.0
        %3043 = vmatprep.subr.mxu0 0.0
        %3044 = vmatpush1.xpose.msra.mxu0 0.0
        %3045 = vmatprep.subr.mxu0 0.0
        %3046 = vmatpush1.xpose.msra.mxu0 0.0
        %3047 = vmatprep.subr.mxu0 0.0
        %3048 = vmatpush1.xpose.msra.mxu0 0.0
        %3049 = vmatprep.subr.mxu0 0.0
        %3050 = vmatpush1.xpose.msra.mxu0 0.0
        %3051 = vmatprep.subr.mxu0 0.0
        %3052 = vmatpush1.xpose.msra.mxu0 0.0
        %3053 = vmatprep.subr.mxu0 0.0
        %3054 = vmatpush1.xpose.msra.mxu0 0.0
        %3055 = vmatprep.subr.mxu0 0.0
        %3056 = vmatpush1.xpose.msra.mxu0 0.0
        %3057 = vmatprep.subr.mxu0 0.0
        %3058 = vmatpush1.xpose.msra.mxu0 0.0
        %3059 = vmatprep.subr.mxu0 0.0
        %3060 = vmatpush1.xpose.msra.mxu0 0.0
        %3061 = vmatprep.subr.mxu0 0.0
        %3062 = vmatpush1.xpose.msra.mxu0 0.0
        %3063 = vmatprep.subr.mxu0 0.0
        %3064 = vmatpush1.xpose.msra.mxu0 0.0
        %3065 = vmatprep.subr.mxu0 0.0
        %3066 = vmatpush1.xpose.msra.mxu0 0.0
        %3067 = vmatprep.subr.mxu0 0.0
        %3068 = vmatpush1.xpose.msra.mxu0 0.0
        %3069 = vmatprep.subr.mxu0 0.0
        %3070 = vmatpush1.xpose.msra.mxu0 0.0
        %3071 = vmatprep.subr.mxu0 0.0
        %3072 = vmatpush1.xpose.msra.mxu0 0.0
        %3073 = vmatprep.mubr.f32.mxu0 0.0
        %3074 = vmatmul.mubr.f32.gmra.mrb[0].mxu0 %v3004
        %v3075 = vpop.f32.mrb[0].mxu0
        %v3076 = vadd.f32 0.0, %v3075
        %v3077 = vpop.f32.mrb[0].mxu0
        %3078 = vdwg.mxu0
        %v3080 = vsel %vm1499, %v2706, 0
        %v3083 = vsel %vm1499, %v2852, 0
        %3085 = vmatprep.subr.mxu0 0.0
        %3086 = vmatpush1.xpose.msra.mxu0 %v3083
        %3087 = vmatprep.subr.mxu0 0.0
        %3088 = vmatpush1.xpose.msra.mxu0 0.0
        %3089 = vmatprep.subr.mxu0 0.0
        %3090 = vmatpush1.xpose.msra.mxu0 0.0
        %3091 = vmatprep.subr.mxu0 0.0
        %3092 = vmatpush1.xpose.msra.mxu0 0.0
        %3093 = vmatprep.subr.mxu0 0.0
        %3094 = vmatpush1.xpose.msra.mxu0 0.0
        %3095 = vmatprep.subr.mxu0 0.0
        %3096 = vmatpush1.xpose.msra.mxu0 0.0
        %3097 = vmatprep.subr.mxu0 0.0
        %3098 = vmatpush1.xpose.msra.mxu0 0.0
        %3099 = vmatprep.subr.mxu0 0.0
        %3100 = vmatpush1.xpose.msra.mxu0 0.0
        %3101 = vmatprep.subr.mxu0 0.0
        %3102 = vmatpush1.xpose.msra.mxu0 0.0
        %3103 = vmatprep.subr.mxu0 0.0
        %3104 = vmatpush1.xpose.msra.mxu0 0.0
        %3105 = vmatprep.subr.mxu0 0.0
        %3106 = vmatpush1.xpose.msra.mxu0 0.0
        %3107 = vmatprep.subr.mxu0 0.0
        %3108 = vmatpush1.xpose.msra.mxu0 0.0
        %3109 = vmatprep.subr.mxu0 0.0
        %3110 = vmatpush1.xpose.msra.mxu0 0.0
        %3111 = vmatprep.subr.mxu0 0.0
        %3112 = vmatpush1.xpose.msra.mxu0 0.0
        %3113 = vmatprep.subr.mxu0 0.0
        %3114 = vmatpush1.xpose.msra.mxu0 0.0
        %3115 = vmatprep.subr.mxu0 0.0
        %3116 = vmatpush1.xpose.msra.mxu0 0.0
        %3117 = vmatprep.subr.mxu0 0.0
        %3118 = vmatpush1.xpose.msra.mxu0 0.0
        %3119 = vmatprep.subr.mxu0 0.0
        %3120 = vmatpush1.xpose.msra.mxu0 0.0
        %3121 = vmatprep.subr.mxu0 0.0
        %3122 = vmatpush1.xpose.msra.mxu0 0.0
        %3123 = vmatprep.subr.mxu0 0.0
        %3124 = vmatpush1.xpose.msra.mxu0 0.0
        %3125 = vmatprep.subr.mxu0 0.0
        %3126 = vmatpush1.xpose.msra.mxu0 0.0
        %3127 = vmatprep.subr.mxu0 0.0
        %3128 = vmatpush1.xpose.msra.mxu0 0.0
        %3129 = vmatprep.subr.mxu0 0.0
        %3130 = vmatpush1.xpose.msra.mxu0 0.0
        %3131 = vmatprep.subr.mxu0 0.0
        %3132 = vmatpush1.xpose.msra.mxu0 0.0
        %3133 = vmatprep.subr.mxu0 0.0
        %3134 = vmatpush1.xpose.msra.mxu0 0.0
        %3135 = vmatprep.subr.mxu0 0.0
        %3136 = vmatpush1.xpose.msra.mxu0 0.0
        %3137 = vmatprep.subr.mxu0 0.0
        %3138 = vmatpush1.xpose.msra.mxu0 0.0
        %3139 = vmatprep.subr.mxu0 0.0
        %3140 = vmatpush1.xpose.msra.mxu0 0.0
        %3141 = vmatprep.subr.mxu0 0.0
        %3142 = vmatpush1.xpose.msra.mxu0 0.0
        %3143 = vmatprep.subr.mxu0 0.0
        %3144 = vmatpush1.xpose.msra.mxu0 0.0
        %3145 = vmatprep.subr.mxu0 0.0
        %3146 = vmatpush1.xpose.msra.mxu0 0.0
        %3147 = vmatprep.subr.mxu0 0.0
        %3148 = vmatpush1.xpose.msra.mxu0 0.0
        %3149 = vmatprep.mubr.f32.mxu0 0.0
        %3150 = vmatmul.mubr.f32.gmra.mrb[0].mxu0 %v3080
        %v3151 = vpop.f32.mrb[0].mxu0
        %v3152 = vadd.f32 0.0, %v3151
        %v3153 = vpop.f32.mrb[0].mxu0
        %3154 = vdwg.mxu0
        %v3156 = vsel %vm1499, %v2707, 0
        %v3159 = vsel %vm1499, %v2853, 0
        %3161 = vmatprep.subr.mxu0 0.0
        %3162 = vmatpush1.xpose.msra.mxu0 %v3159
        %3163 = vmatprep.subr.mxu0 0.0
        %3164 = vmatpush1.xpose.msra.mxu0 0.0
        %3165 = vmatprep.subr.mxu0 0.0
        %3166 = vmatpush1.xpose.msra.mxu0 0.0
        %3167 = vmatprep.subr.mxu0 0.0
        %3168 = vmatpush1.xpose.msra.mxu0 0.0
        %3169 = vmatprep.subr.mxu0 0.0
        %3170 = vmatpush1.xpose.msra.mxu0 0.0
        %3171 = vmatprep.subr.mxu0 0.0
        %3172 = vmatpush1.xpose.msra.mxu0 0.0
        %3173 = vmatprep.subr.mxu0 0.0
        %3174 = vmatpush1.xpose.msra.mxu0 0.0
        %3175 = vmatprep.subr.mxu0 0.0
        %3176 = vmatpush1.xpose.msra.mxu0 0.0
        %3177 = vmatprep.subr.mxu0 0.0
        %3178 = vmatpush1.xpose.msra.mxu0 0.0
        %3179 = vmatprep.subr.mxu0 0.0
        %3180 = vmatpush1.xpose.msra.mxu0 0.0
        %3181 = vmatprep.subr.mxu0 0.0
        %3182 = vmatpush1.xpose.msra.mxu0 0.0
        %3183 = vmatprep.subr.mxu0 0.0
        %3184 = vmatpush1.xpose.msra.mxu0 0.0
        %3185 = vmatprep.subr.mxu0 0.0
        %3186 = vmatpush1.xpose.msra.mxu0 0.0
        %3187 = vmatprep.subr.mxu0 0.0
        %3188 = vmatpush1.xpose.msra.mxu0 0.0
        %3189 = vmatprep.subr.mxu0 0.0
        %3190 = vmatpush1.xpose.msra.mxu0 0.0
        %3191 = vmatprep.subr.mxu0 0.0
        %3192 = vmatpush1.xpose.msra.mxu0 0.0
        %3193 = vmatprep.subr.mxu0 0.0
        %3194 = vmatpush1.xpose.msra.mxu0 0.0
        %3195 = vmatprep.subr.mxu0 0.0
        %3196 = vmatpush1.xpose.msra.mxu0 0.0
        %3197 = vmatprep.subr.mxu0 0.0
        %3198 = vmatpush1.xpose.msra.mxu0 0.0
        %3199 = vmatprep.subr.mxu0 0.0
        %3200 = vmatpush1.xpose.msra.mxu0 0.0
        %3201 = vmatprep.subr.mxu0 0.0
        %3202 = vmatpush1.xpose.msra.mxu0 0.0
        %3203 = vmatprep.subr.mxu0 0.0
        %3204 = vmatpush1.xpose.msra.mxu0 0.0
        %3205 = vmatprep.subr.mxu0 0.0
        %3206 = vmatpush1.xpose.msra.mxu0 0.0
        %3207 = vmatprep.subr.mxu0 0.0
        %3208 = vmatpush1.xpose.msra.mxu0 0.0
        %3209 = vmatprep.subr.mxu0 0.0
        %3210 = vmatpush1.xpose.msra.mxu0 0.0
        %3211 = vmatprep.subr.mxu0 0.0
        %3212 = vmatpush1.xpose.msra.mxu0 0.0
        %3213 = vmatprep.subr.mxu0 0.0
        %3214 = vmatpush1.xpose.msra.mxu0 0.0
        %3215 = vmatprep.subr.mxu0 0.0
        %3216 = vmatpush1.xpose.msra.mxu0 0.0
        %3217 = vmatprep.subr.mxu0 0.0
        %3218 = vmatpush1.xpose.msra.mxu0 0.0
        %3219 = vmatprep.subr.mxu0 0.0
        %3220 = vmatpush1.xpose.msra.mxu0 0.0
        %3221 = vmatprep.subr.mxu0 0.0
        %3222 = vmatpush1.xpose.msra.mxu0 0.0
        %3223 = vmatprep.subr.mxu0 0.0
        %3224 = vmatpush1.xpose.msra.mxu0 0.0
        %3225 = vmatprep.mubr.f32.mxu0 0.0
        %3226 = vmatmul.mubr.f32.gmra.mrb[0].mxu0 %v3156
        %v3227 = vpop.f32.mrb[0].mxu0
        %v3228 = vadd.f32 0.0, %v3227
        %v3229 = vpop.f32.mrb[0].mxu0
        %3230 = vdwg.mxu0
        %v3232 = vsel %vm1499, %v2708, 0
        %v3235 = vsel %vm1499, %v2854, 0
        %3237 = vmatprep.subr.mxu0 0.0
        %3238 = vmatpush1.xpose.msra.mxu0 %v3235
        %3239 = vmatprep.subr.mxu0 0.0
        %3240 = vmatpush1.xpose.msra.mxu0 0.0
        %3241 = vmatprep.subr.mxu0 0.0
        %3242 = vmatpush1.xpose.msra.mxu0 0.0
        %3243 = vmatprep.subr.mxu0 0.0
        %3244 = vmatpush1.xpose.msra.mxu0 0.0
        %3245 = vmatprep.subr.mxu0 0.0
        %3246 = vmatpush1.xpose.msra.mxu0 0.0
        %3247 = vmatprep.subr.mxu0 0.0
        %3248 = vmatpush1.xpose.msra.mxu0 0.0
        %3249 = vmatprep.subr.mxu0 0.0
        %3250 = vmatpush1.xpose.msra.mxu0 0.0
        %3251 = vmatprep.subr.mxu0 0.0
        %3252 = vmatpush1.xpose.msra.mxu0 0.0
        %3253 = vmatprep.subr.mxu0 0.0
        %3254 = vmatpush1.xpose.msra.mxu0 0.0
        %3255 = vmatprep.subr.mxu0 0.0
        %3256 = vmatpush1.xpose.msra.mxu0 0.0
        %3257 = vmatprep.subr.mxu0 0.0
        %3258 = vmatpush1.xpose.msra.mxu0 0.0
        %3259 = vmatprep.subr.mxu0 0.0
        %3260 = vmatpush1.xpose.msra.mxu0 0.0
        %3261 = vmatprep.subr.mxu0 0.0
        %3262 = vmatpush1.xpose.msra.mxu0 0.0
        %3263 = vmatprep.subr.mxu0 0.0
        %3264 = vmatpush1.xpose.msra.mxu0 0.0
        %3265 = vmatprep.subr.mxu0 0.0
        %3266 = vmatpush1.xpose.msra.mxu0 0.0
        %3267 = vmatprep.subr.mxu0 0.0
        %3268 = vmatpush1.xpose.msra.mxu0 0.0
        %3269 = vmatprep.subr.mxu0 0.0
        %3270 = vmatpush1.xpose.msra.mxu0 0.0
        %3271 = vmatprep.subr.mxu0 0.0
        %3272 = vmatpush1.xpose.msra.mxu0 0.0
        %3273 = vmatprep.subr.mxu0 0.0
        %3274 = vmatpush1.xpose.msra.mxu0 0.0
        %3275 = vmatprep.subr.mxu0 0.0
        %3276 = vmatpush1.xpose.msra.mxu0 0.0
        %3277 = vmatprep.subr.mxu0 0.0
        %3278 = vmatpush1.xpose.msra.mxu0 0.0
        %3279 = vmatprep.subr.mxu0 0.0
        %3280 = vmatpush1.xpose.msra.mxu0 0.0
        %3281 = vmatprep.subr.mxu0 0.0
        %3282 = vmatpush1.xpose.msra.mxu0 0.0
        %3283 = vmatprep.subr.mxu0 0.0
        %3284 = vmatpush1.xpose.msra.mxu0 0.0
        %3285 = vmatprep.subr.mxu0 0.0
        %3286 = vmatpush1.xpose.msra.mxu0 0.0
        %3287 = vmatprep.subr.mxu0 0.0
        %3288 = vmatpush1.xpose.msra.mxu0 0.0
        %3289 = vmatprep.subr.mxu0 0.0
        %3290 = vmatpush1.xpose.msra.mxu0 0.0
        %3291 = vmatprep.subr.mxu0 0.0
        %3292 = vmatpush1.xpose.msra.mxu0 0.0
        %3293 = vmatprep.subr.mxu0 0.0
        %3294 = vmatpush1.xpose.msra.mxu0 0.0
        %3295 = vmatprep.subr.mxu0 0.0
        %3296 = vmatpush1.xpose.msra.mxu0 0.0
        %3297 = vmatprep.subr.mxu0 0.0
        %3298 = vmatpush1.xpose.msra.mxu0 0.0
        %3299 = vmatprep.subr.mxu0 0.0
        %3300 = vmatpush1.xpose.msra.mxu0 0.0
        %3301 = vmatprep.mubr.f32.mxu0 0.0
        %3302 = vmatmul.mubr.f32.gmra.mrb[0].mxu0 %v3232
        %v3303 = vpop.f32.mrb[0].mxu0
        %v3304 = vadd.f32 0.0, %v3303
        %v3305 = vpop.f32.mrb[0].mxu0
        %3306 = vdwg.mxu0
        %vm3307 = vcmp.eq.f32.partialorder %v2555, 0.0
        %v3308 = vsel %vm3307, 1, 0
        %v3309 = vlaneseq
        %v3310 = vshrl.u32 %v3309, 7
        %v3311 = vsub.s32 0, %v3310
        %v3312 = vrot.slane %v3308, %v3311
        %vm3313 = vcmp.eq.s32.totalorder %v3312, 1
        %v3314 = vsel %vm3313, -1e+09, %v3076
        %v3315 = vsel %vm3313, -1e+09, %v3152
        %v3316 = vsel %vm3313, -1e+09, %v3228
        %v3317 = vsel %vm3313, -1e+09, %v3304
        %v3318 = vsel %vm1499, %v3314, -inf
        %3319 = vmax.xlane.f32.xlu0 %v3318
        %v3320 = vpop.xlane.xlu0 %3319
        %v3321 = vsel %vm1499, %v3315, -inf
        %3322 = vmax.xlane.f32.xlu0 %v3321
        %v3323 = vpop.xlane.xlu0 %3322
        %v3324 = vsel %vm1499, %v3316, -inf
        %3325 = vmax.xlane.f32.xlu0 %v3324
        %v3326 = vpop.xlane.xlu0 %3325
        %v3327 = vsel %vm1499, %v3317, -inf
        %3328 = vmax.xlane.f32.xlu0 %v3327
        %v3329 = vpop.xlane.xlu0 %3328
        %v3330 = vsub.f32 %v3314, %v3320
        %v3331 = vsub.f32 %v3315, %v3323
        %v3332 = vsub.f32 %v3316, %v3326
        %v3333 = vsub.f32 %v3317, %v3329
        %v3334 = vmul.f32 %v3330, 1.442695
        %v3335 = vpow.pop %v3334
        %v3336 = vmul.f32 %v3331, 1.442695
        %v3337 = vpow.pop %v3336
        %v3338 = vmul.f32 %v3332, 1.442695
        %v3339 = vpow.pop %v3338
        %v3340 = vmul.f32 %v3333, 1.442695
        %v3341 = vpow.pop %v3340
        %v3342 = vsel %vm1499, %v3335, 0.0
        %3343 = vadd.xlane.f32.xlu0 %v3342
        %v3344 = vpop.xlane.xlu0 %3343
        %v3345 = vsel %vm1499, %v3337, 0.0
        %3346 = vadd.xlane.f32.xlu0 %v3345
        %v3347 = vpop.xlane.xlu0 %3346
        %v3348 = vsel %vm1499, %v3339, 0.0
        %3349 = vadd.xlane.f32.xlu0 %v3348
        %v3350 = vpop.xlane.xlu0 %3349
        %v3351 = vsel %vm1499, %v3341, 0.0
        %3352 = vadd.xlane.f32.xlu0 %v3351
        %v3353 = vpop.xlane.xlu0 %3352
        %v3354 = vrcp.pop %v3344
        %v3355 = vrcp.pop %v3347
        %v3356 = vrcp.pop %v3350
        %v3357 = vrcp.pop %v3353
        %v3358 = vmul.f32 %v3335, %v3354
        %v3359 = vmul.f32 %v3337, %v3355
        %v3360 = vmul.f32 %v3339, %v3356
        %v3361 = vmul.f32 %v3341, %v3357
        %v3363 = vsel %vm1499, %v3358, 0
        %3365 = vmatprep.subr.mxu0 0.0
        %3366 = vmatpush1.msra.mxu0 %v2999
        %3367 = vmatprep.subr.mxu0 0.0
        %3368 = vmatpush1.msra.mxu0 0.0
        %3369 = vmatprep.subr.mxu0 0.0
        %3370 = vmatpush1.msra.mxu0 0.0
        %3371 = vmatprep.subr.mxu0 0.0
        %3372 = vmatpush1.msra.mxu0 0.0
        %3373 = vmatprep.subr.mxu0 0.0
        %3374 = vmatpush1.msra.mxu0 0.0
        %3375 = vmatprep.subr.mxu0 0.0
        %3376 = vmatpush1.msra.mxu0 0.0
        %3377 = vmatprep.subr.mxu0 0.0
        %3378 = vmatpush1.msra.mxu0 0.0
        %3379 = vmatprep.subr.mxu0 0.0
        %3380 = vmatpush1.msra.mxu0 0.0
        %3381 = vmatprep.subr.mxu0 0.0
        %3382 = vmatpush1.msra.mxu0 0.0
        %3383 = vmatprep.subr.mxu0 0.0
        %3384 = vmatpush1.msra.mxu0 0.0
        %3385 = vmatprep.subr.mxu0 0.0
        %3386 = vmatpush1.msra.mxu0 0.0
        %3387 = vmatprep.subr.mxu0 0.0
        %3388 = vmatpush1.msra.mxu0 0.0
        %3389 = vmatprep.subr.mxu0 0.0
        %3390 = vmatpush1.msra.mxu0 0.0
        %3391 = vmatprep.subr.mxu0 0.0
        %3392 = vmatpush1.msra.mxu0 0.0
        %3393 = vmatprep.subr.mxu0 0.0
        %3394 = vmatpush1.msra.mxu0 0.0
        %3395 = vmatprep.subr.mxu0 0.0
        %3396 = vmatpush1.msra.mxu0 0.0
        %3397 = vmatprep.subr.mxu0 0.0
        %3398 = vmatpush1.msra.mxu0 0.0
        %3399 = vmatprep.subr.mxu0 0.0
        %3400 = vmatpush1.msra.mxu0 0.0
        %3401 = vmatprep.subr.mxu0 0.0
        %3402 = vmatpush1.msra.mxu0 0.0
        %3403 = vmatprep.subr.mxu0 0.0
        %3404 = vmatpush1.msra.mxu0 0.0
        %3405 = vmatprep.subr.mxu0 0.0
        %3406 = vmatpush1.msra.mxu0 0.0
        %3407 = vmatprep.subr.mxu0 0.0
        %3408 = vmatpush1.msra.mxu0 0.0
        %3409 = vmatprep.subr.mxu0 0.0
        %3410 = vmatpush1.msra.mxu0 0.0
        %3411 = vmatprep.subr.mxu0 0.0
        %3412 = vmatpush1.msra.mxu0 0.0
        %3413 = vmatprep.subr.mxu0 0.0
        %3414 = vmatpush1.msra.mxu0 0.0
        %3415 = vmatprep.subr.mxu0 0.0
        %3416 = vmatpush1.msra.mxu0 0.0
        %3417 = vmatprep.subr.mxu0 0.0
        %3418 = vmatpush1.msra.mxu0 0.0
        %3419 = vmatprep.subr.mxu0 0.0
        %3420 = vmatpush1.msra.mxu0 0.0
        %3421 = vmatprep.subr.mxu0 0.0
        %3422 = vmatpush1.msra.mxu0 0.0
        %3423 = vmatprep.subr.mxu0 0.0
        %3424 = vmatpush1.msra.mxu0 0.0
        %3425 = vmatprep.subr.mxu0 0.0
        %3426 = vmatpush1.msra.mxu0 0.0
        %3427 = vmatprep.subr.mxu0 0.0
        %3428 = vmatpush1.msra.mxu0 0.0
        %3429 = vmatprep.mubr.f32.mxu0 0.0
        %3430 = vmatmul.mubr.f32.gmra.mrb[0].mxu0 %v3363
        %v3431 = vpop.f32.mrb[0].mxu0
        %v3432 = vadd.f32 0.0, %v3431
        %v3433 = vpop.f32.mrb[0].mxu0
        %3434 = vdwg.mxu0
        %v3436 = vsel %vm1499, %v3359, 0
        %3438 = vmatprep.subr.mxu0 0.0
        %3439 = vmatpush1.msra.mxu0 %v3000
        %3440 = vmatprep.subr.mxu0 0.0
        %3441 = vmatpush1.msra.mxu0 0.0
        %3442 = vmatprep.subr.mxu0 0.0
        %3443 = vmatpush1.msra.mxu0 0.0
        %3444 = vmatprep.subr.mxu0 0.0
        %3445 = vmatpush1.msra.mxu0 0.0
        %3446 = vmatprep.subr.mxu0 0.0
        %3447 = vmatpush1.msra.mxu0 0.0
        %3448 = vmatprep.subr.mxu0 0.0
        %3449 = vmatpush1.msra.mxu0 0.0
        %3450 = vmatprep.subr.mxu0 0.0
        %3451 = vmatpush1.msra.mxu0 0.0
        %3452 = vmatprep.subr.mxu0 0.0
        %3453 = vmatpush1.msra.mxu0 0.0
        %3454 = vmatprep.subr.mxu0 0.0
        %3455 = vmatpush1.msra.mxu0 0.0
        %3456 = vmatprep.subr.mxu0 0.0
        %3457 = vmatpush1.msra.mxu0 0.0
        %3458 = vmatprep.subr.mxu0 0.0
        %3459 = vmatpush1.msra.mxu0 0.0
        %3460 = vmatprep.subr.mxu0 0.0
        %3461 = vmatpush1.msra.mxu0 0.0
        %3462 = vmatprep.subr.mxu0 0.0
        %3463 = vmatpush1.msra.mxu0 0.0
        %3464 = vmatprep.subr.mxu0 0.0
        %3465 = vmatpush1.msra.mxu0 0.0
        %3466 = vmatprep.subr.mxu0 0.0
        %3467 = vmatpush1.msra.mxu0 0.0
        %3468 = vmatprep.subr.mxu0 0.0
        %3469 = vmatpush1.msra.mxu0 0.0
        %3470 = vmatprep.subr.mxu0 0.0
        %3471 = vmatpush1.msra.mxu0 0.0
        %3472 = vmatprep.subr.mxu0 0.0
        %3473 = vmatpush1.msra.mxu0 0.0
        %3474 = vmatprep.subr.mxu0 0.0
        %3475 = vmatpush1.msra.mxu0 0.0
        %3476 = vmatprep.subr.mxu0 0.0
        %3477 = vmatpush1.msra.mxu0 0.0
        %3478 = vmatprep.subr.mxu0 0.0
        %3479 = vmatpush1.msra.mxu0 0.0
        %3480 = vmatprep.subr.mxu0 0.0
        %3481 = vmatpush1.msra.mxu0 0.0
        %3482 = vmatprep.subr.mxu0 0.0
        %3483 = vmatpush1.msra.mxu0 0.0
        %3484 = vmatprep.subr.mxu0 0.0
        %3485 = vmatpush1.msra.mxu0 0.0
        %3486 = vmatprep.subr.mxu0 0.0
        %3487 = vmatpush1.msra.mxu0 0.0
        %3488 = vmatprep.subr.mxu0 0.0
        %3489 = vmatpush1.msra.mxu0 0.0
        %3490 = vmatprep.subr.mxu0 0.0
        %3491 = vmatpush1.msra.mxu0 0.0
        %3492 = vmatprep.subr.mxu0 0.0
        %3493 = vmatpush1.msra.mxu0 0.0
        %3494 = vmatprep.subr.mxu0 0.0
        %3495 = vmatpush1.msra.mxu0 0.0
        %3496 = vmatprep.subr.mxu0 0.0
        %3497 = vmatpush1.msra.mxu0 0.0
        %3498 = vmatprep.subr.mxu0 0.0
        %3499 = vmatpush1.msra.mxu0 0.0
        %3500 = vmatprep.subr.mxu0 0.0
        %3501 = vmatpush1.msra.mxu0 0.0
        %3502 = vmatprep.mubr.f32.mxu0 0.0
        %3503 = vmatmul.mubr.f32.gmra.mrb[0].mxu0 %v3436
        %v3504 = vpop.f32.mrb[0].mxu0
        %v3505 = vadd.f32 0.0, %v3504
        %v3506 = vpop.f32.mrb[0].mxu0
        %3507 = vdwg.mxu0
        %v3509 = vsel %vm1499, %v3360, 0
        %3511 = vmatprep.subr.mxu0 0.0
        %3512 = vmatpush1.msra.mxu0 %v3001
        %3513 = vmatprep.subr.mxu0 0.0
        %3514 = vmatpush1.msra.mxu0 0.0
        %3515 = vmatprep.subr.mxu0 0.0
        %3516 = vmatpush1.msra.mxu0 0.0
        %3517 = vmatprep.subr.mxu0 0.0
        %3518 = vmatpush1.msra.mxu0 0.0
        %3519 = vmatprep.subr.mxu0 0.0
        %3520 = vmatpush1.msra.mxu0 0.0
        %3521 = vmatprep.subr.mxu0 0.0
        %3522 = vmatpush1.msra.mxu0 0.0
        %3523 = vmatprep.subr.mxu0 0.0
        %3524 = vmatpush1.msra.mxu0 0.0
        %3525 = vmatprep.subr.mxu0 0.0
        %3526 = vmatpush1.msra.mxu0 0.0
        %3527 = vmatprep.subr.mxu0 0.0
        %3528 = vmatpush1.msra.mxu0 0.0
        %3529 = vmatprep.subr.mxu0 0.0
        %3530 = vmatpush1.msra.mxu0 0.0
        %3531 = vmatprep.subr.mxu0 0.0
        %3532 = vmatpush1.msra.mxu0 0.0
        %3533 = vmatprep.subr.mxu0 0.0
        %3534 = vmatpush1.msra.mxu0 0.0
        %3535 = vmatprep.subr.mxu0 0.0
        %3536 = vmatpush1.msra.mxu0 0.0
        %3537 = vmatprep.subr.mxu0 0.0
        %3538 = vmatpush1.msra.mxu0 0.0
        %3539 = vmatprep.subr.mxu0 0.0
        %3540 = vmatpush1.msra.mxu0 0.0
        %3541 = vmatprep.subr.mxu0 0.0
        %3542 = vmatpush1.msra.mxu0 0.0
        %3543 = vmatprep.subr.mxu0 0.0
        %3544 = vmatpush1.msra.mxu0 0.0
        %3545 = vmatprep.subr.mxu0 0.0
        %3546 = vmatpush1.msra.mxu0 0.0
        %3547 = vmatprep.subr.mxu0 0.0
        %3548 = vmatpush1.msra.mxu0 0.0
        %3549 = vmatprep.subr.mxu0 0.0
        %3550 = vmatpush1.msra.mxu0 0.0
        %3551 = vmatprep.subr.mxu0 0.0
        %3552 = vmatpush1.msra.mxu0 0.0
        %3553 = vmatprep.subr.mxu0 0.0
        %3554 = vmatpush1.msra.mxu0 0.0
        %3555 = vmatprep.subr.mxu0 0.0
        %3556 = vmatpush1.msra.mxu0 0.0
        %3557 = vmatprep.subr.mxu0 0.0
        %3558 = vmatpush1.msra.mxu0 0.0
        %3559 = vmatprep.subr.mxu0 0.0
        %3560 = vmatpush1.msra.mxu0 0.0
        %3561 = vmatprep.subr.mxu0 0.0
        %3562 = vmatpush1.msra.mxu0 0.0
        %3563 = vmatprep.subr.mxu0 0.0
        %3564 = vmatpush1.msra.mxu0 0.0
        %3565 = vmatprep.subr.mxu0 0.0
        %3566 = vmatpush1.msra.mxu0 0.0
        %3567 = vmatprep.subr.mxu0 0.0
        %3568 = vmatpush1.msra.mxu0 0.0
        %3569 = vmatprep.subr.mxu0 0.0
        %3570 = vmatpush1.msra.mxu0 0.0
        %3571 = vmatprep.subr.mxu0 0.0
        %3572 = vmatpush1.msra.mxu0 0.0
        %3573 = vmatprep.subr.mxu0 0.0
        %3574 = vmatpush1.msra.mxu0 0.0
        %3575 = vmatprep.mubr.f32.mxu0 0.0
        %3576 = vmatmul.mubr.f32.gmra.mrb[0].mxu0 %v3509
        %v3577 = vpop.f32.mrb[0].mxu0
        %v3578 = vadd.f32 0.0, %v3577
        %v3579 = vpop.f32.mrb[0].mxu0
        %3580 = vdwg.mxu0
        %v3582 = vsel %vm1499, %v3361, 0
        %3584 = vmatprep.subr.mxu0 0.0
        %3585 = vmatpush1.msra.mxu0 %v3002
        %3586 = vmatprep.subr.mxu0 0.0
        %3587 = vmatpush1.msra.mxu0 0.0
        %3588 = vmatprep.subr.mxu0 0.0
        %3589 = vmatpush1.msra.mxu0 0.0
        %3590 = vmatprep.subr.mxu0 0.0
        %3591 = vmatpush1.msra.mxu0 0.0
        %3592 = vmatprep.subr.mxu0 0.0
        %3593 = vmatpush1.msra.mxu0 0.0
        %3594 = vmatprep.subr.mxu0 0.0
        %3595 = vmatpush1.msra.mxu0 0.0
        %3596 = vmatprep.subr.mxu0 0.0
        %3597 = vmatpush1.msra.mxu0 0.0
        %3598 = vmatprep.subr.mxu0 0.0
        %3599 = vmatpush1.msra.mxu0 0.0
        %3600 = vmatprep.subr.mxu0 0.0
        %3601 = vmatpush1.msra.mxu0 0.0
        %3602 = vmatprep.subr.mxu0 0.0
        %3603 = vmatpush1.msra.mxu0 0.0
        %3604 = vmatprep.subr.mxu0 0.0
        %3605 = vmatpush1.msra.mxu0 0.0
        %3606 = vmatprep.subr.mxu0 0.0
        %3607 = vmatpush1.msra.mxu0 0.0
        %3608 = vmatprep.subr.mxu0 0.0
        %3609 = vmatpush1.msra.mxu0 0.0
        %3610 = vmatprep.subr.mxu0 0.0
        %3611 = vmatpush1.msra.mxu0 0.0
        %3612 = vmatprep.subr.mxu0 0.0
        %3613 = vmatpush1.msra.mxu0 0.0
        %3614 = vmatprep.subr.mxu0 0.0
        %3615 = vmatpush1.msra.mxu0 0.0
        %3616 = vmatprep.subr.mxu0 0.0
        %3617 = vmatpush1.msra.mxu0 0.0
        %3618 = vmatprep.subr.mxu0 0.0
        %3619 = vmatpush1.msra.mxu0 0.0
        %3620 = vmatprep.subr.mxu0 0.0
        %3621 = vmatpush1.msra.mxu0 0.0
        %3622 = vmatprep.subr.mxu0 0.0
        %3623 = vmatpush1.msra.mxu0 0.0
        %3624 = vmatprep.subr.mxu0 0.0
        %3625 = vmatpush1.msra.mxu0 0.0
        %3626 = vmatprep.subr.mxu0 0.0
        %3627 = vmatpush1.msra.mxu0 0.0
        %3628 = vmatprep.subr.mxu0 0.0
        %3629 = vmatpush1.msra.mxu0 0.0
        %3630 = vmatprep.subr.mxu0 0.0
        %3631 = vmatpush1.msra.mxu0 0.0
        %3632 = vmatprep.subr.mxu0 0.0
        %3633 = vmatpush1.msra.mxu0 0.0
        %3634 = vmatprep.subr.mxu0 0.0
        %3635 = vmatpush1.msra.mxu0 0.0
        %3636 = vmatprep.subr.mxu0 0.0
        %3637 = vmatpush1.msra.mxu0 0.0
        %3638 = vmatprep.subr.mxu0 0.0
        %3639 = vmatpush1.msra.mxu0 0.0
        %3640 = vmatprep.subr.mxu0 0.0
        %3641 = vmatpush1.msra.mxu0 0.0
        %3642 = vmatprep.subr.mxu0 0.0
        %3643 = vmatpush1.msra.mxu0 0.0
        %3644 = vmatprep.subr.mxu0 0.0
        %3645 = vmatpush1.msra.mxu0 0.0
        %3646 = vmatprep.subr.mxu0 0.0
        %3647 = vmatpush1.msra.mxu0 0.0
        %3648 = vmatprep.mubr.f32.mxu0 0.0
        %3649 = vmatmul.mubr.f32.gmra.mrb[0].mxu0 %v3582
        %v3650 = vpop.f32.mrb[0].mxu0
        %v3651 = vadd.f32 0.0, %v3650
        %v3652 = vpop.f32.mrb[0].mxu0
        %3653 = vdwg.mxu0
        %v3654 = vcombine.low %v3432, %v3578
        %v3655 = vcombine.high %v3432, %v3578
        %v3657 = vunpack.c.l.s4 1983009808
        %v3658 = vunpack.c.0.s8 %v3657
        %v3659 = vlaneseq
        %v3660 = vshrl.u32 %v3659, 7
        %v3661 = vsub.s32 %v3658, %v3660
        %v3662 = vrot.slane %v3654, %v3661
        %v3664 = vunpack.c.l.s4 1983009808
        %v3665 = vunpack.c.0.s8 %v3664
        %v3666 = vlaneseq
        %v3667 = vshrl.u32 %v3666, 7
        %v3668 = vsub.s32 %v3665, %v3667
        %v3669 = vrot.slane %v3655, %v3668
        %v3670 = vcombine.low %v3505, %v3651
        %v3671 = vcombine.high %v3505, %v3651
        %v3673 = vunpack.c.l.s4 1983009808
        %v3674 = vunpack.c.0.s8 %v3673
        %v3675 = vlaneseq
        %v3676 = vshrl.u32 %v3675, 7
        %v3677 = vsub.s32 %v3674, %v3676
        %v3678 = vrot.slane %v3670, %v3677
        %v3680 = vunpack.c.l.s4 1983009808
        %v3681 = vunpack.c.0.s8 %v3680
        %v3682 = vlaneseq
        %v3683 = vshrl.u32 %v3682, 7
        %v3684 = vsub.s32 %v3681, %v3683
        %v3685 = vrot.slane %v3671, %v3684
        %v3686 = vcombine.low %v3662, %v3678
        %v3687 = vcombine.high %v3662, %v3678
        %v3689 = vunpack.c.l.s4 1934713408
        %v3690 = vunpack.c.0.s8 %v3689
        %v3691 = vlaneseq
        %v3692 = vshrl.u32 %v3691, 7
        %v3693 = vsub.s32 %v3690, %v3692
        %v3694 = vrot.slane %v3686, %v3693
        %v3696 = vunpack.c.l.s4 1934713408
        %v3697 = vunpack.c.0.s8 %v3696
        %v3698 = vlaneseq
        %v3699 = vshrl.u32 %v3698, 7
        %v3700 = vsub.s32 %v3697, %v3699
        %v3701 = vrot.slane %v3687, %v3700
        %v3702 = vcombine.low %v3669, %v3685
        %v3703 = vcombine.high %v3669, %v3685
        %v3705 = vunpack.c.l.s4 1934713408
        %v3706 = vunpack.c.0.s8 %v3705
        %v3707 = vlaneseq
        %v3708 = vshrl.u32 %v3707, 7
        %v3709 = vsub.s32 %v3706, %v3708
        %v3710 = vrot.slane %v3702, %v3709
        %v3712 = vunpack.c.l.s4 1934713408
        %v3713 = vunpack.c.0.s8 %v3712
        %v3714 = vlaneseq
        %v3715 = vshrl.u32 %v3714, 7
        %v3716 = vsub.s32 %v3713, %v3715
        %v3717 = vrot.slane %v3703, %v3716
        %v3718 = vcombine.high %v3694, 0.0
        %v3719 = vcombine.high %v3701, 0.0
        %v3720 = vcombine.high %v3710, 0.0
        %v3721 = vcombine.high %v3717, 0.0
        %v3722 = vcombine.low %v3694, %v3701
        %v3724 = vunpack.c.l.s4 1983009808
        %v3725 = vunpack.c.0.s8 %v3724
        %v3726 = vlaneseq
        %v3727 = vshrl.u32 %v3726, 7
        %v3728 = vsub.s32 %v3725, %v3727
        %v3729 = vrot.slane %v3722, %v3728
        %v3730 = vcombine.low %v3718, %v3719
        %v3732 = vunpack.c.l.s4 1983009808
        %v3733 = vunpack.c.0.s8 %v3732
        %v3734 = vlaneseq
        %v3735 = vshrl.u32 %v3734, 7
        %v3736 = vsub.s32 %v3733, %v3735
        %v3737 = vrot.slane %v3730, %v3736
        %v3738 = vcombine.low %v3710, %v3717
        %v3740 = vunpack.c.l.s4 1983009808
        %v3741 = vunpack.c.0.s8 %v3740
        %v3742 = vlaneseq
        %v3743 = vshrl.u32 %v3742, 7
        %v3744 = vsub.s32 %v3741, %v3743
        %v3745 = vrot.slane %v3738, %v3744
        %v3746 = vcombine.low %v3720, %v3721
        %v3748 = vunpack.c.l.s4 1983009808
        %v3749 = vunpack.c.0.s8 %v3748
        %v3750 = vlaneseq
        %v3751 = vshrl.u32 %v3750, 7
        %v3752 = vsub.s32 %v3749, %v3751
        %v3753 = vrot.slane %v3746, %v3752
        %v3754 = vcombine.low %v3729, %v3737
        %v3755 = vcombine.high %v3729, %v3737
        %v3757 = vunpack.c.l.s4 1934713408
        %v3758 = vunpack.c.0.s8 %v3757
        %v3759 = vlaneseq
        %v3760 = vshrl.u32 %v3759, 7
        %v3761 = vsub.s32 %v3758, %v3760
        %v3762 = vrot.slane %v3754, %v3761
        %v3764 = vunpack.c.l.s4 1934713408
        %v3765 = vunpack.c.0.s8 %v3764
        %v3766 = vlaneseq
        %v3767 = vshrl.u32 %v3766, 7
        %v3768 = vsub.s32 %v3765, %v3767
        %v3769 = vrot.slane %v3755, %v3768
        %v3770 = vcombine.low %v3745, %v3753
        %v3771 = vcombine.high %v3745, %v3753
        %v3773 = vunpack.c.l.s4 1934713408
        %v3774 = vunpack.c.0.s8 %v3773
        %v3775 = vlaneseq
        %v3776 = vshrl.u32 %v3775, 7
        %v3777 = vsub.s32 %v3774, %v3776
        %v3778 = vrot.slane %v3770, %v3777
        %v3780 = vunpack.c.l.s4 1934713408
        %v3781 = vunpack.c.0.s8 %v3780
        %v3782 = vlaneseq
        %v3783 = vshrl.u32 %v3782, 7
        %v3784 = vsub.s32 %v3781, %v3783
        %v3785 = vrot.slane %v3771, %v3784
        %v3786 = vcombine.low %v3762, %v3778
        %v3787 = vcombine.high %v3762, %v3778
        %v3788 = vcombine.low %v3769, %v3785
        %v3789 = vcombine.high %v3769, %v3785
        %3791 = vrot.lane.b32.xlu0 %v3787, 8
        %v3792 = vpop.permute.xlu0 %3791
        %3795 = vrot.lane.b32.xlu0 %v3788, 16
        %v3796 = vpop.permute.xlu0 %3795
        %3799 = vrot.lane.b32.xlu0 %v3789, 24
        %v3800 = vpop.permute.xlu0 %3799
        %v3802 = vsel %vm1499, %v3786, %v3792
        %v3803 = vsel %vm2296, %v3802, %v3796
        %v3804 = vsel %vm2298, %v3803, %v3800
        %v3806 = vsel %vm936, %v3804, 0
        %3808 = vmatprep.subr.mxu0 0.0
        %3809 = vmatpush1.msra.mxu0 %v2556
        %3810 = vmatprep.subr.mxu0 0.0
        %3811 = vmatpush1.msra.mxu0 %v2557
        %3812 = vmatprep.subr.mxu0 0.0
        %3813 = vmatpush1.msra.mxu0 %v2558
        %3814 = vmatprep.subr.mxu0 0.0
        %3815 = vmatpush1.msra.mxu0 %v2559
        %3816 = vmatprep.subr.mxu0 0.0
        %3817 = vmatpush1.msra.mxu0 0.0
        %3818 = vmatprep.subr.mxu0 0.0
        %3819 = vmatpush1.msra.mxu0 0.0
        %3820 = vmatprep.subr.mxu0 0.0
        %3821 = vmatpush1.msra.mxu0 0.0
        %3822 = vmatprep.subr.mxu0 0.0
        %3823 = vmatpush1.msra.mxu0 0.0
        %3824 = vmatprep.subr.mxu0 0.0
        %3825 = vmatpush1.msra.mxu0 0.0
        %3826 = vmatprep.subr.mxu0 0.0
        %3827 = vmatpush1.msra.mxu0 0.0
        %3828 = vmatprep.subr.mxu0 0.0
        %3829 = vmatpush1.msra.mxu0 0.0
        %3830 = vmatprep.subr.mxu0 0.0
        %3831 = vmatpush1.msra.mxu0 0.0
        %3832 = vmatprep.subr.mxu0 0.0
        %3833 = vmatpush1.msra.mxu0 0.0
        %3834 = vmatprep.subr.mxu0 0.0
        %3835 = vmatpush1.msra.mxu0 0.0
        %3836 = vmatprep.subr.mxu0 0.0
        %3837 = vmatpush1.msra.mxu0 0.0
        %3838 = vmatprep.subr.mxu0 0.0
        %3839 = vmatpush1.msra.mxu0 0.0
        %3840 = vmatprep.subr.mxu0 0.0
        %3841 = vmatpush1.msra.mxu0 0.0
        %3842 = vmatprep.subr.mxu0 0.0
        %3843 = vmatpush1.msra.mxu0 0.0
        %3844 = vmatprep.subr.mxu0 0.0
        %3845 = vmatpush1.msra.mxu0 0.0
        %3846 = vmatprep.subr.mxu0 0.0
        %3847 = vmatpush1.msra.mxu0 0.0
        %3848 = vmatprep.subr.mxu0 0.0
        %3849 = vmatpush1.msra.mxu0 0.0
        %3850 = vmatprep.subr.mxu0 0.0
        %3851 = vmatpush1.msra.mxu0 0.0
        %3852 = vmatprep.subr.mxu0 0.0
        %3853 = vmatpush1.msra.mxu0 0.0
        %3854 = vmatprep.subr.mxu0 0.0
        %3855 = vmatpush1.msra.mxu0 0.0
        %3856 = vmatprep.subr.mxu0 0.0
        %3857 = vmatpush1.msra.mxu0 0.0
        %3858 = vmatprep.subr.mxu0 0.0
        %3859 = vmatpush1.msra.mxu0 0.0
        %3860 = vmatprep.subr.mxu0 0.0
        %3861 = vmatpush1.msra.mxu0 0.0
        %3862 = vmatprep.subr.mxu0 0.0
        %3863 = vmatpush1.msra.mxu0 0.0
        %3864 = vmatprep.subr.mxu0 0.0
        %3865 = vmatpush1.msra.mxu0 0.0
        %3866 = vmatprep.subr.mxu0 0.0
        %3867 = vmatpush1.msra.mxu0 0.0
        %3868 = vmatprep.subr.mxu0 0.0
        %3869 = vmatpush1.msra.mxu0 0.0
        %3870 = vmatprep.subr.mxu0 0.0
        %3871 = vmatpush1.msra.mxu0 0.0
        %3872 = vmatprep.mubr.f32.mxu0 0.0
        %3873 = vmatmul.mubr.f32.gmra.mrb[0].mxu0 %v3806
        %v3874 = vpop.f32.mrb[0].mxu0
        %v3875 = vadd.f32 %v2399, %v3874
        %v3876 = vpop.f32.mrb[0].mxu0
        %3877 = vdwg.mxu0
        %v3878 = vsel %vm936, %v3875, 0.0
        %3879 = vadd.xlane.f32.xlu0 %v3878
        %v3880 = vpop.xlane.xlu0 %3879
        %v3881 = vmul.f32 %v3880, %v940
        %v3882 = vsub.f32 %v3875, %v3881
        %v3883 = vmul.f32 %v3882, %v3882
        %v3884 = vsel %vm936, %v3883, 0.0
        %3885 = vadd.xlane.f32.xlu0 %v3884
        %v3886 = vpop.xlane.xlu0 %3885
        %v3887 = vmul.f32 %v3886, %v940
        %v3888 = vadd.f32 %v3887, 1e-06
        %v3889 = vrsqrt.pop %v3888
        %v3890 = vmul.f32 %v3882, %v3889
        %v3892 = vlaneseq
        %v3893 = vshrl.u32 %v3892, 7
        %v3894 = vsub.s32 0, %v3893
        %v3895 = vrot.slane %v2560, %v3894
        %v3897 = vmul.f32 %v3890, %v3895
        %v3899 = vlaneseq
        %v3900 = vshrl.u32 %v3899, 7
        %v3901 = vsub.s32 0, %v3900
        %v3902 = vrot.slane %v2561, %v3901
        %v3904 = vadd.f32 %v3897, %v3902
        %v3905 = vld [vmem:[#allocation22] sm:$0xff]
        %v3906 = vld [vmem:[#allocation22 + $0x8] sm:$0xff]
        %v3907 = vld [vmem:[#allocation22 + $0x10] sm:$0xff]
        %v3908 = vld [vmem:[#allocation22 + $0x18] sm:$0xff]
        %v3909 = vld [vmem:[#allocation23] sm:$0x1]
        %v3911 = vlaneseq
        %v3912 = vshrl.u32 %v3911, 7
        %v3913 = vsub.s32 0, %v3912
        %v3914 = vrot.slane %v3909, %v3913
        %v3917 = vsel %vm936, %v3904, 0
        %3919 = vmatprep.subr.mxu0 0.0
        %3920 = vmatpush1.msra.mxu0 %v3905
        %3921 = vmatprep.subr.mxu0 0.0
        %3922 = vmatpush1.msra.mxu0 %v3906
        %3923 = vmatprep.subr.mxu0 0.0
        %3924 = vmatpush1.msra.mxu0 %v3907
        %3925 = vmatprep.subr.mxu0 0.0
        %3926 = vmatpush1.msra.mxu0 %v3908
        %3927 = vmatprep.subr.mxu0 0.0
        %3928 = vmatpush1.msra.mxu0 0.0
        %3929 = vmatprep.subr.mxu0 0.0
        %3930 = vmatpush1.msra.mxu0 0.0
        %3931 = vmatprep.subr.mxu0 0.0
        %3932 = vmatpush1.msra.mxu0 0.0
        %3933 = vmatprep.subr.mxu0 0.0
        %3934 = vmatpush1.msra.mxu0 0.0
        %3935 = vmatprep.subr.mxu0 0.0
        %3936 = vmatpush1.msra.mxu0 0.0
        %3937 = vmatprep.subr.mxu0 0.0
        %3938 = vmatpush1.msra.mxu0 0.0
        %3939 = vmatprep.subr.mxu0 0.0
        %3940 = vmatpush1.msra.mxu0 0.0
        %3941 = vmatprep.subr.mxu0 0.0
        %3942 = vmatpush1.msra.mxu0 0.0
        %3943 = vmatprep.subr.mxu0 0.0
        %3944 = vmatpush1.msra.mxu0 0.0
        %3945 = vmatprep.subr.mxu0 0.0
        %3946 = vmatpush1.msra.mxu0 0.0
        %3947 = vmatprep.subr.mxu0 0.0
        %3948 = vmatpush1.msra.mxu0 0.0
        %3949 = vmatprep.subr.mxu0 0.0
        %3950 = vmatpush1.msra.mxu0 0.0
        %3951 = vmatprep.subr.mxu0 0.0
        %3952 = vmatpush1.msra.mxu0 0.0
        %3953 = vmatprep.subr.mxu0 0.0
        %3954 = vmatpush1.msra.mxu0 0.0
        %3955 = vmatprep.subr.mxu0 0.0
        %3956 = vmatpush1.msra.mxu0 0.0
        %3957 = vmatprep.subr.mxu0 0.0
        %3958 = vmatpush1.msra.mxu0 0.0
        %3959 = vmatprep.subr.mxu0 0.0
        %3960 = vmatpush1.msra.mxu0 0.0
        %3961 = vmatprep.subr.mxu0 0.0
        %3962 = vmatpush1.msra.mxu0 0.0
        %3963 = vmatprep.subr.mxu0 0.0
        %3964 = vmatpush1.msra.mxu0 0.0
        %3965 = vmatprep.subr.mxu0 0.0
        %3966 = vmatpush1.msra.mxu0 0.0
        %3967 = vmatprep.subr.mxu0 0.0
        %3968 = vmatpush1.msra.mxu0 0.0
        %3969 = vmatprep.subr.mxu0 0.0
        %3970 = vmatpush1.msra.mxu0 0.0
        %3971 = vmatprep.subr.mxu0 0.0
        %3972 = vmatpush1.msra.mxu0 0.0
        %3973 = vmatprep.subr.mxu0 0.0
        %3974 = vmatpush1.msra.mxu0 0.0
        %3975 = vmatprep.subr.mxu0 0.0
        %3976 = vmatpush1.msra.mxu0 0.0
        %3977 = vmatprep.subr.mxu0 0.0
        %3978 = vmatpush1.msra.mxu0 0.0
        %3979 = vmatprep.subr.mxu0 0.0
        %3980 = vmatpush1.msra.mxu0 0.0
        %3981 = vmatprep.subr.mxu0 0.0
        %3982 = vmatpush1.msra.mxu0 0.0
        %3983 = vmatprep.mubr.f32.mxu0 0.0
        %3984 = vmatmul.mubr.f32.gmra.mrb[0].mxu0 %v3917
        %v3985 = vpop.f32.mrb[0].mxu0
        %v3986 = vadd.f32 %v3914, %v3985
        %v3987 = vpop.f32.mrb[0].mxu0
        %3988 = vdwg.mxu0
        %v3989 = vmax.f32 %v3986, 0.0
        %v3990 = vld [vmem:[%s18] sm:$0xff]
        %v3991 = vld [vmem:[%s18 + $0x8] sm:$0xff]
        %v3992 = vld [vmem:[%s18 + $0x10] sm:$0xff]
        %v3993 = vld [vmem:[%s18 + $0x18] sm:$0xff]
        %v3994 = vld [vmem:[%s18 + $0x20] sm:$0xff]
        %v3995 = vld [vmem:[%s18 + $0x28] sm:$0xff]
        %v3996 = vld [vmem:[%s18 + $0x30] sm:$0xff]
        %v3997 = vld [vmem:[%s18 + $0x38] sm:$0xff]
        %v3998 = vld [vmem:[%s19] sm:$0x1]
        %v4000 = vlaneseq
        %v4001 = vshrl.u32 %v4000, 7
        %v4002 = vsub.s32 0, %v4001
        %v4003 = vrot.slane %v3998, %v4002
        %vm4005 = vcmask 523264
        %v4007 = vsel %vm4005, %v3989, 0
        %4009 = vmatprep.subr.mxu0 0.0
        %4010 = vmatpush1.msra.mxu0 %v3990
        %4011 = vmatprep.subr.mxu0 0.0
        %4012 = vmatpush1.msra.mxu0 %v3991
        %4013 = vmatprep.subr.mxu0 0.0
        %4014 = vmatpush1.msra.mxu0 %v3992
        %4015 = vmatprep.subr.mxu0 0.0
        %4016 = vmatpush1.msra.mxu0 %v3993
        %4017 = vmatprep.subr.mxu0 0.0
        %4018 = vmatpush1.msra.mxu0 %v3994
        %4019 = vmatprep.subr.mxu0 0.0
        %4020 = vmatpush1.msra.mxu0 %v3995
        %4021 = vmatprep.subr.mxu0 0.0
        %4022 = vmatpush1.msra.mxu0 %v3996
        %4023 = vmatprep.subr.mxu0 0.0
        %4024 = vmatpush1.msra.mxu0 %v3997
        %4025 = vmatprep.subr.mxu0 0.0
        %4026 = vmatpush1.msra.mxu0 0.0
        %4027 = vmatprep.subr.mxu0 0.0
        %4028 = vmatpush1.msra.mxu0 0.0
        %4029 = vmatprep.subr.mxu0 0.0
        %4030 = vmatpush1.msra.mxu0 0.0
        %4031 = vmatprep.subr.mxu0 0.0
        %4032 = vmatpush1.msra.mxu0 0.0
        %4033 = vmatprep.subr.mxu0 0.0
        %4034 = vmatpush1.msra.mxu0 0.0
        %4035 = vmatprep.subr.mxu0 0.0
        %4036 = vmatpush1.msra.mxu0 0.0
        %4037 = vmatprep.subr.mxu0 0.0
        %4038 = vmatpush1.msra.mxu0 0.0
        %4039 = vmatprep.subr.mxu0 0.0
        %4040 = vmatpush1.msra.mxu0 0.0
        %4041 = vmatprep.subr.mxu0 0.0
        %4042 = vmatpush1.msra.mxu0 0.0
        %4043 = vmatprep.subr.mxu0 0.0
        %4044 = vmatpush1.msra.mxu0 0.0
        %4045 = vmatprep.subr.mxu0 0.0
        %4046 = vmatpush1.msra.mxu0 0.0
        %4047 = vmatprep.subr.mxu0 0.0
        %4048 = vmatpush1.msra.mxu0 0.0
        %4049 = vmatprep.subr.mxu0 0.0
        %4050 = vmatpush1.msra.mxu0 0.0
        %4051 = vmatprep.subr.mxu0 0.0
        %4052 = vmatpush1.msra.mxu0 0.0
        %4053 = vmatprep.subr.mxu0 0.0
        %4054 = vmatpush1.msra.mxu0 0.0
        %4055 = vmatprep.subr.mxu0 0.0
        %4056 = vmatpush1.msra.mxu0 0.0
        %4057 = vmatprep.subr.mxu0 0.0
        %4058 = vmatpush1.msra.mxu0 0.0
        %4059 = vmatprep.subr.mxu0 0.0
        %4060 = vmatpush1.msra.mxu0 0.0
        %4061 = vmatprep.subr.mxu0 0.0
        %4062 = vmatpush1.msra.mxu0 0.0
        %4063 = vmatprep.subr.mxu0 0.0
        %4064 = vmatpush1.msra.mxu0 0.0
        %4065 = vmatprep.subr.mxu0 0.0
        %4066 = vmatpush1.msra.mxu0 0.0
        %4067 = vmatprep.subr.mxu0 0.0
        %4068 = vmatpush1.msra.mxu0 0.0
        %4069 = vmatprep.subr.mxu0 0.0
        %4070 = vmatpush1.msra.mxu0 0.0
        %4071 = vmatprep.subr.mxu0 0.0
        %4072 = vmatpush1.msra.mxu0 0.0
        %4073 = vmatprep.mubr.f32.mxu0 0.0
        %4074 = vmatmul.mubr.f32.gmra.mrb[0].mxu0 %v4007
        %v4075 = vpop.f32.mrb[0].mxu0
        %v4076 = vadd.f32 %v4003, %v4075
        %v4077 = vpop.f32.mrb[0].mxu0
        %4078 = vdwg.mxu0
        %v4079 = vadd.f32 %v4076, %v3904
        %v4080 = vld [vmem:[%s20] sm:$0x1]
        %v4081 = vld [vmem:[%s21] sm:$0x1]
        %v4082 = vsel %vm936, %v4079, 0.0
        %4083 = vadd.xlane.f32.xlu0 %v4082
        %v4084 = vpop.xlane.xlu0 %4083
        %v4085 = vmul.f32 %v4084, %v940
        %v4086 = vsub.f32 %v4079, %v4085
        %v4087 = vmul.f32 %v4086, %v4086
        %v4088 = vsel %vm936, %v4087, 0.0
        %4089 = vadd.xlane.f32.xlu0 %v4088
        %v4090 = vpop.xlane.xlu0 %4089
        %v4091 = vmul.f32 %v4090, %v940
        %v4092 = vadd.f32 %v4091, 1e-06
        %v4093 = vrsqrt.pop %v4092
        %v4094 = vmul.f32 %v4086, %v4093
        %v4096 = vlaneseq
        %v4097 = vshrl.u32 %v4096, 7
        %v4098 = vsub.s32 0, %v4097
        %v4099 = vrot.slane %v4080, %v4098
        %v4101 = vmul.f32 %v4094, %v4099
        %v4103 = vlaneseq
        %v4104 = vshrl.u32 %v4103, 7
        %v4105 = vsub.s32 0, %v4104
        %v4106 = vrot.slane %v4081, %v4105
        %v4108 = vadd.f32 %v4101, %v4106
        %4109 = vst.msk [vmem:[%s930] sm:$0xff] %vm936, %v4108
        %s4110 = sand.u32 %s538, 1
        %s4111 = scalar_lea.sflag [#allocation4], %s4110
        %s4112 = sand.u32 %s538, 1
        %s4113 = smul.addr %s4112, 8
        %s4114 = scalar_lea.vmem [#allocation25], %s4113
        // Predicated region
        $region165: #{tpu_custom_call.1} parent=107 // pred_check
          %p4115 = pneg %p548
        $region166: #{tpu_custom_call.1} parent=107 // pred_check_branch
          %4117 = sbr.rel (%p4115) target = $region168
        $region167: #{tpu_custom_call.1} parent=107 // pred_region
          %s4119 = ssub.s32 128, 128
          %4120 = vsyncadd %s4111, %s4119
          %s4121 = smul.addr %s48, 128
          %s4122 = scalar_lea.hbm %s22, %s4121
          %s4124 = sshll.u32 %s4114, 4
          %s4125 = int_to_ptr.vmem [resolvable:$true] %s4124
          %4127 = dma.vmem_to_hbm [thread:$0]  %s4125, 128, %s4122, %s4111
        $region168: #{tpu_custom_call.1} parent=107 // pred_fallthru
          _
      $region108: #{tpu_custom_call.1} parent=5 // pred_fallthru
        _
      %p4128 = scmp.le.s32.totalorder 2, %s43
      // Predicated region
      $region169: #{tpu_custom_call.1} parent=5 // pred_check
        %p4129 = pneg %p4128
      $region170: #{tpu_custom_call.1} parent=5 // pred_check_branch
        %4131 = sbr.rel (%p4129) target = $region172
      $region171: #{tpu_custom_call.1} parent=5 // pred_region
        %s4132 = ssub.s32 %s43, 2
        // Predicated region
        $region173: #{tpu_custom_call.1} parent=171 // pred_check
          %p4133 = pneg %p554
        $region174: #{tpu_custom_call.1} parent=171 // pred_check_branch
          %4135 = sbr.rel (%p4133) target = $region176
        $region175: #{tpu_custom_call.1} parent=171 // pred_region
          %s4136 = sand.u32 %s539, 1
          %s4137 = scalar_lea.sflag [#allocation4], %s4136
          %s4138 = sand.u32 %s539, 1
          %s4139 = smul.addr %s4138, 8
          %s4140 = scalar_lea.vmem [#allocation25], %s4139
          %4141 = dma.done %s4137, 128
        $region176: #{tpu_custom_call.1} parent=171 // pred_fallthru
          _
      $region172: #{tpu_custom_call.1} parent=5 // pred_fallthru
        _
    $region6: #{tpu_custom_call.1} parent=1 // loop_footer
      %s47 = sadd.s32 1, %s43
    $region7: #{tpu_custom_call.1} parent=1 // loop_footer_branch
      %42 = sbr.rel target = $region3
    $region8: #{tpu_custom_call.1} parent=1 // loop_exit
      _
    %4142 = vsyncpa [#allocation3], 1
    %s4143 = scalar_lea.sflag [#allocation3], 1
    %4144 = vsyncpa %s4143, 1
    %4145 = vsyncpa [#allocation6], 1
    %s4146 = scalar_lea.sflag [#allocation6], 1
    %4147 = vsyncpa %s4146, 1
    %4148 = vsyncpa [#allocation9], 1
    %s4149 = scalar_lea.sflag [#allocation9], 1
    %4150 = vsyncpa %s4149, 1
    %4151 = vsyncpa [#allocation12], 1
    %4152 = vsyncpa [#allocation15], 1
    %4153 = vsyncpa [#allocation18], 1
    %4154 = vsyncpa [#allocation21], 1
    %4155 = vsyncpa [#allocation24], 1
    %4156 = vsyncpa [#allocation4], 1
    %s4157 = scalar_lea.sflag [#allocation4], 1
    %4158 = vsyncpa %s4157, 1

</llo_original>
